<compile_context>
chip_gen: v7x
topology: tpu7x:2x2x1
jax: 0.10.0
libtpu: 0.0.40
codegen_flags: <defaults>
</compile_context>

<pallas_src>
import functools

import jax
import jax.numpy as jnp
from jax.experimental import pallas as pl
from jax.experimental.pallas import tpu as pltpu

LANE = 128                       # lane width / pad granule
TM_PREF = 256                    # preferred row tile (clamped to array size)
VMEM_LIMIT = 48 * 1024 * 1024    # <= v7x physical VMEM, plenty on v5e/v6e


# ------------------------------------------------------------------ helpers
def _round_up(x, m=LANE):
    return ((x + m - 1) // m) * m


def _pad2d(x, rows, cols):
    out = jnp.zeros((rows, cols), jnp.float32)
    return out.at[: x.shape[0], : x.shape[1]].set(x)


def _row_spec(cols, tm):
    return pl.BlockSpec((tm, cols), lambda i: (i, 0))


def _full_spec(shape):
    nd = len(shape)
    return pl.BlockSpec(shape, lambda *_, _nd=nd: (0,) * _nd)


# ------------------------------------------------------------------ kernels
def _modal_kernel(vfeat_ref, tfeat_ref, item_ref,
                  iw1_ref, ib1_ref, iw2_ref, ib2_ref,
                  tw1_ref, tb1_ref, tw2_ref, tb2_ref,
                  o_ref):
    """image/text_space_trans fused: Linear -> Linear -> Sigmoid, gated by
    item_id embedding.  Both modalities in one pass; output stacked (2, tm, E)."""
    item = item_ref[...]                                    # f32

    def trans(feat_bf, w1_ref, b1_ref, w2_ref, b2_ref):
        h = jnp.dot(feat_bf, w1_ref[...],
                    preferred_element_type=jnp.float32) + b1_ref[...]
        h = jnp.dot(h.astype(jnp.bfloat16), w2_ref[...],
                    preferred_element_type=jnp.float32) + b2_ref[...]
        return jax.nn.sigmoid(h)

    o_ref[0] = (item * trans(vfeat_ref[...], iw1_ref, ib1_ref,
                             iw2_ref, ib2_ref)).astype(o_ref.dtype)
    o_ref[1] = (item * trans(tfeat_ref[...], tw1_ref, tb1_ref,
                             tw2_ref, tb2_ref)).astype(o_ref.dtype)


def pallas_modal_trans(v_feat, t_feat, item_id,
                       iw1, ib1, iw2, ib2, tw1, tb1, tw2, tb2, *, tm=TM_PREF):
    I, E = item_id.shape
    tm = min(tm, I)
    assert I % tm == 0
    return pl.pallas_call(
        _modal_kernel,
        out_shape=jax.ShapeDtypeStruct((2, I, E), jnp.bfloat16),
        grid=(I // tm,),
        in_specs=[
            _row_spec(v_feat.shape[1], tm),
            _row_spec(t_feat.shape[1], tm),
            _row_spec(E, tm),
            _full_spec(iw1.shape), _full_spec(ib1.shape),
            _full_spec(iw2.shape), _full_spec(ib2.shape),
            _full_spec(tw1.shape), _full_spec(tb1.shape),
            _full_spec(tw2.shape), _full_spec(tb2.shape),
        ],
        out_specs=pl.BlockSpec((2, tm, E), lambda i: (0, i, 0)),
        compiler_params=pltpu.CompilerParams(
            dimension_semantics=("parallel",),
            vmem_limit_bytes=VMEM_LIMIT),
    )(v_feat, t_feat, item_id, iw1, ib1, iw2, ib2, tw1, tb1, tw2, tb2)


def _conv_ui_kernel(ego0_ref, adj_ref, out_ref, ego_sc, acc_sc, *, inv_scale):
    """Fused conv_ui: grid (layer, row_tile).  Propagated ego lives in a bf16
    double-buffered VMEM scratch; layer sum in f32 scratch; adj streamed from HBM
    in bf16 row tiles; output = mean over layers written at the last layer."""
    l = pl.program_id(0)
    i = pl.program_id(1)
    tm = adj_ref.shape[0]
    n = ego0_ref.shape[0]
    row0 = pl.multiple_of(i * tm, tm)

    @pl.when((l == 0) & (i == 0))
    def _init():
        ego_sc[pl.ds(0, n), :] = ego0_ref[...]
        acc_sc[...] = ego0_ref[...].astype(jnp.float32)

    cur = jax.lax.rem(l, 2)
    src = pl.multiple_of(cur * n, n)
    dst = pl.multiple_of((1 - cur) * n, n)

    new_tile = jnp.dot(adj_ref[...], ego_sc[pl.ds(src, n), :],
                       preferred_element_type=jnp.float32)       # (tm, E) f32
    ego_sc[pl.ds(dst + row0, tm), :] = new_tile.astype(jnp.bfloat16)
    acc_sc[pl.ds(row0, tm), :] += new_tile

    @pl.when(l == pl.num_programs(0) - 1)
    def _fin():
        out_ref[...] = acc_sc[pl.ds(row0, tm), :] * inv_scale


def pallas_conv_ui(ego0_bf, adj_bf, n_ui_layers, *, tm=TM_PREF):
    # TODO(synk): for very large graphs additionally tile the adjacency column
    #             (K) axis; here adj row tiles are full-width.
    N, E = ego0_bf.shape
    tm = min(tm, N)
    assert N % tm == 0
    kern = functools.partial(_conv_ui_kernel, inv_scale=1.0 / (n_ui_layers + 1))
    return pl.pallas_call(
        kern,
        out_shape=jax.ShapeDtypeStruct((N, E), jnp.float32),
        grid=(n_ui_layers, N // tm),
        in_specs=[
            pl.BlockSpec((N, E), lambda l, i: (0, 0)),           # ego0 resident
            pl.BlockSpec((tm, N), lambda l, i: (i, 0)),          # adj row tiles
        ],
        out_specs=pl.BlockSpec((tm, E), lambda l, i: (i, 0)),
        scratch_shapes=[pltpu.VMEM((2 * N, E), jnp.bfloat16),
                        pltpu.VMEM((N, E), jnp.float32)],
        compiler_params=pltpu.CompilerParams(
            dimension_semantics=("arbitrary", "arbitrary"),
            vmem_limit_bytes=VMEM_LIMIT),
    )(ego0_bf, adj_bf)


def _conv_ii_kernel(x0_ref, adj_ref, out_ref, ego_sc):
    """Fused conv_ii, batched over modalities: grid (modality, layer, row_tile)."""
    l = pl.program_id(1)
    i = pl.program_id(2)
    tm = adj_ref.shape[1]
    n = x0_ref.shape[1]
    row0 = pl.multiple_of(i * tm, tm)

    @pl.when((l == 0) & (i == 0))
    def _init():
        ego_sc[pl.ds(0, n), :] = x0_ref[0]

    cur = jax.lax.rem(l, 2)
    src = pl.multiple_of(cur * n, n)
    dst = pl.multiple_of((1 - cur) * n, n)

    new_tile = jnp.dot(adj_ref[0], ego_sc[pl.ds(src, n), :],
                       preferred_element_type=jnp.float32)       # (tm, E) f32
    ego_sc[pl.ds(dst + row0, tm), :] = new_tile.astype(jnp.bfloat16)

    @pl.when(l == pl.num_programs(1) - 1)
    def _fin():
        out_ref[0] = new_tile


def pallas_conv_ii(x0_stack_bf, adj_stack_bf, n_layers, *, tm=TM_PREF):
    M, I, E = x0_stack_bf.shape
    assert M == 2
    tm = min(tm, I)
    assert I % tm == 0
    return pl.pallas_call(
        _conv_ii_kernel,
        out_shape=jax.ShapeDtypeStruct((2, I, E), jnp.float32),
        grid=(2, n_layers, I // tm),
        in_specs=[
            pl.BlockSpec((1, I, E), lambda m, l, i: (m, 0, 0)),   # x0, per modality
            pl.BlockSpec((1, tm, I), lambda m, l, i: (m, i, 0)),  # adj row tiles
        ],
        out_specs=pl.BlockSpec((1, tm, E), lambda m, l, i: (m, i, 0)),
        scratch_shapes=[pltpu.VMEM((2 * I, E), jnp.bfloat16)],
        compiler_params=pltpu.CompilerParams(
            dimension_semantics=("parallel", "arbitrary", "arbitrary"),
            vmem_limit_bytes=VMEM_LIMIT),
    )(x0_stack_bf, adj_stack_bf)


def _user_proj_kernel(r_ref, x_ref, out_ref):
    """explicit_*_user = R @ explicit_*_item, batched over modalities; R block
    stays resident across the (inner) modality axis so it is streamed once."""
    out_ref[0] = jnp.dot(r_ref[...], x_ref[0].astype(jnp.bfloat16),
                         preferred_element_type=jnp.float32)


def pallas_user_proj(R_bf, x_stack_f32, *, tm=TM_PREF):
    U, I = R_bf.shape
    _, I2, E = x_stack_f32.shape
    assert I == I2
    tm = min(tm, U)
    assert U % tm == 0
    return pl.pallas_call(
        _user_proj_kernel,
        out_shape=jax.ShapeDtypeStruct((2, U, E), jnp.float32),
        grid=(U // tm, 2),                       # row tiles outer -> R fetched once
        in_specs=[
            pl.BlockSpec((tm, I), lambda i, m: (i, 0)),
            pl.BlockSpec((1, I, E), lambda i, m: (m, 0, 0)),
        ],
        out_specs=pl.BlockSpec((1, tm, E), lambda i, m: (m, i, 0)),
        compiler_params=pltpu.CompilerParams(
            dimension_semantics=("parallel", "parallel"),
            vmem_limit_bytes=VMEM_LIMIT),
    )(R_bf, x_stack_f32)


def _fusion_kernel(ext_ref, img_ref, txt_ref,
                   ws1_ref, bs1_ref, ws2_ref,
                   wib_ref, bib_ref, wtb_ref, btb_ref,
                   o_ref):
    """separate_coarse attention + fine-grained behavior gating + integration
    + residual, all fused per row tile."""
    ext_id = ext_ref[...]
    img = img_ref[...]
    txt = txt_ref[...]

    ws1 = ws1_ref[...]                                           # bf16 (E, E)
    h_img = jnp.tanh(jnp.dot(img.astype(jnp.bfloat16), ws1,
                             preferred_element_type=jnp.float32) + bs1_ref[...])
    h_txt = jnp.tanh(jnp.dot(txt.astype(jnp.bfloat16), ws1,
                             preferred_element_type=jnp.float32) + bs1_ref[...])
    ws2 = ws2_ref[...]                                           # f32 (1, E) row
    a_img = jnp.sum(h_img * ws2, axis=-1, keepdims=True)         # (tm, 1)
    a_txt = jnp.sum(h_txt * ws2, axis=-1, keepdims=True)

    # exact 2-way softmax (f32 divide, per review)
    m = jnp.maximum(a_img, a_txt)
    e_img = jnp.exp(a_img - m)
    e_txt = jnp.exp(a_txt - m)
    denom = e_img + e_txt
    w_img = e_img / denom
    w_txt = e_txt / denom

    coarse = w_img * img + w_txt * txt

    ext_bf = ext_id.astype(jnp.bfloat16)
    gate_img = jax.nn.sigmoid(jnp.dot(ext_bf, wib_ref[...],
                                      preferred_element_type=jnp.float32) + bib_ref[...])
    gate_txt = jax.nn.sigmoid(jnp.dot(ext_bf, wtb_ref[...],
                                      preferred_element_type=jnp.float32) + btb_ref[...])

    fine_img = gate_img * (img - coarse)
    fine_txt = gate_txt * (txt - coarse)
    o_ref[...] = ext_id + (fine_img + fine_txt + coarse) * (1.0 / 3.0)


def pallas_fusion(ext_id, img, txt, ws1, bs1, ws2, wib, bib, wtb, btb, *, tm=TM_PREF):
    Rn, E = ext_id.shape
    tm = min(tm, Rn)
    assert Rn % tm == 0
    return pl.pallas_call(
        _fusion_kernel,
        out_shape=jax.ShapeDtypeStruct((Rn, E), jnp.float32),
        grid=(Rn // tm,),
        in_specs=[
            _row_spec(E, tm), _row_spec(E, tm), _row_spec(E, tm),
            _full_spec(ws1.shape), _full_spec(bs1.shape), _full_spec(ws2.shape),
            _full_spec(wib.shape), _full_spec(bib.shape),
            _full_spec(wtb.shape), _full_spec(btb.shape),
        ],
        out_specs=_row_spec(E, tm),
        compiler_params=pltpu.CompilerParams(
            dimension_semantics=("parallel",),
            vmem_limit_bytes=VMEM_LIMIT),
    )(ext_id, img, txt, ws1, bs1, ws2, wib, bib, wtb, btb)


# ------------------------------------------------------------------ forward
@functools.partial(jax.jit, static_argnames=("n_layers", "n_ui_layers"))
def gume_forward(pp, ego0_bf, adj_bf, R_bf, adj_ii_bf, *, n_layers, n_ui_layers):
    """Inference forward (train=False).  Streamed operands are bf16 in HBM,
    accumulation in f32.  Returns (user_rows, item_rows) padded outputs."""
    U = R_bf.shape[0]

    # image/text modal transforms (fused, stacked output)
    x0 = pallas_modal_trans(pp["v_feat"], pp["t_feat"], pp["item_id"],
                            pp["img_w1"], pp["img_b1"], pp["img_w2"], pp["img_b2"],
                            pp["txt_w1"], pp["txt_b1"], pp["txt_w2"], pp["txt_b2"])

    # conv_ui for extended_id (train-only extended_image/text propagations are
    # dead work in inference and are not computed)
    extended_id = pallas_conv_ui(ego0_bf, adj_bf, n_ui_layers)          # (N, E) f32

    # conv_ii per modality, layer loop fused, modalities batched
    x_items = pallas_conv_ii(x0, adj_ii_bf, n_layers)                   # (2, I, E) f32

    # explicit_*_user = R @ explicit_*_item, R streamed once for both modalities
    x_users = pallas_user_proj(R_bf, x_items)                           # (2, U, E) f32

    ext_user = extended_id[:U]
    ext_item = extended_id[U:]

    # fusion (coarse attention + gating + integration + residual), called once for
    # user rows and once for item rows -> no explicit_*_embeds concatenation
    out_user = pallas_fusion(ext_user, x_users[0], x_users[1],
                             pp["sep_w1"], pp["sep_b1"], pp["sep_w2"],
                             pp["ib_w"], pp["ib_b"], pp["tb_w"], pp["tb_b"])
    out_item = pallas_fusion(ext_item, x_items[0], x_items[1],
                             pp["sep_w1"], pp["sep_b1"], pp["sep_w2"],
                             pp["ib_w"], pp["ib_b"], pp["tb_w"], pp["tb_b"])
    return out_user, out_item


# ------------------------------------------------------------------ reference
def gume_forward_ref(p, adj, R, img_adj, txt_adj, n_layers, n_ui_layers):
    def modal(feat, w1, b1, w2, b2):
        h = feat @ w1 + b1
        return jax.nn.sigmoid(h @ w2 + b2)

    image_item = p["item_id"] * modal(p["v_feat"], p["img_w1"], p["img_b1"],
                                      p["img_w2"], p["img_b2"])
    text_item = p["item_id"] * modal(p["t_feat"], p["txt_w1"], p["txt_b1"],
                                     p["txt_w2"], p["txt_b2"])

    def conv_ui(u, i):
        ego = jnp.concatenate([u, i], axis=0)
        acc = ego
        for _ in range(n_ui_layers):
            ego = adj @ ego
            acc = acc + ego
        return acc / float(n_ui_layers + 1)

    def conv_ii(a, x):
        for _ in range(n_layers):
            x = a @ x
        return x

    extended_id = conv_ui(p["user"], p["item_id"])
    exp_img_item = conv_ii(img_adj, image_item)
    exp_img = jnp.concatenate([R @ exp_img_item, exp_img_item], axis=0)
    exp_txt_item = conv_ii(txt_adj, text_item)
    exp_txt = jnp.concatenate([R @ exp_txt_item, exp_txt_item], axis=0)

    def sep(x):
        return jnp.tanh(x @ p["sep_w1"] + p["sep_b1"]) @ p["sep_w2"]

    w = jax.nn.softmax(jnp.concatenate([sep(exp_img), sep(exp_txt)], axis=-1), axis=-1)
    w_img, w_txt = w[:, :1], w[:, 1:]
    coarse = w_img * exp_img + w_txt * exp_txt
    fgi = jax.nn.sigmoid(extended_id @ p["ib_w"] + p["ib_b"]) * (exp_img - coarse)
    fgt = jax.nn.sigmoid(extended_id @ p["tb_w"] + p["tb_b"]) * (exp_txt - coarse)
    integration = (fgi + fgt + coarse) / 3.0
    return extended_id + integration


# ------------------------------------------------------------------ setup glue
def xavier(key, shape):
    fan_in, fan_out = shape
    bound = (6.0 / (fan_in + fan_out)) ** 0.5
    return jax.random.uniform(key, shape, jnp.float32, -bound, bound)


def sym_norm(a):
    rowsum = a.sum(-1)
    dinv = jnp.where(rowsum > 0.0, 1.0 / jnp.sqrt(jnp.maximum(rowsum, 1e-12)), 0.0)
    return dinv[:, None] * a * dinv[None, :]


def build_knn_sym_adj(feat, k):
    # build_sim + build_knn_normalized_graph(norm_type='sym'), dense variant
    norm = feat / jnp.linalg.norm(feat, axis=-1, keepdims=True)
    sim = norm @ norm.T
    topv, topi = jax.lax.top_k(sim, k)
    adj = jnp.zeros_like(sim).at[jnp.arange(sim.shape[0])[:, None], topi].set(topv)
    return sym_norm(adj)


def knn_mask(feat, k):
    norm = feat / jnp.linalg.norm(feat, axis=-1, keepdims=True)
    sim = norm @ norm.T
    _, topi = jax.lax.top_k(sim, k)
    return jnp.zeros_like(sim).at[jnp.arange(sim.shape[0])[:, None], topi].set(1.0)


if __name__ == "__main__":
    # small synthetic configuration
    n_users, n_items = 8, 12
    dim_E, v_dim, t_dim = 32, 64, 48
    n_layers, n_ui_layers, knn_k = 1, 2, 4
    N = n_users + n_items

    key = jax.random.PRNGKey(0)
    ks = jax.random.split(key, 24)

    p = {
        "user":    xavier(ks[0], (n_users, dim_E)),
        "item_id": xavier(ks[1], (n_items, dim_E)),
        "v_feat":  jax.random.normal(ks[4], (n_items, v_dim), jnp.float32),
        "t_feat":  jax.random.normal(ks[5], (n_items, t_dim), jnp.float32),
        # image_space_trans = Linear(v_dim,E) -> Linear(E,E)+Sigmoid
        "img_w1": xavier(ks[6], (v_dim, dim_E)), "img_b1": xavier(ks[7], (1, dim_E)),
        "img_w2": xavier(ks[8], (dim_E, dim_E)), "img_b2": xavier(ks[9], (1, dim_E)),
        # text_space_trans
        "txt_w1": xavier(ks[10], (t_dim, dim_E)), "txt_b1": xavier(ks[11], (1, dim_E)),
        "txt_w2": xavier(ks[12], (dim_E, dim_E)), "txt_b2": xavier(ks[13], (1, dim_E)),
        # separate_coarse = Linear(E,E)+Tanh -> Linear(E,1,no bias)
        "sep_w1": xavier(ks[14], (dim_E, dim_E)), "sep_b1": xavier(ks[15], (1, dim_E)),
        "sep_w2": xavier(ks[16], (dim_E, 1)),
        # image_behavior / text_behavior = Linear(E,E)+Sigmoid
        "ib_w": xavier(ks[17], (dim_E, dim_E)), "ib_b": xavier(ks[18], (1, dim_E)),
        "tb_w": xavier(ks[19], (dim_E, dim_E)), "tb_b": xavier(ks[20], (1, dim_E)),
    }

    # modality item-item graphs (sym-normalized kNN graphs built from features)
    img_adj = build_knn_sym_adj(p["v_feat"], knn_k)
    txt_adj = build_knn_sym_adj(p["t_feat"], knn_k)

    # user-item bipartite graph + item-item intersection edges, sym-normalized
    # (mirrors get_adj_mat / add_edge; built densely on the JAX side — glue only)
    inter_mat = (jax.random.uniform(ks[21], (n_users, n_items)) < 0.3).astype(jnp.float32)
    eye = jnp.eye(n_items, dtype=jnp.float32)
    item_adj = knn_mask(p["v_feat"], knn_k) * knn_mask(p["t_feat"], knn_k) * (1.0 - eye)
    A = jnp.zeros((N, N), jnp.float32)
    A = A.at[:n_users, n_users:].set(inter_mat)
    A = A.at[n_users:, :n_users].set(inter_mat.T)
    A = A.at[n_users:, n_users:].set(item_adj)
    norm_adj = sym_norm(A)
    R = norm_adj[:n_users, n_users:]

    # -------- padded, lane-dense layout for the kernels --------------------
    E_pad = _round_up(dim_E)                          # 128
    Fv_pad = _round_up(v_dim)                         # 128
    Ft_pad = _round_up(t_dim)                         # 128
    U_pad = _round_up(n_users)                        # 128
    I_pad = _round_up(n_items)                        # 128
    N_pad = U_pad + I_pad                             # 256

    # combined adjacency in padded layout: users at rows [0,U_pad),
    # items at rows [U_pad, U_pad+n_items); padded rows/cols are zero.
    adj_pad = jnp.zeros((N_pad, N_pad), jnp.float32)
    adj_pad = adj_pad.at[:n_users, :n_users].set(norm_adj[:n_users, :n_users])
    adj_pad = adj_pad.at[:n_users, U_pad:U_pad + n_items].set(norm_adj[:n_users, n_users:])
    adj_pad = adj_pad.at[U_pad:U_pad + n_items, :n_users].set(norm_adj[n_users:, :n_users])
    adj_pad = adj_pad.at[U_pad:U_pad + n_items, U_pad:U_pad + n_items].set(
        norm_adj[n_users:, n_users:])
    R_pad = adj_pad[:U_pad, U_pad:]
    img_adj_pad = _pad2d(img_adj, I_pad, I_pad)
    txt_adj_pad = _pad2d(txt_adj, I_pad, I_pad)

    # streamed operands in bf16 (halved HBM bytes; f32 accumulation in-kernel)
    adj_bf = adj_pad.astype(jnp.bfloat16)
    R_bf = R_pad.astype(jnp.bfloat16)
    adj_ii_bf = jnp.stack([img_adj_pad, txt_adj_pad], axis=0).astype(jnp.bfloat16)

    user_pad = _pad2d(p["user"], U_pad, E_pad)
    item_pad = _pad2d(p["item_id"], I_pad, E_pad)
    ego0_bf = jnp.concatenate([user_pad, item_pad], axis=0).astype(jnp.bfloat16)

    pp = {
        "item_id": item_pad,                                           # f32 (gating)
        "v_feat":  _pad2d(p["v_feat"], I_pad, Fv_pad).astype(jnp.bfloat16),
        "t_feat":  _pad2d(p["t_feat"], I_pad, Ft_pad).astype(jnp.bfloat16),
        "img_w1":  _pad2d(p["img_w1"], Fv_pad, E_pad).astype(jnp.bfloat16),
        "img_b1":  _pad2d(p["img_b1"], 1, E_pad),
        "img_w2":  _pad2d(p["img_w2"], E_pad, E_pad).astype(jnp.bfloat16),
        "img_b2":  _pad2d(p["img_b2"], 1, E_pad),
        "txt_w1":  _pad2d(p["txt_w1"], Ft_pad, E_pad).astype(jnp.bfloat16),
        "txt_b1":  _pad2d(p["txt_b1"], 1, E_pad),
        "txt_w2":  _pad2d(p["txt_w2"], E_pad, E_pad).astype(jnp.bfloat16),
        "txt_b2":  _pad2d(p["txt_b2"], 1, E_pad),
        "sep_w1":  _pad2d(p["sep_w1"], E_pad, E_pad).astype(jnp.bfloat16),
        "sep_b1":  _pad2d(p["sep_b1"], 1, E_pad),
        "sep_w2":  _pad2d(p["sep_w2"].T, 1, E_pad),    # stored as a row -> lane reduce
        "ib_w":    _pad2d(p["ib_w"], E_pad, E_pad).astype(jnp.bfloat16),
        "ib_b":    _pad2d(p["ib_b"], 1, E_pad),
        "tb_w":    _pad2d(p["tb_w"], E_pad, E_pad).astype(jnp.bfloat16),
        "tb_b":    _pad2d(p["tb_b"], 1, E_pad),
    }

    out_user_pad, out_item_pad = gume_forward(
        pp, ego0_bf, adj_bf, R_bf, adj_ii_bf,
        n_layers=n_layers, n_ui_layers=n_ui_layers)
    out_user_pad = jax.block_until_ready(out_user_pad)
    out_item_pad = jax.block_until_ready(out_item_pad)

    # strip padding back to the original (users; items) layout
    out = jnp.concatenate([out_user_pad[:n_users, :dim_E],
                           out_item_pad[:n_items, :dim_E]], axis=0)

    ref = gume_forward_ref(p, norm_adj, R, img_adj, txt_adj, n_layers, n_ui_layers)
    assert out.shape == (N, dim_E), out.shape
    # bf16 streamed operands / weights (f32 accumulation) => relaxed tolerance vs f32 ref
    assert bool(jnp.allclose(out, ref, atol=3e-2, rtol=3e-2)), "mismatch vs JAX reference"

    # TODO(synk): training-only branch (extended_image/text conv_ui, InfoNCE/bpr losses)
    #             intentionally not ported; forward(train=False) only.
    print("KERNEL_OK")
</pallas_src>

<mosaic_0001>
module attributes {stable_mosaic.version = 11 : i64} {
  func.func @_modal_kernel(%arg0: i32, %arg1: memref<128x128xbf16, #tpu.memory_space<vmem>>, %arg2: memref<128x128xbf16, #tpu.memory_space<vmem>>, %arg3: memref<128x128xf32, #tpu.memory_space<vmem>>, %arg4: memref<128x128xbf16, #tpu.memory_space<vmem>>, %arg5: memref<1x128xf32, #tpu.memory_space<vmem>>, %arg6: memref<128x128xbf16, #tpu.memory_space<vmem>>, %arg7: memref<1x128xf32, #tpu.memory_space<vmem>>, %arg8: memref<128x128xbf16, #tpu.memory_space<vmem>>, %arg9: memref<1x128xf32, #tpu.memory_space<vmem>>, %arg10: memref<128x128xbf16, #tpu.memory_space<vmem>>, %arg11: memref<1x128xf32, #tpu.memory_space<vmem>>, %arg12: memref<2x128x128xbf16, #tpu.memory_space<vmem>>) attributes {dimension_semantics = [#tpu.dimension_semantics<parallel>], iteration_bounds = array<i64: 1>, scalar_prefetch = 0 : i64, scratch_operands = 0 : i64, tpu.core_type = #tpu.core_type<tc>, window_params = [{transform_indices = @transform_0, window_bounds = array<i64: 128, 128>}, {transform_indices = @transform_1, window_bounds = array<i64: 128, 128>}, {transform_indices = @transform_2, window_bounds = array<i64: 128, 128>}, {pipeline_mode = #tpu.pipeline_mode<synchronous>, transform_indices = @transform_3, window_bounds = array<i64: 128, 128>}, {pipeline_mode = #tpu.pipeline_mode<synchronous>, transform_indices = @transform_4, window_bounds = array<i64: 1, 128>}, {pipeline_mode = #tpu.pipeline_mode<synchronous>, transform_indices = @transform_5, window_bounds = array<i64: 128, 128>}, {pipeline_mode = #tpu.pipeline_mode<synchronous>, transform_indices = @transform_6, window_bounds = array<i64: 1, 128>}, {pipeline_mode = #tpu.pipeline_mode<synchronous>, transform_indices = @transform_7, window_bounds = array<i64: 128, 128>}, {pipeline_mode = #tpu.pipeline_mode<synchronous>, transform_indices = @transform_8, window_bounds = array<i64: 1, 128>}, {pipeline_mode = #tpu.pipeline_mode<synchronous>, transform_indices = @transform_9, window_bounds = array<i64: 128, 128>}, {pipeline_mode = #tpu.pipeline_mode<synchronous>, transform_indices = @transform_10, window_bounds = array<i64: 1, 128>}, {transform_indices = @transform_11, window_bounds = array<i64: 2, 128, 128>}]} {
    %c0 = arith.constant 0 : index
    %c0_0 = arith.constant 0 : index
    %0 = vector.load %arg3[%c0, %c0_0] : memref<128x128xf32, #tpu.memory_space<vmem>>, vector<128x128xf32>
    %c0_1 = arith.constant 0 : index
    %c0_2 = arith.constant 0 : index
    %1 = vector.load %arg1[%c0_1, %c0_2] : memref<128x128xbf16, #tpu.memory_space<vmem>>, vector<128x128xbf16>
    %c0_3 = arith.constant 0 : index
    %c0_4 = arith.constant 0 : index
    %2 = vector.load %arg4[%c0_3, %c0_4] : memref<128x128xbf16, #tpu.memory_space<vmem>>, vector<128x128xbf16>
    %cst = arith.constant dense<0.000000e+00> : vector<128x128xf32>
    %3 = tpu.matmul %1, %2, %cst {dimension_numbers = #tpu.dot_dimension_numbers<[1], [0], [0], [1], [0, 0, 1, 1], [], []>} : vector<128x128xbf16>, vector<128x128xbf16>, vector<128x128xf32> -> vector<128x128xf32>
    %c0_5 = arith.constant 0 : index
    %c0_6 = arith.constant 0 : index
    %4 = vector.load %arg5[%c0_5, %c0_6] : memref<1x128xf32, #tpu.memory_space<vmem>>, vector<1x128xf32>
    %5 = vector.broadcast %4 : vector<1x128xf32> to vector<128x128xf32>
    %6 = arith.addf %3, %5 : vector<128x128xf32>
    %7 = arith.truncf %6 : vector<128x128xf32> to vector<128x128xbf16>
    %c0_7 = arith.constant 0 : index
    %c0_8 = arith.constant 0 : index
    %8 = vector.load %arg6[%c0_7, %c0_8] : memref<128x128xbf16, #tpu.memory_space<vmem>>, vector<128x128xbf16>
    %cst_9 = arith.constant dense<0.000000e+00> : vector<128x128xf32>
    %9 = tpu.matmul %7, %8, %cst_9 {dimension_numbers = #tpu.dot_dimension_numbers<[1], [0], [0], [1], [0, 0, 1, 1], [], []>} : vector<128x128xbf16>, vector<128x128xbf16>, vector<128x128xf32> -> vector<128x128xf32>
    %c0_10 = arith.constant 0 : index
    %c0_11 = arith.constant 0 : index
    %10 = vector.load %arg7[%c0_10, %c0_11] : memref<1x128xf32, #tpu.memory_space<vmem>>, vector<1x128xf32>
    %11 = vector.broadcast %10 : vector<1x128xf32> to vector<128x128xf32>
    %12 = arith.addf %9, %11 : vector<128x128xf32>
    %13 = arith.negf %12 : vector<128x128xf32>
    %14 = math.exp %13 : vector<128x128xf32>
    %cst_12 = arith.constant 1.000000e+00 : f32
    %15 = vector.broadcast %cst_12 : f32 to vector<128x128xf32>
    %16 = arith.addf %15, %14 : vector<128x128xf32>
    %17 = arith.divf %15, %16 : vector<128x128xf32>
    %18 = arith.mulf %0, %17 : vector<128x128xf32>
    %19 = arith.truncf %18 : vector<128x128xf32> to vector<128x128xbf16>
    %c0_13 = arith.constant 0 : index
    %c0_14 = arith.constant 0 : index
    %c0_15 = arith.constant 0 : index
    %20 = vector.load %arg12[%c0_13, %c0_14, %c0_15] : memref<2x128x128xbf16, #tpu.memory_space<vmem>>, vector<1x128x128xbf16>
    %21 = vector.shape_cast %20 : vector<1x128x128xbf16> to vector<128x128xbf16>
    %22 = vector.shape_cast %19 : vector<128x128xbf16> to vector<1x128x128xbf16>
    tpu.vector_store %arg12[%c0_13, %c0_14, %c0_15], %22 {strides = array<i32>} : memref<2x128x128xbf16, #tpu.memory_space<vmem>>, vector<1x128x128xbf16>,
    %c0_16 = arith.constant 0 : index
    %c0_17 = arith.constant 0 : index
    %23 = vector.load %arg2[%c0_16, %c0_17] : memref<128x128xbf16, #tpu.memory_space<vmem>>, vector<128x128xbf16>
    %c0_18 = arith.constant 0 : index
    %c0_19 = arith.constant 0 : index
    %24 = vector.load %arg8[%c0_18, %c0_19] : memref<128x128xbf16, #tpu.memory_space<vmem>>, vector<128x128xbf16>
    %cst_20 = arith.constant dense<0.000000e+00> : vector<128x128xf32>
    %25 = tpu.matmul %23, %24, %cst_20 {dimension_numbers = #tpu.dot_dimension_numbers<[1], [0], [0], [1], [0, 0, 1, 1], [], []>} : vector<128x128xbf16>, vector<128x128xbf16>, vector<128x128xf32> -> vector<128x128xf32>
    %c0_21 = arith.constant 0 : index
    %c0_22 = arith.constant 0 : index
    %26 = vector.load %arg9[%c0_21, %c0_22] : memref<1x128xf32, #tpu.memory_space<vmem>>, vector<1x128xf32>
    %27 = vector.broadcast %26 : vector<1x128xf32> to vector<128x128xf32>
    %28 = arith.addf %25, %27 : vector<128x128xf32>
    %29 = arith.truncf %28 : vector<128x128xf32> to vector<128x128xbf16>
    %c0_23 = arith.constant 0 : index
    %c0_24 = arith.constant 0 : index
    %30 = vector.load %arg10[%c0_23, %c0_24] : memref<128x128xbf16, #tpu.memory_space<vmem>>, vector<128x128xbf16>
    %cst_25 = arith.constant dense<0.000000e+00> : vector<128x128xf32>
    %31 = tpu.matmul %29, %30, %cst_25 {dimension_numbers = #tpu.dot_dimension_numbers<[1], [0], [0], [1], [0, 0, 1, 1], [], []>} : vector<128x128xbf16>, vector<128x128xbf16>, vector<128x128xf32> -> vector<128x128xf32>
    %c0_26 = arith.constant 0 : index
    %c0_27 = arith.constant 0 : index
    %32 = vector.load %arg11[%c0_26, %c0_27] : memref<1x128xf32, #tpu.memory_space<vmem>>, vector<1x128xf32>
    %33 = vector.broadcast %32 : vector<1x128xf32> to vector<128x128xf32>
    %34 = arith.addf %31, %33 : vector<128x128xf32>
    %35 = arith.negf %34 : vector<128x128xf32>
    %36 = math.exp %35 : vector<128x128xf32>
    %cst_28 = arith.constant 1.000000e+00 : f32
    %37 = vector.broadcast %cst_28 : f32 to vector<128x128xf32>
    %38 = arith.addf %37, %36 : vector<128x128xf32>
    %39 = arith.divf %37, %38 : vector<128x128xf32>
    %40 = arith.mulf %0, %39 : vector<128x128xf32>
    %41 = arith.truncf %40 : vector<128x128xf32> to vector<128x128xbf16>
    %c1 = arith.constant 1 : index
    %c0_29 = arith.constant 0 : index
    %c0_30 = arith.constant 0 : index
    %42 = vector.load %arg12[%c1, %c0_29, %c0_30] : memref<2x128x128xbf16, #tpu.memory_space<vmem>>, vector<1x128x128xbf16>
    %43 = vector.shape_cast %42 : vector<1x128x128xbf16> to vector<128x128xbf16>
    %44 = vector.shape_cast %41 : vector<128x128xbf16> to vector<1x128x128xbf16>
    tpu.vector_store %arg12[%c1, %c0_29, %c0_30], %44 {strides = array<i32>} : memref<2x128x128xbf16, #tpu.memory_space<vmem>>, vector<1x128x128xbf16>,
    return
  }
  func.func @transform_0(%arg0: i32) -> (i32, i32) {
    %c0_i32 = arith.constant 0 : i32
    %c0_i32_0 = arith.constant 0 : i32
    return %arg0, %c0_i32 : i32, i32
  }
  func.func @transform_1(%arg0: i32) -> (i32, i32) {
    %c0_i32 = arith.constant 0 : i32
    %c0_i32_0 = arith.constant 0 : i32
    return %arg0, %c0_i32 : i32, i32
  }
  func.func @transform_2(%arg0: i32) -> (i32, i32) {
    %c0_i32 = arith.constant 0 : i32
    %c0_i32_0 = arith.constant 0 : i32
    return %arg0, %c0_i32 : i32, i32
  }
  func.func @transform_3(%arg0: i32) -> (i32, i32) {
    %c0_i32 = arith.constant 0 : i32
    %c0_i32_0 = arith.constant 0 : i32
    %c0_i32_1 = arith.constant 0 : i32
    return %c0_i32, %c0_i32_0 : i32, i32
  }
  func.func @transform_4(%arg0: i32) -> (i32, i32) {
    %c0_i32 = arith.constant 0 : i32
    %c0_i32_0 = arith.constant 0 : i32
    %c0_i32_1 = arith.constant 0 : i32
    return %c0_i32, %c0_i32_0 : i32, i32
  }
  func.func @transform_5(%arg0: i32) -> (i32, i32) {
    %c0_i32 = arith.constant 0 : i32
    %c0_i32_0 = arith.constant 0 : i32
    %c0_i32_1 = arith.constant 0 : i32
    return %c0_i32, %c0_i32_0 : i32, i32
  }
  func.func @transform_6(%arg0: i32) -> (i32, i32) {
    %c0_i32 = arith.constant 0 : i32
    %c0_i32_0 = arith.constant 0 : i32
    %c0_i32_1 = arith.constant 0 : i32
    return %c0_i32, %c0_i32_0 : i32, i32
  }
  func.func @transform_7(%arg0: i32) -> (i32, i32) {
    %c0_i32 = arith.constant 0 : i32
    %c0_i32_0 = arith.constant 0 : i32
    %c0_i32_1 = arith.constant 0 : i32
    return %c0_i32, %c0_i32_0 : i32, i32
  }
  func.func @transform_8(%arg0: i32) -> (i32, i32) {
    %c0_i32 = arith.constant 0 : i32
    %c0_i32_0 = arith.constant 0 : i32
    %c0_i32_1 = arith.constant 0 : i32
    return %c0_i32, %c0_i32_0 : i32, i32
  }
  func.func @transform_9(%arg0: i32) -> (i32, i32) {
    %c0_i32 = arith.constant 0 : i32
    %c0_i32_0 = arith.constant 0 : i32
    %c0_i32_1 = arith.constant 0 : i32
    return %c0_i32, %c0_i32_0 : i32, i32
  }
  func.func @transform_10(%arg0: i32) -> (i32, i32) {
    %c0_i32 = arith.constant 0 : i32
    %c0_i32_0 = arith.constant 0 : i32
    %c0_i32_1 = arith.constant 0 : i32
    return %c0_i32, %c0_i32_0 : i32, i32
  }
  func.func @transform_11(%arg0: i32) -> (i32, i32, i32) {
    %c0_i32 = arith.constant 0 : i32
    %c0_i32_0 = arith.constant 0 : i32
    %c0_i32_1 = arith.constant 0 : i32
    return %c0_i32, %arg0, %c0_i32_0 : i32, i32, i32
  }
}

module attributes {stable_mosaic.version = 11 : i64} {
  func.func @_conv_ii_kernel(%arg0: i32, %arg1: i32, %arg2: i32, %arg3: memref<1x128x128xbf16, #tpu.memory_space<vmem>>, %arg4: memref<1x128x128xbf16, #tpu.memory_space<vmem>>, %arg5: memref<1x128x128xf32, #tpu.memory_space<vmem>>, %arg6: memref<256x128xbf16, #tpu.memory_space<vmem>>) attributes {dimension_semantics = [#tpu.dimension_semantics<parallel>, #tpu.dimension_semantics<arbitrary>, #tpu.dimension_semantics<arbitrary>], iteration_bounds = array<i64: 2, 1, 1>, scalar_prefetch = 0 : i64, scratch_operands = 1 : i64, tpu.core_type = #tpu.core_type<tc>, window_params = [{transform_indices = @transform_0, window_bounds = array<i64: 1, 128, 128>}, {transform_indices = @transform_1, window_bounds = array<i64: 1, 128, 128>}, {transform_indices = @transform_2, window_bounds = array<i64: 1, 128, 128>}]} {
    %c128_i32 = arith.constant 128 : i32
    %0 = arith.muli %arg2, %c128_i32 : i32
    %1 = tpu.assume_multiple %0, 128 : i32
    %c0_i32 = arith.constant 0 : i32
    %2 = arith.cmpi eq, %arg1, %c0_i32 : i32
    %c0_i32_0 = arith.constant 0 : i32
    %3 = arith.cmpi eq, %arg2, %c0_i32_0 : i32
    %4 = arith.andi %2, %3 : i1
    %5 = arith.extui %4 : i1 to i32
    %c0_i32_1 = arith.constant 0 : i32
    %6 = arith.cmpi ne, %5, %c0_i32_1 : i32
    scf.if %6 {
      %c0_10 = arith.constant 0 : index
      %c0_11 = arith.constant 0 : index
      %c0_12 = arith.constant 0 : index
      %25 = vector.load %arg3[%c0_10, %c0_11, %c0_12] : memref<1x128x128xbf16, #tpu.memory_space<vmem>>, vector<1x128x128xbf16>
      %26 = vector.shape_cast %25 : vector<1x128x128xbf16> to vector<128x128xbf16>
      %c0_13 = arith.constant 0 : index
      %c0_14 = arith.constant 0 : index
      %27 = vector.load %arg6[%c0_13, %c0_14] : memref<256x128xbf16, #tpu.memory_space<vmem>>, vector<128x128xbf16>
      tpu.vector_store %arg6[%c0_13, %c0_14], %26 {strides = array<i32>} : memref<256x128xbf16, #tpu.memory_space<vmem>>, vector<128x128xbf16>,
    } else {
    }
    %c2_i32 = arith.constant 2 : i32
    %7 = arith.remsi %arg1, %c2_i32 : i32
    %c128_i32_2 = arith.constant 128 : i32
    %8 = arith.muli %7, %c128_i32_2 : i32
    %9 = tpu.assume_multiple %8, 128 : i32
    %c1_i32 = arith.constant 1 : i32
    %10 = arith.subi %c1_i32, %7 : i32
    %c128_i32_3 = arith.constant 128 : i32
    %11 = arith.muli %10, %c128_i32_3 : i32
    %12 = tpu.assume_multiple %11, 128 : i32
    %c0 = arith.constant 0 : index
    %c0_4 = arith.constant 0 : index
    %c0_5 = arith.constant 0 : index
    %13 = vector.load %arg4[%c0, %c0_4, %c0_5] : memref<1x128x128xbf16, #tpu.memory_space<vmem>>, vector<1x128x128xbf16>
    %14 = vector.shape_cast %13 : vector<1x128x128xbf16> to vector<128x128xbf16>
    %15 = arith.index_cast %9 : i32 to index
    %c0_6 = arith.constant 0 : index
    %16 = vector.load %arg6[%15, %c0_6] : memref<256x128xbf16, #tpu.memory_space<vmem>>, vector<128x128xbf16>
    %cst = arith.constant dense<0.000000e+00> : vector<128x128xf32>
    %17 = tpu.matmul %14, %16, %cst {dimension_numbers = #tpu.dot_dimension_numbers<[1], [0], [0], [1], [0, 0, 1, 1], [], []>} : vector<128x128xbf16>, vector<128x128xbf16>, vector<128x128xf32> -> vector<128x128xf32>
    %18 = arith.truncf %17 : vector<128x128xf32> to vector<128x128xbf16>
    %19 = arith.addi %12, %1 : i32
    %20 = arith.index_cast %19 : i32 to index
    %c0_7 = arith.constant 0 : index
    %21 = vector.load %arg6[%20, %c0_7] : memref<256x128xbf16, #tpu.memory_space<vmem>>, vector<128x128xbf16>
    tpu.vector_store %arg6[%20, %c0_7], %18 {strides = array<i32>} : memref<256x128xbf16, #tpu.memory_space<vmem>>, vector<128x128xbf16>,
    %c0_i32_8 = arith.constant 0 : i32
    %22 = arith.cmpi eq, %arg1, %c0_i32_8 : i32
    %23 = arith.extui %22 : i1 to i32
    %c0_i32_9 = arith.constant 0 : i32
    %24 = arith.cmpi ne, %23, %c0_i32_9 : i32
    scf.if %24 {
      %c0_10 = arith.constant 0 : index
      %c0_11 = arith.constant 0 : index
      %c0_12 = arith.constant 0 : index
      %25 = vector.load %arg5[%c0_10, %c0_11, %c0_12] : memref<1x128x128xf32, #tpu.memory_space<vmem>>, vector<1x128x128xf32>
      %26 = vector.shape_cast %25 : vector<1x128x128xf32> to vector<128x128xf32>
      %27 = vector.shape_cast %17 : vector<128x128xf32> to vector<1x128x128xf32>
      tpu.vector_store %arg5[%c0_10, %c0_11, %c0_12], %27 {strides = array<i32>} : memref<1x128x128xf32, #tpu.memory_space<vmem>>, vector<1x128x128xf32>,
    } else {
    }
    return
  }
  func.func @transform_0(%arg0: i32, %arg1: i32, %arg2: i32) -> (i32, i32, i32) {
    %c0_i32 = arith.constant 0 : i32
    %c0_i32_0 = arith.constant 0 : i32
    %c0_i32_1 = arith.constant 0 : i32
    return %arg0, %c0_i32, %c0_i32_0 : i32, i32, i32
  }
  func.func @transform_1(%arg0: i32, %arg1: i32, %arg2: i32) -> (i32, i32, i32) {
    %c0_i32 = arith.constant 0 : i32
    %c0_i32_0 = arith.constant 0 : i32
    return %arg0, %arg2, %c0_i32 : i32, i32, i32
  }
  func.func @transform_2(%arg0: i32, %arg1: i32, %arg2: i32) -> (i32, i32, i32) {
    %c0_i32 = arith.constant 0 : i32
    %c0_i32_0 = arith.constant 0 : i32
    return %arg0, %arg2, %c0_i32 : i32, i32, i32
  }
}

module attributes {stable_mosaic.version = 11 : i64} {
  func.func @_user_proj_kernel(%arg0: i32, %arg1: i32, %arg2: memref<128x128xbf16, #tpu.memory_space<vmem>>, %arg3: memref<1x128x128xf32, #tpu.memory_space<vmem>>, %arg4: memref<1x128x128xf32, #tpu.memory_space<vmem>>) attributes {dimension_semantics = [#tpu.dimension_semantics<parallel>, #tpu.dimension_semantics<parallel>], iteration_bounds = array<i64: 1, 2>, scalar_prefetch = 0 : i64, scratch_operands = 0 : i64, tpu.core_type = #tpu.core_type<tc>, window_params = [{transform_indices = @transform_0, window_bounds = array<i64: 128, 128>}, {transform_indices = @transform_1, window_bounds = array<i64: 1, 128, 128>}, {transform_indices = @transform_2, window_bounds = array<i64: 1, 128, 128>}]} {
    %c0 = arith.constant 0 : index
    %c0_0 = arith.constant 0 : index
    %0 = vector.load %arg2[%c0, %c0_0] : memref<128x128xbf16, #tpu.memory_space<vmem>>, vector<128x128xbf16>
    %c0_1 = arith.constant 0 : index
    %c0_2 = arith.constant 0 : index
    %c0_3 = arith.constant 0 : index
    %1 = vector.load %arg3[%c0_1, %c0_2, %c0_3] : memref<1x128x128xf32, #tpu.memory_space<vmem>>, vector<1x128x128xf32>
    %2 = vector.shape_cast %1 : vector<1x128x128xf32> to vector<128x128xf32>
    %3 = arith.truncf %2 : vector<128x128xf32> to vector<128x128xbf16>
    %cst = arith.constant dense<0.000000e+00> : vector<128x128xf32>
    %4 = tpu.matmul %0, %3, %cst {dimension_numbers = #tpu.dot_dimension_numbers<[1], [0], [0], [1], [0, 0, 1, 1], [], []>} : vector<128x128xbf16>, vector<128x128xbf16>, vector<128x128xf32> -> vector<128x128xf32>
    %c0_4 = arith.constant 0 : index
    %c0_5 = arith.constant 0 : index
    %c0_6 = arith.constant 0 : index
    %5 = vector.load %arg4[%c0_4, %c0_5, %c0_6] : memref<1x128x128xf32, #tpu.memory_space<vmem>>, vector<1x128x128xf32>
    %6 = vector.shape_cast %5 : vector<1x128x128xf32> to vector<128x128xf32>
    %7 = vector.shape_cast %4 : vector<128x128xf32> to vector<1x128x128xf32>
    tpu.vector_store %arg4[%c0_4, %c0_5, %c0_6], %7 {strides = array<i32>} : memref<1x128x128xf32, #tpu.memory_space<vmem>>, vector<1x128x128xf32>,
    return
  }
  func.func @transform_0(%arg0: i32, %arg1: i32) -> (i32, i32) {
    %c0_i32 = arith.constant 0 : i32
    %c0_i32_0 = arith.constant 0 : i32
    return %arg0, %c0_i32 : i32, i32
  }
  func.func @transform_1(%arg0: i32, %arg1: i32) -> (i32, i32, i32) {
    %c0_i32 = arith.constant 0 : i32
    %c0_i32_0 = arith.constant 0 : i32
    %c0_i32_1 = arith.constant 0 : i32
    return %arg1, %c0_i32, %c0_i32_0 : i32, i32, i32
  }
  func.func @transform_2(%arg0: i32, %arg1: i32) -> (i32, i32, i32) {
    %c0_i32 = arith.constant 0 : i32
    %c0_i32_0 = arith.constant 0 : i32
    return %arg1, %arg0, %c0_i32 : i32, i32, i32
  }
}

module attributes {stable_mosaic.version = 11 : i64} {
  func.func @_conv_ui_kernel(%arg0: i32, %arg1: i32, %arg2: memref<256x128xbf16, #tpu.memory_space<vmem>>, %arg3: memref<256x256xbf16, #tpu.memory_space<vmem>>, %arg4: memref<256x128xf32, #tpu.memory_space<vmem>>, %arg5: memref<512x128xbf16, #tpu.memory_space<vmem>>, %arg6: memref<256x128xf32, #tpu.memory_space<vmem>>) attributes {dimension_semantics = [#tpu.dimension_semantics<arbitrary>, #tpu.dimension_semantics<arbitrary>], iteration_bounds = array<i64: 2, 1>, scalar_prefetch = 0 : i64, scratch_operands = 2 : i64, tpu.core_type = #tpu.core_type<tc>, window_params = [{pipeline_mode = #tpu.pipeline_mode<synchronous>, transform_indices = @transform_0, window_bounds = array<i64: 256, 128>}, {transform_indices = @transform_1, window_bounds = array<i64: 256, 256>}, {transform_indices = @transform_2, window_bounds = array<i64: 256, 128>}]} {
    %c256_i32 = arith.constant 256 : i32
    %0 = arith.muli %arg1, %c256_i32 : i32
    %1 = tpu.assume_multiple %0, 256 : i32
    %c0_i32 = arith.constant 0 : i32
    %2 = arith.cmpi eq, %arg0, %c0_i32 : i32
    %c0_i32_0 = arith.constant 0 : i32
    %3 = arith.cmpi eq, %arg1, %c0_i32_0 : i32
    %4 = arith.andi %2, %3 : i1
    %5 = arith.extui %4 : i1 to i32
    %c0_i32_1 = arith.constant 0 : i32
    %6 = arith.cmpi ne, %5, %c0_i32_1 : i32
    scf.if %6 {
      %c0_11 = arith.constant 0 : index
      %c0_12 = arith.constant 0 : index
      %29 = vector.load %arg2[%c0_11, %c0_12] : memref<256x128xbf16, #tpu.memory_space<vmem>>, vector<256x128xbf16>
      %c0_13 = arith.constant 0 : index
      %c0_14 = arith.constant 0 : index
      %30 = vector.load %arg5[%c0_13, %c0_14] : memref<512x128xbf16, #tpu.memory_space<vmem>>, vector<256x128xbf16>
      tpu.vector_store %arg5[%c0_13, %c0_14], %29 {strides = array<i32>} : memref<512x128xbf16, #tpu.memory_space<vmem>>, vector<256x128xbf16>,
      %c0_15 = arith.constant 0 : index
      %c0_16 = arith.constant 0 : index
      %31 = vector.load %arg2[%c0_15, %c0_16] : memref<256x128xbf16, #tpu.memory_space<vmem>>, vector<256x128xbf16>
      %32 = arith.extf %31 : vector<256x128xbf16> to vector<256x128xf32>
      %c0_17 = arith.constant 0 : index
      %c0_18 = arith.constant 0 : index
      %33 = vector.load %arg6[%c0_17, %c0_18] : memref<256x128xf32, #tpu.memory_space<vmem>>, vector<256x128xf32>
      tpu.vector_store %arg6[%c0_17, %c0_18], %32 {strides = array<i32>} : memref<256x128xf32, #tpu.memory_space<vmem>>, vector<256x128xf32>,
    } else {
    }
    %c2_i32 = arith.constant 2 : i32
    %7 = arith.remsi %arg0, %c2_i32 : i32
    %c256_i32_2 = arith.constant 256 : i32
    %8 = arith.muli %7, %c256_i32_2 : i32
    %9 = tpu.assume_multiple %8, 256 : i32
    %c1_i32 = arith.constant 1 : i32
    %10 = arith.subi %c1_i32, %7 : i32
    %c256_i32_3 = arith.constant 256 : i32
    %11 = arith.muli %10, %c256_i32_3 : i32
    %12 = tpu.assume_multiple %11, 256 : i32
    %c0 = arith.constant 0 : index
    %c0_4 = arith.constant 0 : index
    %13 = vector.load %arg3[%c0, %c0_4] : memref<256x256xbf16, #tpu.memory_space<vmem>>, vector<256x256xbf16>
    %14 = arith.index_cast %9 : i32 to index
    %c0_5 = arith.constant 0 : index
    %15 = vector.load %arg5[%14, %c0_5] : memref<512x128xbf16, #tpu.memory_space<vmem>>, vector<256x128xbf16>
    %cst = arith.constant dense<0.000000e+00> : vector<256x128xf32>
    %16 = tpu.matmul %13, %15, %cst {dimension_numbers = #tpu.dot_dimension_numbers<[1], [0], [0], [1], [0, 0, 1, 1], [], []>} : vector<256x256xbf16>, vector<256x128xbf16>, vector<256x128xf32> -> vector<256x128xf32>
    %17 = arith.truncf %16 : vector<256x128xf32> to vector<256x128xbf16>
    %18 = arith.addi %12, %1 : i32
    %19 = arith.index_cast %18 : i32 to index
    %c0_6 = arith.constant 0 : index
    %20 = vector.load %arg5[%19, %c0_6] : memref<512x128xbf16, #tpu.memory_space<vmem>>, vector<256x128xbf16>
    tpu.vector_store %arg5[%19, %c0_6], %17 {strides = array<i32>} : memref<512x128xbf16, #tpu.memory_space<vmem>>, vector<256x128xbf16>,
    %21 = arith.index_cast %1 : i32 to index
    %c0_7 = arith.constant 0 : index
    %22 = vector.load %arg6[%21, %c0_7] : memref<256x128xf32, #tpu.memory_space<vmem>>, vector<256x128xf32>
    %23 = arith.addf %22, %16 : vector<256x128xf32>
    %24 = arith.index_cast %1 : i32 to index
    %c0_8 = arith.constant 0 : index
    %25 = vector.load %arg6[%24, %c0_8] : memref<256x128xf32, #tpu.memory_space<vmem>>, vector<256x128xf32>
    tpu.vector_store %arg6[%24, %c0_8], %23 {strides = array<i32>} : memref<256x128xf32, #tpu.memory_space<vmem>>, vector<256x128xf32>,
    %c1_i32_9 = arith.constant 1 : i32
    %26 = arith.cmpi eq, %arg0, %c1_i32_9 : i32
    %27 = arith.extui %26 : i1 to i32
    %c0_i32_10 = arith.constant 0 : i32
    %28 = arith.cmpi ne, %27, %c0_i32_10 : i32
    scf.if %28 {
      %29 = arith.index_cast %1 : i32 to index
      %c0_11 = arith.constant 0 : index
      %30 = vector.load %arg6[%29, %c0_11] : memref<256x128xf32, #tpu.memory_space<vmem>>, vector<256x128xf32>
      %cst_12 = arith.constant 0.333333343 : f32
      %31 = vector.broadcast %cst_12 : f32 to vector<256x128xf32>
      %32 = arith.mulf %30, %31 : vector<256x128xf32>
      %c0_13 = arith.constant 0 : index
      %c0_14 = arith.constant 0 : index
      %33 = vector.load %arg4[%c0_13, %c0_14] : memref<256x128xf32, #tpu.memory_space<vmem>>, vector<256x128xf32>
      tpu.vector_store %arg4[%c0_13, %c0_14], %32 {strides = array<i32>} : memref<256x128xf32, #tpu.memory_space<vmem>>, vector<256x128xf32>,
    } else {
    }
    return
  }
  func.func @transform_0(%arg0: i32, %arg1: i32) -> (i32, i32) {
    %c0_i32 = arith.constant 0 : i32
    %c0_i32_0 = arith.constant 0 : i32
    %c0_i32_1 = arith.constant 0 : i32
    return %c0_i32, %c0_i32_0 : i32, i32
  }
  func.func @transform_1(%arg0: i32, %arg1: i32) -> (i32, i32) {
    %c0_i32 = arith.constant 0 : i32
    %c0_i32_0 = arith.constant 0 : i32
    return %arg1, %c0_i32 : i32, i32
  }
  func.func @transform_2(%arg0: i32, %arg1: i32) -> (i32, i32) {
    %c0_i32 = arith.constant 0 : i32
    %c0_i32_0 = arith.constant 0 : i32
    return %arg1, %c0_i32 : i32, i32
  }
}

module attributes {stable_mosaic.version = 11 : i64} {
  func.func @_fusion_kernel(%arg0: i32, %arg1: memref<128x128xf32, #tpu.memory_space<vmem>>, %arg2: memref<128x128xf32, #tpu.memory_space<vmem>>, %arg3: memref<128x128xf32, #tpu.memory_space<vmem>>, %arg4: memref<128x128xbf16, #tpu.memory_space<vmem>>, %arg5: memref<1x128xf32, #tpu.memory_space<vmem>>, %arg6: memref<1x128xf32, #tpu.memory_space<vmem>>, %arg7: memref<128x128xbf16, #tpu.memory_space<vmem>>, %arg8: memref<1x128xf32, #tpu.memory_space<vmem>>, %arg9: memref<128x128xbf16, #tpu.memory_space<vmem>>, %arg10: memref<1x128xf32, #tpu.memory_space<vmem>>, %arg11: memref<128x128xf32, #tpu.memory_space<vmem>>) attributes {dimension_semantics = [#tpu.dimension_semantics<parallel>], iteration_bounds = array<i64: 1>, scalar_prefetch = 0 : i64, scratch_operands = 0 : i64, tpu.core_type = #tpu.core_type<tc>, window_params = [{transform_indices = @transform_0, window_bounds = array<i64: 128, 128>}, {transform_indices = @transform_1, window_bounds = array<i64: 128, 128>}, {transform_indices = @transform_2, window_bounds = array<i64: 128, 128>}, {pipeline_mode = #tpu.pipeline_mode<synchronous>, transform_indices = @transform_3, window_bounds = array<i64: 128, 128>}, {pipeline_mode = #tpu.pipeline_mode<synchronous>, transform_indices = @transform_4, window_bounds = array<i64: 1, 128>}, {pipeline_mode = #tpu.pipeline_mode<synchronous>, transform_indices = @transform_5, window_bounds = array<i64: 1, 128>}, {pipeline_mode = #tpu.pipeline_mode<synchronous>, transform_indices = @transform_6, window_bounds = array<i64: 128, 128>}, {pipeline_mode = #tpu.pipeline_mode<synchronous>, transform_indices = @transform_7, window_bounds = array<i64: 1, 128>}, {pipeline_mode = #tpu.pipeline_mode<synchronous>, transform_indices = @transform_8, window_bounds = array<i64: 128, 128>}, {pipeline_mode = #tpu.pipeline_mode<synchronous>, transform_indices = @transform_9, window_bounds = array<i64: 1, 128>}, {transform_indices = @transform_10, window_bounds = array<i64: 128, 128>}]} {
    %c0 = arith.constant 0 : index
    %c0_0 = arith.constant 0 : index
    %0 = vector.load %arg1[%c0, %c0_0] : memref<128x128xf32, #tpu.memory_space<vmem>>, vector<128x128xf32>
    %c0_1 = arith.constant 0 : index
    %c0_2 = arith.constant 0 : index
    %1 = vector.load %arg2[%c0_1, %c0_2] : memref<128x128xf32, #tpu.memory_space<vmem>>, vector<128x128xf32>
    %c0_3 = arith.constant 0 : index
    %c0_4 = arith.constant 0 : index
    %2 = vector.load %arg3[%c0_3, %c0_4] : memref<128x128xf32, #tpu.memory_space<vmem>>, vector<128x128xf32>
    %c0_5 = arith.constant 0 : index
    %c0_6 = arith.constant 0 : index
    %3 = vector.load %arg4[%c0_5, %c0_6] : memref<128x128xbf16, #tpu.memory_space<vmem>>, vector<128x128xbf16>
    %4 = arith.truncf %1 : vector<128x128xf32> to vector<128x128xbf16>
    %cst = arith.constant dense<0.000000e+00> : vector<128x128xf32>
    %5 = tpu.matmul %4, %3, %cst {dimension_numbers = #tpu.dot_dimension_numbers<[1], [0], [0], [1], [0, 0, 1, 1], [], []>} : vector<128x128xbf16>, vector<128x128xbf16>, vector<128x128xf32> -> vector<128x128xf32>
    %c0_7 = arith.constant 0 : index
    %c0_8 = arith.constant 0 : index
    %6 = vector.load %arg5[%c0_7, %c0_8] : memref<1x128xf32, #tpu.memory_space<vmem>>, vector<1x128xf32>
    %7 = vector.broadcast %6 : vector<1x128xf32> to vector<128x128xf32>
    %8 = arith.addf %5, %7 : vector<128x128xf32>
    %9 = math.tanh %8 : vector<128x128xf32>
    %10 = arith.truncf %2 : vector<128x128xf32> to vector<128x128xbf16>
    %cst_9 = arith.constant dense<0.000000e+00> : vector<128x128xf32>
    %11 = tpu.matmul %10, %3, %cst_9 {dimension_numbers = #tpu.dot_dimension_numbers<[1], [0], [0], [1], [0, 0, 1, 1], [], []>} : vector<128x128xbf16>, vector<128x128xbf16>, vector<128x128xf32> -> vector<128x128xf32>
    %c0_10 = arith.constant 0 : index
    %c0_11 = arith.constant 0 : index
    %12 = vector.load %arg5[%c0_10, %c0_11] : memref<1x128xf32, #tpu.memory_space<vmem>>, vector<1x128xf32>
    %13 = vector.broadcast %12 : vector<1x128xf32> to vector<128x128xf32>
    %14 = arith.addf %11, %13 : vector<128x128xf32>
    %15 = math.tanh %14 : vector<128x128xf32>
    %c0_12 = arith.constant 0 : index
    %c0_13 = arith.constant 0 : index
    %16 = vector.load %arg6[%c0_12, %c0_13] : memref<1x128xf32, #tpu.memory_space<vmem>>, vector<1x128xf32>
    %17 = vector.broadcast %16 : vector<1x128xf32> to vector<128x128xf32>
    %18 = arith.mulf %9, %17 : vector<128x128xf32>
    %cst_14 = arith.constant dense<0.000000e+00> : vector<128xf32>
    %19 = vector.multi_reduction <add>, %18, %cst_14 [1] : vector<128x128xf32> to vector<128xf32>
    %20 = vector.shape_cast %19 : vector<128xf32> to vector<128x1xf32>
    %21 = vector.broadcast %16 : vector<1x128xf32> to vector<128x128xf32>
    %22 = arith.mulf %15, %21 : vector<128x128xf32>
    %cst_15 = arith.constant dense<0.000000e+00> : vector<128xf32>
    %23 = vector.multi_reduction <add>, %22, %cst_15 [1] : vector<128x128xf32> to vector<128xf32>
    %24 = vector.shape_cast %23 : vector<128xf32> to vector<128x1xf32>
    %25 = arith.maximumf %20, %24 : vector<128x1xf32>
    %26 = arith.subf %20, %25 : vector<128x1xf32>
    %27 = math.exp %26 : vector<128x1xf32>
    %28 = arith.subf %24, %25 : vector<128x1xf32>
    %29 = math.exp %28 : vector<128x1xf32>
    %30 = arith.addf %27, %29 : vector<128x1xf32>
    %31 = arith.divf %27, %30 : vector<128x1xf32>
    %32 = arith.divf %29, %30 : vector<128x1xf32>
    %33 = vector.broadcast %31 : vector<128x1xf32> to vector<128x128xf32>
    %34 = arith.mulf %33, %1 : vector<128x128xf32>
    %35 = vector.broadcast %32 : vector<128x1xf32> to vector<128x128xf32>
    %36 = arith.mulf %35, %2 : vector<128x128xf32>
    %37 = arith.addf %34, %36 : vector<128x128xf32>
    %38 = arith.truncf %0 : vector<128x128xf32> to vector<128x128xbf16>
    %c0_16 = arith.constant 0 : index
    %c0_17 = arith.constant 0 : index
    %39 = vector.load %arg7[%c0_16, %c0_17] : memref<128x128xbf16, #tpu.memory_space<vmem>>, vector<128x128xbf16>
    %cst_18 = arith.constant dense<0.000000e+00> : vector<128x128xf32>
    %40 = tpu.matmul %38, %39, %cst_18 {dimension_numbers = #tpu.dot_dimension_numbers<[1], [0], [0], [1], [0, 0, 1, 1], [], []>} : vector<128x128xbf16>, vector<128x128xbf16>, vector<128x128xf32> -> vector<128x128xf32>
    %c0_19 = arith.constant 0 : index
    %c0_20 = arith.constant 0 : index
    %41 = vector.load %arg8[%c0_19, %c0_20] : memref<1x128xf32, #tpu.memory_space<vmem>>, vector<1x128xf32>
    %42 = vector.broadcast %41 : vector<1x128xf32> to vector<128x128xf32>
    %43 = arith.addf %40, %42 : vector<128x128xf32>
    %44 = arith.negf %43 : vector<128x128xf32>
    %45 = math.exp %44 : vector<128x128xf32>
    %cst_21 = arith.constant 1.000000e+00 : f32
    %46 = vector.broadcast %cst_21 : f32 to vector<128x128xf32>
    %47 = arith.addf %46, %45 : vector<128x128xf32>
    %48 = arith.divf %46, %47 : vector<128x128xf32>
    %c0_22 = arith.constant 0 : index
    %c0_23 = arith.constant 0 : index
    %49 = vector.load %arg9[%c0_22, %c0_23] : memref<128x128xbf16, #tpu.memory_space<vmem>>, vector<128x128xbf16>
    %cst_24 = arith.constant dense<0.000000e+00> : vector<128x128xf32>
    %50 = tpu.matmul %38, %49, %cst_24 {dimension_numbers = #tpu.dot_dimension_numbers<[1], [0], [0], [1], [0, 0, 1, 1], [], []>} : vector<128x128xbf16>, vector<128x128xbf16>, vector<128x128xf32> -> vector<128x128xf32>
    %c0_25 = arith.constant 0 : index
    %c0_26 = arith.constant 0 : index
    %51 = vector.load %arg10[%c0_25, %c0_26] : memref<1x128xf32, #tpu.memory_space<vmem>>, vector<1x128xf32>
    %52 = vector.broadcast %51 : vector<1x128xf32> to vector<128x128xf32>
    %53 = arith.addf %50, %52 : vector<128x128xf32>
    %54 = arith.negf %53 : vector<128x128xf32>
    %55 = math.exp %54 : vector<128x128xf32>
    %cst_27 = arith.constant 1.000000e+00 : f32
    %56 = vector.broadcast %cst_27 : f32 to vector<128x128xf32>
    %57 = arith.addf %56, %55 : vector<128x128xf32>
    %58 = arith.divf %56, %57 : vector<128x128xf32>
    %59 = arith.subf %1, %37 : vector<128x128xf32>
    %60 = arith.mulf %48, %59 : vector<128x128xf32>
    %61 = arith.subf %2, %37 : vector<128x128xf32>
    %62 = arith.mulf %58, %61 : vector<128x128xf32>
    %63 = arith.addf %60, %62 : vector<128x128xf32>
    %64 = arith.addf %63, %37 : vector<128x128xf32>
    %cst_28 = arith.constant 0.333333343 : f32
    %65 = vector.broadcast %cst_28 : f32 to vector<128x128xf32>
    %66 = arith.mulf %64, %65 : vector<128x128xf32>
    %67 = arith.addf %0, %66 : vector<128x128xf32>
    %c0_29 = arith.constant 0 : index
    %c0_30 = arith.constant 0 : index
    %68 = vector.load %arg11[%c0_29, %c0_30] : memref<128x128xf32, #tpu.memory_space<vmem>>, vector<128x128xf32>
    tpu.vector_store %arg11[%c0_29, %c0_30], %67 {strides = array<i32>} : memref<128x128xf32, #tpu.memory_space<vmem>>, vector<128x128xf32>,
    return
  }
  func.func @transform_0(%arg0: i32) -> (i32, i32) {
    %c0_i32 = arith.constant 0 : i32
    %c0_i32_0 = arith.constant 0 : i32
    return %arg0, %c0_i32 : i32, i32
  }
  func.func @transform_1(%arg0: i32) -> (i32, i32) {
    %c0_i32 = arith.constant 0 : i32
    %c0_i32_0 = arith.constant 0 : i32
    return %arg0, %c0_i32 : i32, i32
  }
  func.func @transform_2(%arg0: i32) -> (i32, i32) {
    %c0_i32 = arith.constant 0 : i32
    %c0_i32_0 = arith.constant 0 : i32
    return %arg0, %c0_i32 : i32, i32
  }
  func.func @transform_3(%arg0: i32) -> (i32, i32) {
    %c0_i32 = arith.constant 0 : i32
    %c0_i32_0 = arith.constant 0 : i32
    %c0_i32_1 = arith.constant 0 : i32
    return %c0_i32, %c0_i32_0 : i32, i32
  }
  func.func @transform_4(%arg0: i32) -> (i32, i32) {
    %c0_i32 = arith.constant 0 : i32
    %c0_i32_0 = arith.constant 0 : i32
    %c0_i32_1 = arith.constant 0 : i32
    return %c0_i32, %c0_i32_0 : i32, i32
  }
  func.func @transform_5(%arg0: i32) -> (i32, i32) {
    %c0_i32 = arith.constant 0 : i32
    %c0_i32_0 = arith.constant 0 : i32
    %c0_i32_1 = arith.constant 0 : i32
    return %c0_i32, %c0_i32_0 : i32, i32
  }
  func.func @transform_6(%arg0: i32) -> (i32, i32) {
    %c0_i32 = arith.constant 0 : i32
    %c0_i32_0 = arith.constant 0 : i32
    %c0_i32_1 = arith.constant 0 : i32
    return %c0_i32, %c0_i32_0 : i32, i32
  }
  func.func @transform_7(%arg0: i32) -> (i32, i32) {
    %c0_i32 = arith.constant 0 : i32
    %c0_i32_0 = arith.constant 0 : i32
    %c0_i32_1 = arith.constant 0 : i32
    return %c0_i32, %c0_i32_0 : i32, i32
  }
  func.func @transform_8(%arg0: i32) -> (i32, i32) {
    %c0_i32 = arith.constant 0 : i32
    %c0_i32_0 = arith.constant 0 : i32
    %c0_i32_1 = arith.constant 0 : i32
    return %c0_i32, %c0_i32_0 : i32, i32
  }
  func.func @transform_9(%arg0: i32) -> (i32, i32) {
    %c0_i32 = arith.constant 0 : i32
    %c0_i32_0 = arith.constant 0 : i32
    %c0_i32_1 = arith.constant 0 : i32
    return %c0_i32, %c0_i32_0 : i32, i32
  }
  func.func @transform_10(%arg0: i32) -> (i32, i32) {
    %c0_i32 = arith.constant 0 : i32
    %c0_i32_0 = arith.constant 0 : i32
    return %arg0, %c0_i32 : i32, i32
  }
}

</mosaic_0001>

<llo_original>
// kernel: gume_forward.9
$region0: #{gume_forward.9}
  #allocation0 [shape = 'u32[]', space=smem, size = 0x4, offset = 0x4, fixed_abs, tag = 'smem constant byte address 0x4 - core index']
  #allocation1 [shape = 'u32[144,128]{1,0:T(1,128)}', space=vmem, size = 0x12000, scoped, tag = 'internal scratch']
  %s0 = inlined_call_operand.vmem [shape: bf16[128,128], index: 0, kind: input, shape index: {}]
  %s1 = inlined_call_operand.vmem [shape: f32[2,128,128], index: 1, kind: input, shape index: {}]
  %s2 = inlined_call_operand.vmem [shape: f32[2,128,128], index: 2, kind: output, shape index: {}]
  %s3 = sld [smem:[#allocation0]]
  $region41: #{gume_forward.9} parent=0
    _
  %s5 = ssub.s32 1, %s3
  %s6 = scalar_select 0, %s5, %s3
  loop: start=0, step=1, limit=4
  $region2: #{gume_forward.9} parent=0 // loop_pre_header
    _
  $region3: #{gume_forward.9} parent=0 // loop_header
    %s8 = sphi 0, %s12
    %p9 = scmp.ge.s32.totalorder %s8, 4
    %s15 = sphi 0, %s27
    %s16 = sphi 0, %s23
    %s17 = sphi 0, %s15
    %s18 = sphi 0, %s16
    %s19 = sphi 0, %s17
    %s20 = sphi 0, %s18
    %s30 = sphi 0, %s32
    %s33 = sphi 0, %s30
    %s34 = sphi 0, %s33
    %s50 = sphi 0, %s34
    %s56 = sphi 0, %s58
    %s59 = sphi 0, %s56
    %s60 = sphi 0, %s59
    %s76 = sphi 0, %s60
    %s84 = sphi 0, %s86
    %s87 = sphi 0, %s84
    %s88 = sphi 0, %s87
    %s104 = sphi 0, %s88
  $region4: #{gume_forward.9} parent=0 // loop_header_branch
    %11 = sbr.rel (%p9) target = $region8
  $region5: #{gume_forward.9} parent=0 // loop_body
    %s13 = ssub.s32 %s8, 1
    %s14 = ssub.s32 %s8, 2
    %s21 = sadd.s32 1, %s16
    %p22 = scmp.ge.s32.totalorder %s21, 2
    %s23 = scalar_select %p22, 0, %s21
    %s24 = sadd.s32 1, %s15
    %s25 = scalar_select %p22, %s24, %s15
    %p26 = scmp.ge.s32.totalorder %s25, 1
    %s27 = scalar_select %p26, 0, %s25
    %s28 = ssub.s32 %s15, %s27
    %p29 = scmp.eq.s32.totalorder %s28, 0
    %s31 = sadd.s32 %s30, 1
    %s32 = scalar_select %p29, %s30, %s31
    %p35 = pneg %p29
    %p36 = scmp.eq.s32.totalorder %s8, 1
    %p37 = por %p35, %p36
    %p38 = scmp.ne.s32.totalorder %s30, %s33
    %p39 = scmp.eq.s32.totalorder %s8, 0
    %p40 = por %p38, %p39
    %p41 = scmp.ne.s32.totalorder %s30, %s33
    %p42 = scmp.eq.s32.totalorder %s13, 1
    %p43 = por %p41, %p42
    %p44 = scmp.ne.s32.totalorder %s33, %s34
    %p45 = scmp.eq.s32.totalorder %s13, 0
    %p46 = por %p44, %p45
    %p47 = scmp.ne.s32.totalorder %s33, %s34
    %p48 = scmp.eq.s32.totalorder %s14, 1
    %p49 = por %p47, %p48
    %p51 = scmp.ne.s32.totalorder %s34, %s50
    %p52 = scmp.eq.s32.totalorder %s14, 0
    %p53 = por %p51, %p52
    %s54 = ssub.s32 %s16, %s23
    %p55 = scmp.eq.s32.totalorder %s54, 0
    %s57 = sadd.s32 %s56, 1
    %s58 = scalar_select %p55, %s56, %s57
    %p61 = pneg %p55
    %p62 = scmp.eq.s32.totalorder %s8, 1
    %p63 = por %p61, %p62
    %p64 = scmp.ne.s32.totalorder %s56, %s59
    %p65 = scmp.eq.s32.totalorder %s8, 0
    %p66 = por %p64, %p65
    %p67 = scmp.ne.s32.totalorder %s56, %s59
    %p68 = scmp.eq.s32.totalorder %s13, 1
    %p69 = por %p67, %p68
    %p70 = scmp.ne.s32.totalorder %s59, %s60
    %p71 = scmp.eq.s32.totalorder %s13, 0
    %p72 = por %p70, %p71
    %p73 = scmp.ne.s32.totalorder %s59, %s60
    %p74 = scmp.eq.s32.totalorder %s14, 1
    %p75 = por %p73, %p74
    %p77 = scmp.ne.s32.totalorder %s60, %s76
    %p78 = scmp.eq.s32.totalorder %s14, 0
    %p79 = por %p77, %p78
    %s80 = ssub.s32 %s16, %s23
    %s81 = ssub.s32 %s15, %s27
    %s82 = sor.u32 %s80, %s81
    %p83 = scmp.eq.s32.totalorder %s82, 0
    %s85 = sadd.s32 %s84, 1
    %s86 = scalar_select %p83, %s84, %s85
    %p89 = pneg %p83
    %p90 = scmp.eq.s32.totalorder %s8, 1
    %p91 = por %p89, %p90
    %p92 = scmp.ne.s32.totalorder %s84, %s87
    %p93 = scmp.eq.s32.totalorder %s8, 0
    %p94 = por %p92, %p93
    %p95 = scmp.ne.s32.totalorder %s84, %s87
    %p96 = scmp.eq.s32.totalorder %s13, 1
    %p97 = por %p95, %p96
    %p98 = scmp.ne.s32.totalorder %s87, %s88
    %p99 = scmp.eq.s32.totalorder %s13, 0
    %p100 = por %p98, %p99
    %p101 = scmp.ne.s32.totalorder %s87, %s88
    %p102 = scmp.eq.s32.totalorder %s14, 1
    %p103 = por %p101, %p102
    %p105 = scmp.ne.s32.totalorder %s88, %s104
    %p106 = scmp.eq.s32.totalorder %s14, 0
    %p107 = por %p105, %p106
    %p108 = scmp.le.s32.totalorder 1, %s8
    %p109 = scmp.lt.s32.totalorder %s8, 3
    %p110 = pnand %p108, %p109
    %p111 = pneg %p110
    // Predicated region
    $region9: #{gume_forward.9} parent=5 // pred_check
      _
    $region10: #{gume_forward.9} parent=5 // pred_check_branch
      %113 = sbr.rel (%p110) target = $region12
    $region11: #{gume_forward.9} parent=5 // pred_region
      %s114 = ssub.s32 %s8, 1
      // Predicated region
      $region13: #{gume_forward.9} parent=11 // pred_check
        %p115 = pneg %p46
      $region14: #{gume_forward.9} parent=11 // pred_check_branch
        %117 = sbr.rel (%p115) target = $region16
      $region15: #{gume_forward.9} parent=11 // pred_region
        %s118 = smul.u32 16, %s17
        %p119 = scmp.lt.s32.totalorder %s118, 15
        %s120 = scalar_select %p119, %s118, 15
        %s121 = smul.addr %s120, 4
        %s122 = scalar_lea.vmem %s0, %s121
        %s123 = smul.u32 16, %s17
      $region16: #{gume_forward.9} parent=11 // pred_fallthru
        _
    $region12: #{gume_forward.9} parent=5 // pred_fallthru
      _
    %p124 = scmp.lt.s32.totalorder %s8, 2
    // Predicated region
    $region17: #{gume_forward.9} parent=5 // pred_check
      %p125 = pneg %p124
    $region18: #{gume_forward.9} parent=5 // pred_check_branch
      %127 = sbr.rel (%p125) target = $region20
    $region19: #{gume_forward.9} parent=5 // pred_region
      // Predicated region
      $region21: #{gume_forward.9} parent=19 // pred_check
        %p128 = pneg %p66
      $region22: #{gume_forward.9} parent=19 // pred_check_branch
        %130 = sbr.rel (%p128) target = $region24
      $region23: #{gume_forward.9} parent=19 // pred_region
        %p131 = scmp.lt.s32.totalorder %s16, 1
        %s132 = scalar_select %p131, %s16, 1
        %s133 = smul.addr %s132, 16
        %s134 = smul.addr %s133, 8
        %s135 = scalar_lea.vmem %s1, %s134
      $region24: #{gume_forward.9} parent=19 // pred_fallthru
        _
    $region20: #{gume_forward.9} parent=5 // pred_fallthru
      _
    %p136 = scmp.le.s32.totalorder 1, %s8
    %p137 = scmp.lt.s32.totalorder %s8, 3
    %p138 = pnand %p136, %p137
    %p139 = pneg %p138
    // Predicated region
    $region25: #{gume_forward.9} parent=5 // pred_check
      _
    $region26: #{gume_forward.9} parent=5 // pred_check_branch
      %141 = sbr.rel (%p138) target = $region28
    $region27: #{gume_forward.9} parent=5 // pred_region
      %s142 = ssub.s32 %s8, 1
      %s143 = smul.u32 16, %s17
      %p144 = scmp.lt.s32.totalorder %s143, 15
      %s145 = scalar_select %p144, %s143, 15
      %s146 = smul.addr %s145, 4
      %s147 = scalar_lea.vmem %s0, %s146
      %p148 = pneg %p46
      %p149 = pneg %p43
      %p150 = scmp.lt.s32.totalorder %s18, 1
      %s151 = scalar_select %p150, %s18, 1
      %s152 = smul.addr %s151, 16
      %s153 = smul.addr %s152, 8
      %s154 = scalar_lea.vmem %s1, %s153
      %p155 = pneg %p72
      %p156 = pneg %p69
      %p157 = pneg %p100
      %p158 = pneg %p97
      %s159 = smul.u32 16, %s17
      %p160 = scmp.lt.s32.totalorder %s18, 1
      %s161 = scalar_select %p160, %s18, 1
      %p162 = scmp.lt.s32.totalorder %s159, 15
      %s163 = scalar_select %p162, %s159, 15
      %s164 = smul.addr %s161, 16
      %s165 = sadd.s32 %s163, %s164
      %s166 = smul.addr %s165, 8
      %s167 = scalar_lea.vmem %s2, %s166
      %s168 = smul.u32 16, %s17
      %p169 = scmp.lt.s32.totalorder %s168, 15
      %s170 = scalar_select %p169, %s168, 15
      %s171 = smul.addr %s170, 4
      %s172 = scalar_lea.vmem %s0, %s171
      %s173 = smul.u32 16, %s17
      %p174 = scmp.lt.s32.totalorder %s18, 1
      %s175 = scalar_select %p174, %s18, 1
      %s176 = smul.addr %s175, 16
      %s177 = smul.addr %s176, 8
      %s178 = scalar_lea.vmem %s1, %s177
      %s179 = smul.u32 16, %s17
      %p180 = scmp.lt.s32.totalorder %s18, 1
      %s181 = scalar_select %p180, %s18, 1
      %p182 = scmp.lt.s32.totalorder %s179, 15
      %s183 = scalar_select %p182, %s179, 15
      %s184 = smul.addr %s181, 16
      %s185 = sadd.s32 %s183, %s184
      %s186 = smul.addr %s185, 8
      %s187 = scalar_lea.vmem %s2, %s186
      %s188 = smul.u32 16, %s17
      %v190 = vld [vmem:[%s172] sm:$0xf]
      %v191 = vld [vmem:[%s172 + $0x4] sm:$0xf]
      %v192 = vld [vmem:[%s172 + $0x8] sm:$0xf]
      %v193 = vld [vmem:[%s172 + $0xc] sm:$0xf]
      %v194 = vld [vmem:[%s172 + $0x10] sm:$0xf]
      %v195 = vld [vmem:[%s172 + $0x14] sm:$0xf]
      %v196 = vld [vmem:[%s172 + $0x18] sm:$0xf]
      %v197 = vld [vmem:[%s172 + $0x1c] sm:$0xf]
      %v198 = vld [vmem:[%s172 + $0x20] sm:$0xf]
      %v199 = vld [vmem:[%s172 + $0x24] sm:$0xf]
      %v200 = vld [vmem:[%s172 + $0x28] sm:$0xf]
      %v201 = vld [vmem:[%s172 + $0x2c] sm:$0xf]
      %v202 = vld [vmem:[%s172 + $0x30] sm:$0xf]
      %v203 = vld [vmem:[%s172 + $0x34] sm:$0xf]
      %v204 = vld [vmem:[%s172 + $0x38] sm:$0xf]
      %v205 = vld [vmem:[%s172 + $0x3c] sm:$0xf]
      %v206 = vld [vmem:[%s178] sm:$0xff]
      %v207 = vld [vmem:[%s178 + $0x8] sm:$0xff]
      %v208 = vld [vmem:[%s178 + $0x10] sm:$0xff]
      %v209 = vld [vmem:[%s178 + $0x18] sm:$0xff]
      %v210 = vld [vmem:[%s178 + $0x20] sm:$0xff]
      %v211 = vld [vmem:[%s178 + $0x28] sm:$0xff]
      %v212 = vld [vmem:[%s178 + $0x30] sm:$0xff]
      %v213 = vld [vmem:[%s178 + $0x38] sm:$0xff]
      %v214 = vld [vmem:[%s178 + $0x40] sm:$0xff]
      %v215 = vld [vmem:[%s178 + $0x48] sm:$0xff]
      %v216 = vld [vmem:[%s178 + $0x50] sm:$0xff]
      %v217 = vld [vmem:[%s178 + $0x58] sm:$0xff]
      %v218 = vld [vmem:[%s178 + $0x60] sm:$0xff]
      %v219 = vld [vmem:[%s178 + $0x68] sm:$0xff]
      %v220 = vld [vmem:[%s178 + $0x70] sm:$0xff]
      %v221 = vld [vmem:[%s178 + $0x78] sm:$0xff]
      %v222 = vpack.c.bf16 %v207, %v206
      %v223 = vpack.c.bf16 %v209, %v208
      %v224 = vpack.c.bf16 %v211, %v210
      %v225 = vpack.c.bf16 %v213, %v212
      %v226 = vpack.c.bf16 %v215, %v214
      %v227 = vpack.c.bf16 %v217, %v216
      %v228 = vpack.c.bf16 %v219, %v218
      %v229 = vpack.c.bf16 %v221, %v220
      %v246 = vunpack.c.l.b16 %v190
      %v247 = vunpack.c.l.b16 %v191
      %v248 = vunpack.c.l.b16 %v192
      %v249 = vunpack.c.l.b16 %v193
      %v250 = vunpack.c.l.b16 %v194
      %v251 = vunpack.c.l.b16 %v195
      %v252 = vunpack.c.l.b16 %v196
      %v253 = vunpack.c.l.b16 %v197
      %v254 = vunpack.c.l.b16 %v198
      %v255 = vunpack.c.l.b16 %v199
      %v256 = vunpack.c.l.b16 %v200
      %v257 = vunpack.c.l.b16 %v201
      %v258 = vunpack.c.l.b16 %v202
      %v259 = vunpack.c.l.b16 %v203
      %v260 = vunpack.c.l.b16 %v204
      %v261 = vunpack.c.l.b16 %v205
      %v262 = vpack.c.b16 %v247, %v246
      %v263 = vpack.c.b16 %v249, %v248
      %v264 = vpack.c.b16 %v251, %v250
      %v265 = vpack.c.b16 %v253, %v252
      %v266 = vpack.c.b16 %v255, %v254
      %v267 = vpack.c.b16 %v257, %v256
      %v268 = vpack.c.b16 %v259, %v258
      %v269 = vpack.c.b16 %v261, %v260
      %278 = vmatprep.subr.bf16.mxu0 0
      %279 = vmatpush1.bf16.msra.mxu0 %v222
      %280 = vmatprep.subr.bf16.mxu0 0
      %281 = vmatpush1.bf16.msra.mxu0 %v223
      %282 = vmatprep.subr.bf16.mxu0 0
      %283 = vmatpush1.bf16.msra.mxu0 %v224
      %284 = vmatprep.subr.bf16.mxu0 0
      %285 = vmatpush1.bf16.msra.mxu0 %v225
      %286 = vmatprep.subr.bf16.mxu0 0
      %287 = vmatpush1.bf16.msra.mxu0 %v226
      %288 = vmatprep.subr.bf16.mxu0 0
      %289 = vmatpush1.bf16.msra.mxu0 %v227
      %290 = vmatprep.subr.bf16.mxu0 0
      %291 = vmatpush1.bf16.msra.mxu0 %v228
      %292 = vmatprep.subr.bf16.mxu0 0
      %293 = vmatpush1.bf16.msra.mxu0 %v229
      %294 = vmatprep.subr.bf16.mxu0 0
      %295 = vmatpush1.bf16.msra.mxu0 0
      %296 = vmatprep.subr.bf16.mxu0 0
      %297 = vmatpush1.bf16.msra.mxu0 0
      %298 = vmatprep.subr.bf16.mxu0 0
      %299 = vmatpush1.bf16.msra.mxu0 0
      %300 = vmatprep.subr.bf16.mxu0 0
      %301 = vmatpush1.bf16.msra.mxu0 0
      %302 = vmatprep.subr.bf16.mxu0 0
      %303 = vmatpush1.bf16.msra.mxu0 0
      %304 = vmatprep.subr.bf16.mxu0 0
      %305 = vmatpush1.bf16.msra.mxu0 0
      %306 = vmatprep.subr.bf16.mxu0 0
      %307 = vmatpush1.bf16.msra.mxu0 0
      %308 = vmatprep.subr.bf16.mxu0 0
      %309 = vmatpush1.bf16.msra.mxu0 0
      %310 = vmatprep.mubr.bf16.mxu0 0
      %311 = vmatmul.mubr.bf16.gmra.mrb[0].mxu0 %v262
      %v312 = vpop.f32.mrb[0].mxu0
      %v313 = vadd.f32 0.0, %v312
      %v314 = vpop.f32.mrb[0].mxu0
      %v315 = vpop.f32.mrb[0].mxu0
      %v316 = vadd.f32 0.0, %v315
      %v317 = vpop.f32.mrb[0].mxu0
      %318 = vmatprep.mubr.bf16.mxu0 0
      %319 = vmatmul.mubr.bf16.gmra.mrb[0].mxu0 %v263
      %v320 = vpop.f32.mrb[0].mxu0
      %v321 = vadd.f32 0.0, %v320
      %v322 = vpop.f32.mrb[0].mxu0
      %v323 = vpop.f32.mrb[0].mxu0
      %v324 = vadd.f32 0.0, %v323
      %v325 = vpop.f32.mrb[0].mxu0
      %326 = vmatprep.mubr.bf16.mxu0 0
      %327 = vmatmul.mubr.bf16.gmra.mrb[0].mxu0 %v264
      %v328 = vpop.f32.mrb[0].mxu0
      %v329 = vadd.f32 0.0, %v328
      %v330 = vpop.f32.mrb[0].mxu0
      %v331 = vpop.f32.mrb[0].mxu0
      %v332 = vadd.f32 0.0, %v331
      %v333 = vpop.f32.mrb[0].mxu0
      %334 = vmatprep.mubr.bf16.mxu0 0
      %335 = vmatmul.mubr.bf16.gmra.mrb[0].mxu0 %v265
      %v336 = vpop.f32.mrb[0].mxu0
      %v337 = vadd.f32 0.0, %v336
      %v338 = vpop.f32.mrb[0].mxu0
      %v339 = vpop.f32.mrb[0].mxu0
      %v340 = vadd.f32 0.0, %v339
      %v341 = vpop.f32.mrb[0].mxu0
      %342 = vmatprep.mubr.bf16.mxu0 0
      %343 = vmatmul.mubr.bf16.gmra.mrb[0].mxu0 %v266
      %v344 = vpop.f32.mrb[0].mxu0
      %v345 = vadd.f32 0.0, %v344
      %v346 = vpop.f32.mrb[0].mxu0
      %v347 = vpop.f32.mrb[0].mxu0
      %v348 = vadd.f32 0.0, %v347
      %v349 = vpop.f32.mrb[0].mxu0
      %350 = vmatprep.mubr.bf16.mxu0 0
      %351 = vmatmul.mubr.bf16.gmra.mrb[0].mxu0 %v267
      %v352 = vpop.f32.mrb[0].mxu0
      %v353 = vadd.f32 0.0, %v352
      %v354 = vpop.f32.mrb[0].mxu0
      %v355 = vpop.f32.mrb[0].mxu0
      %v356 = vadd.f32 0.0, %v355
      %v357 = vpop.f32.mrb[0].mxu0
      %358 = vmatprep.mubr.bf16.mxu0 0
      %359 = vmatmul.mubr.bf16.gmra.mrb[0].mxu0 %v268
      %v360 = vpop.f32.mrb[0].mxu0
      %v361 = vadd.f32 0.0, %v360
      %v362 = vpop.f32.mrb[0].mxu0
      %v363 = vpop.f32.mrb[0].mxu0
      %v364 = vadd.f32 0.0, %v363
      %v365 = vpop.f32.mrb[0].mxu0
      %366 = vmatprep.mubr.bf16.mxu0 0
      %367 = vmatmul.mubr.bf16.gmra.mrb[0].mxu0 %v269
      %v368 = vpop.f32.mrb[0].mxu0
      %v369 = vadd.f32 0.0, %v368
      %v370 = vpop.f32.mrb[0].mxu0
      %v371 = vpop.f32.mrb[0].mxu0
      %v372 = vadd.f32 0.0, %v371
      %v373 = vpop.f32.mrb[0].mxu0
      %374 = vdwg.mxu0
      %375 = vst [vmem:[%s187] sm:$0xff] %v313
      %376 = vst [vmem:[%s187 + $0x8] sm:$0xff] %v316
      %377 = vst [vmem:[%s187 + $0x10] sm:$0xff] %v321
      %378 = vst [vmem:[%s187 + $0x18] sm:$0xff] %v324
      %379 = vst [vmem:[%s187 + $0x20] sm:$0xff] %v329
      %380 = vst [vmem:[%s187 + $0x28] sm:$0xff] %v332
      %381 = vst [vmem:[%s187 + $0x30] sm:$0xff] %v337
      %382 = vst [vmem:[%s187 + $0x38] sm:$0xff] %v340
      %383 = vst [vmem:[%s187 + $0x40] sm:$0xff] %v345
      %384 = vst [vmem:[%s187 + $0x48] sm:$0xff] %v348
      %385 = vst [vmem:[%s187 + $0x50] sm:$0xff] %v353
      %386 = vst [vmem:[%s187 + $0x58] sm:$0xff] %v356
      %387 = vst [vmem:[%s187 + $0x60] sm:$0xff] %v361
      %388 = vst [vmem:[%s187 + $0x68] sm:$0xff] %v364
      %389 = vst [vmem:[%s187 + $0x70] sm:$0xff] %v369
      %390 = vst [vmem:[%s187 + $0x78] sm:$0xff] %v372
      %s391 = smul.u32 16, %s17
      %p392 = scmp.lt.s32.totalorder %s18, 1
      %s393 = scalar_select %p392, %s18, 1
      %p394 = scmp.lt.s32.totalorder %s391, 15
      %s395 = scalar_select %p394, %s391, 15
      %s396 = smul.addr %s393, 16
      %s397 = sadd.s32 %s395, %s396
      %s398 = smul.addr %s397, 8
      %s399 = scalar_lea.vmem %s2, %s398
      // Predicated region
      $region29: #{gume_forward.9} parent=27 // pred_check
        %p400 = pneg %p97
      $region30: #{gume_forward.9} parent=27 // pred_check_branch
        %402 = sbr.rel (%p400) target = $region32
      $region31: #{gume_forward.9} parent=27 // pred_region
        %s403 = smul.u32 16, %s17
      $region32: #{gume_forward.9} parent=27 // pred_fallthru
        _
    $region28: #{gume_forward.9} parent=5 // pred_fallthru
      _
    %p404 = scmp.le.s32.totalorder 2, %s8
    // Predicated region
    $region33: #{gume_forward.9} parent=5 // pred_check
      %p405 = pneg %p404
    $region34: #{gume_forward.9} parent=5 // pred_check_branch
      %407 = sbr.rel (%p405) target = $region36
    $region35: #{gume_forward.9} parent=5 // pred_region
      %s408 = ssub.s32 %s8, 2
      // Predicated region
      $region37: #{gume_forward.9} parent=35 // pred_check
        %p409 = pneg %p103
      $region38: #{gume_forward.9} parent=35 // pred_check_branch
        %411 = sbr.rel (%p409) target = $region40
      $region39: #{gume_forward.9} parent=35 // pred_region
        %s412 = smul.u32 16, %s19
        %p413 = scmp.lt.s32.totalorder %s20, 1
        %s414 = scalar_select %p413, %s20, 1
        %p415 = scmp.lt.s32.totalorder %s412, 15
        %s416 = scalar_select %p415, %s412, 15
        %s417 = smul.addr %s414, 16
        %s418 = sadd.s32 %s416, %s417
        %s419 = smul.addr %s418, 8
        %s420 = scalar_lea.vmem %s2, %s419
      $region40: #{gume_forward.9} parent=35 // pred_fallthru
        _
    $region36: #{gume_forward.9} parent=5 // pred_fallthru
      _
  $region6: #{gume_forward.9} parent=0 // loop_footer
    %s12 = sadd.s32 1, %s8
  $region7: #{gume_forward.9} parent=0 // loop_footer_branch
    %7 = sbr.rel target = $region3
  $region8: #{gume_forward.9} parent=0 // loop_exit
    _

// kernel: gume_forward.8
$region0: #{gume_forward.8}
  #allocation0 [shape = 'u32[]', space=smem, size = 0x4, offset = 0x4, fixed_abs, tag = 'smem constant byte address 0x4 - core index']
  #allocation1 [shape = 'u32[144,128]{1,0:T(1,128)}', space=vmem, size = 0x12000, scoped, tag = 'internal scratch']
  #allocation2 [shape = 'bf16[256,128]{1,0:T(16,128)(2,1)}', space=vmem, size = 0x10000, scoped, tag = 'scratch operand']
  %s0 = inlined_call_operand.vmem [shape: bf16[2,128,128], index: 0, kind: input, shape index: {}]
  %s1 = inlined_call_operand.vmem [shape: bf16[2,128,128], index: 1, kind: input, shape index: {}]
  %s2 = inlined_call_operand.vmem [shape: f32[2,128,128], index: 2, kind: output, shape index: {}]
  %s3 = sld [smem:[#allocation0]]
  $region49: #{gume_forward.8} parent=0
    _
  %s5 = ssub.s32 1, %s3
  %s6 = scalar_select 0, %s5, %s3
  loop: start=0, step=1, limit=4
  $region2: #{gume_forward.8} parent=0 // loop_pre_header
    _
  $region3: #{gume_forward.8} parent=0 // loop_header
    %s8 = sphi 0, %s12
    %p9 = scmp.ge.s32.totalorder %s8, 4
    %s15 = sphi 0, %s34
    %s16 = sphi 0, %s30
    %s17 = sphi 0, %s26
    %s18 = sphi 0, %s15
    %s19 = sphi 0, %s16
    %s20 = sphi 0, %s17
    %s21 = sphi 0, %s18
    %s22 = sphi 0, %s19
    %s23 = sphi 0, %s20
    %s37 = sphi 0, %s39
    %s40 = sphi 0, %s37
    %s41 = sphi 0, %s40
    %s57 = sphi 0, %s41
    %s65 = sphi 0, %s67
    %s68 = sphi 0, %s65
    %s69 = sphi 0, %s68
    %s85 = sphi 0, %s69
    %s93 = sphi 0, %s95
    %s96 = sphi 0, %s93
    %s97 = sphi 0, %s96
    %s113 = sphi 0, %s97
  $region4: #{gume_forward.8} parent=0 // loop_header_branch
    %11 = sbr.rel (%p9) target = $region8
  $region5: #{gume_forward.8} parent=0 // loop_body
    %s13 = ssub.s32 %s8, 1
    %s14 = ssub.s32 %s8, 2
    %s24 = sadd.s32 1, %s17
    %p25 = scmp.ge.s32.totalorder %s24, 1
    %s26 = scalar_select %p25, 0, %s24
    %s27 = sadd.s32 1, %s16
    %s28 = scalar_select %p25, %s27, %s16
    %p29 = scmp.ge.s32.totalorder %s28, 1
    %s30 = scalar_select %p29, 0, %s28
    %s31 = sadd.s32 1, %s15
    %s32 = scalar_select %p29, %s31, %s15
    %p33 = scmp.ge.s32.totalorder %s32, 2
    %s34 = scalar_select %p33, 0, %s32
    %s35 = ssub.s32 %s15, %s34
    %p36 = scmp.eq.s32.totalorder %s35, 0
    %s38 = sadd.s32 %s37, 1
    %s39 = scalar_select %p36, %s37, %s38
    %p42 = pneg %p36
    %p43 = scmp.eq.s32.totalorder %s8, 1
    %p44 = por %p42, %p43
    %p45 = scmp.ne.s32.totalorder %s37, %s40
    %p46 = scmp.eq.s32.totalorder %s8, 0
    %p47 = por %p45, %p46
    %p48 = scmp.ne.s32.totalorder %s37, %s40
    %p49 = scmp.eq.s32.totalorder %s13, 1
    %p50 = por %p48, %p49
    %p51 = scmp.ne.s32.totalorder %s40, %s41
    %p52 = scmp.eq.s32.totalorder %s13, 0
    %p53 = por %p51, %p52
    %p54 = scmp.ne.s32.totalorder %s40, %s41
    %p55 = scmp.eq.s32.totalorder %s14, 1
    %p56 = por %p54, %p55
    %p58 = scmp.ne.s32.totalorder %s41, %s57
    %p59 = scmp.eq.s32.totalorder %s14, 0
    %p60 = por %p58, %p59
    %s61 = ssub.s32 %s15, %s34
    %s62 = ssub.s32 %s17, %s26
    %s63 = sor.u32 %s61, %s62
    %p64 = scmp.eq.s32.totalorder %s63, 0
    %s66 = sadd.s32 %s65, 1
    %s67 = scalar_select %p64, %s65, %s66
    %p70 = pneg %p64
    %p71 = scmp.eq.s32.totalorder %s8, 1
    %p72 = por %p70, %p71
    %p73 = scmp.ne.s32.totalorder %s65, %s68
    %p74 = scmp.eq.s32.totalorder %s8, 0
    %p75 = por %p73, %p74
    %p76 = scmp.ne.s32.totalorder %s65, %s68
    %p77 = scmp.eq.s32.totalorder %s13, 1
    %p78 = por %p76, %p77
    %p79 = scmp.ne.s32.totalorder %s68, %s69
    %p80 = scmp.eq.s32.totalorder %s13, 0
    %p81 = por %p79, %p80
    %p82 = scmp.ne.s32.totalorder %s68, %s69
    %p83 = scmp.eq.s32.totalorder %s14, 1
    %p84 = por %p82, %p83
    %p86 = scmp.ne.s32.totalorder %s69, %s85
    %p87 = scmp.eq.s32.totalorder %s14, 0
    %p88 = por %p86, %p87
    %s89 = ssub.s32 %s15, %s34
    %s90 = ssub.s32 %s17, %s26
    %s91 = sor.u32 %s89, %s90
    %p92 = scmp.eq.s32.totalorder %s91, 0
    %s94 = sadd.s32 %s93, 1
    %s95 = scalar_select %p92, %s93, %s94
    %p98 = pneg %p92
    %p99 = scmp.eq.s32.totalorder %s8, 1
    %p100 = por %p98, %p99
    %p101 = scmp.ne.s32.totalorder %s93, %s96
    %p102 = scmp.eq.s32.totalorder %s8, 0
    %p103 = por %p101, %p102
    %p104 = scmp.ne.s32.totalorder %s93, %s96
    %p105 = scmp.eq.s32.totalorder %s13, 1
    %p106 = por %p104, %p105
    %p107 = scmp.ne.s32.totalorder %s96, %s97
    %p108 = scmp.eq.s32.totalorder %s13, 0
    %p109 = por %p107, %p108
    %p110 = scmp.ne.s32.totalorder %s96, %s97
    %p111 = scmp.eq.s32.totalorder %s14, 1
    %p112 = por %p110, %p111
    %p114 = scmp.ne.s32.totalorder %s97, %s113
    %p115 = scmp.eq.s32.totalorder %s14, 0
    %p116 = por %p114, %p115
    %p117 = scmp.le.s32.totalorder 1, %s8
    %p118 = scmp.lt.s32.totalorder %s8, 3
    %p119 = pnand %p117, %p118
    %p120 = pneg %p119
    // Predicated region
    $region9: #{gume_forward.8} parent=5 // pred_check
      _
    $region10: #{gume_forward.8} parent=5 // pred_check_branch
      %122 = sbr.rel (%p119) target = $region12
    $region11: #{gume_forward.8} parent=5 // pred_region
      %s123 = ssub.s32 %s8, 1
    $region12: #{gume_forward.8} parent=5 // pred_fallthru
      _
    %p124 = scmp.lt.s32.totalorder %s8, 2
    // Predicated region
    $region13: #{gume_forward.8} parent=5 // pred_check
      %p125 = pneg %p124
    $region14: #{gume_forward.8} parent=5 // pred_check_branch
      %127 = sbr.rel (%p125) target = $region16
    $region15: #{gume_forward.8} parent=5 // pred_region
      // Predicated region
      $region17: #{gume_forward.8} parent=15 // pred_check
        %p128 = pneg %p47
      $region18: #{gume_forward.8} parent=15 // pred_check_branch
        %130 = sbr.rel (%p128) target = $region20
      $region19: #{gume_forward.8} parent=15 // pred_region
        %p131 = scmp.lt.s32.totalorder %s15, 1
        %s132 = scalar_select %p131, %s15, 1
        %s133 = smul.addr %s132, 16
        %s134 = smul.addr %s133, 4
        %s135 = scalar_lea.vmem %s0, %s134
      $region20: #{gume_forward.8} parent=15 // pred_fallthru
        _
      // Predicated region
      $region21: #{gume_forward.8} parent=15 // pred_check
        %p136 = pneg %p75
      $region22: #{gume_forward.8} parent=15 // pred_check_branch
        %138 = sbr.rel (%p136) target = $region24
      $region23: #{gume_forward.8} parent=15 // pred_region
        %s139 = smul.u32 16, %s17
        %p140 = scmp.lt.s32.totalorder %s15, 1
        %s141 = scalar_select %p140, %s15, 1
        %p142 = scmp.lt.s32.totalorder %s139, 15
        %s143 = scalar_select %p142, %s139, 15
        %s144 = smul.addr %s141, 16
        %s145 = sadd.s32 %s143, %s144
        %s146 = smul.addr %s145, 4
        %s147 = scalar_lea.vmem %s1, %s146
        %s148 = smul.u32 16, %s17
      $region24: #{gume_forward.8} parent=15 // pred_fallthru
        _
    $region16: #{gume_forward.8} parent=5 // pred_fallthru
      _
    %p149 = scmp.le.s32.totalorder 1, %s8
    %p150 = scmp.lt.s32.totalorder %s8, 3
    %p151 = pnand %p149, %p150
    %p152 = pneg %p151
    // Predicated region
    $region25: #{gume_forward.8} parent=5 // pred_check
      _
    $region26: #{gume_forward.8} parent=5 // pred_check_branch
      %154 = sbr.rel (%p151) target = $region28
    $region27: #{gume_forward.8} parent=5 // pred_region
      %s155 = ssub.s32 %s8, 1
      %p156 = scmp.lt.s32.totalorder %s18, 1
      %s157 = scalar_select %p156, %s18, 1
      %s158 = smul.addr %s157, 16
      %s159 = smul.addr %s158, 4
      %s160 = scalar_lea.vmem %s0, %s159
      %p161 = pneg %p53
      %p162 = pneg %p50
      %s163 = smul.u32 16, %s20
      %p164 = scmp.lt.s32.totalorder %s18, 1
      %s165 = scalar_select %p164, %s18, 1
      %p166 = scmp.lt.s32.totalorder %s163, 15
      %s167 = scalar_select %p166, %s163, 15
      %s168 = smul.addr %s165, 16
      %s169 = sadd.s32 %s167, %s168
      %s170 = smul.addr %s169, 4
      %s171 = scalar_lea.vmem %s1, %s170
      %p172 = pneg %p81
      %p173 = pneg %p78
      %p174 = pneg %p109
      %p175 = pneg %p106
      %s176 = smul.u32 16, %s20
      %p177 = scmp.lt.s32.totalorder %s18, 1
      %s178 = scalar_select %p177, %s18, 1
      %p179 = scmp.lt.s32.totalorder %s176, 15
      %s180 = scalar_select %p179, %s176, 15
      %s181 = smul.addr %s178, 16
      %s182 = sadd.s32 %s180, %s181
      %s183 = smul.addr %s182, 8
      %s184 = scalar_lea.vmem %s2, %s183
      %p185 = scmp.lt.s32.totalorder %s18, 1
      %s186 = scalar_select %p185, %s18, 1
      %s187 = smul.addr %s186, 16
      %s188 = smul.addr %s187, 4
      %s189 = scalar_lea.vmem %s0, %s188
      %s190 = smul.u32 16, %s20
      %p191 = scmp.lt.s32.totalorder %s18, 1
      %s192 = scalar_select %p191, %s18, 1
      %p193 = scmp.lt.s32.totalorder %s190, 15
      %s194 = scalar_select %p193, %s190, 15
      %s195 = smul.addr %s192, 16
      %s196 = sadd.s32 %s194, %s195
      %s197 = smul.addr %s196, 4
      %s198 = scalar_lea.vmem %s1, %s197
      %s199 = smul.u32 16, %s20
      %s200 = smul.u32 16, %s20
      %p201 = scmp.lt.s32.totalorder %s18, 1
      %s202 = scalar_select %p201, %s18, 1
      %p203 = scmp.lt.s32.totalorder %s200, 15
      %s204 = scalar_select %p203, %s200, 15
      %s205 = smul.addr %s202, 16
      %s206 = sadd.s32 %s204, %s205
      %s207 = smul.addr %s206, 8
      %s208 = scalar_lea.vmem %s2, %s207
      %s209 = smul.u32 16, %s20
      %s211 = smul.u32 %s20, 128
      %p212 = scmp.eq.s32.totalorder %s19, 0
      %p213 = scmp.eq.s32.totalorder %s20, 0
      %p214 = pnand %p212, %p213
      %p215 = pneg %p214
      // Predicated region
      $region29: #{gume_forward.8} parent=27 // pred_check
        _
      $region30: #{gume_forward.8} parent=27 // pred_check_branch
        %217 = sbr.rel (%p214) target = $region32
      $region31: #{gume_forward.8} parent=27 // pred_region
        %v218 = vld [vmem:[%s189] sm:$0xf]
        %v219 = vld [vmem:[%s189 + $0x4] sm:$0xf]
        %v220 = vld [vmem:[%s189 + $0x8] sm:$0xf]
        %v221 = vld [vmem:[%s189 + $0xc] sm:$0xf]
        %v222 = vld [vmem:[%s189 + $0x10] sm:$0xf]
        %v223 = vld [vmem:[%s189 + $0x14] sm:$0xf]
        %v224 = vld [vmem:[%s189 + $0x18] sm:$0xf]
        %v225 = vld [vmem:[%s189 + $0x1c] sm:$0xf]
        %v226 = vld [vmem:[%s189 + $0x20] sm:$0xf]
        %v227 = vld [vmem:[%s189 + $0x24] sm:$0xf]
        %v228 = vld [vmem:[%s189 + $0x28] sm:$0xf]
        %v229 = vld [vmem:[%s189 + $0x2c] sm:$0xf]
        %v230 = vld [vmem:[%s189 + $0x30] sm:$0xf]
        %v231 = vld [vmem:[%s189 + $0x34] sm:$0xf]
        %v232 = vld [vmem:[%s189 + $0x38] sm:$0xf]
        %v233 = vld [vmem:[%s189 + $0x3c] sm:$0xf]
        %v250 = vunpack.c.l.b16 %v218
        %v251 = vunpack.c.l.b16 %v219
        %v252 = vunpack.c.l.b16 %v220
        %v253 = vunpack.c.l.b16 %v221
        %v254 = vunpack.c.l.b16 %v222
        %v255 = vunpack.c.l.b16 %v223
        %v256 = vunpack.c.l.b16 %v224
        %v257 = vunpack.c.l.b16 %v225
        %v258 = vunpack.c.l.b16 %v226
        %v259 = vunpack.c.l.b16 %v227
        %v260 = vunpack.c.l.b16 %v228
        %v261 = vunpack.c.l.b16 %v229
        %v262 = vunpack.c.l.b16 %v230
        %v263 = vunpack.c.l.b16 %v231
        %v264 = vunpack.c.l.b16 %v232
        %v265 = vunpack.c.l.b16 %v233
        %v266 = vpack.c.b16 %v251, %v250
        %v267 = vpack.c.b16 %v253, %v252
        %v268 = vpack.c.b16 %v255, %v254
        %v269 = vpack.c.b16 %v257, %v256
        %v270 = vpack.c.b16 %v259, %v258
        %v271 = vpack.c.b16 %v261, %v260
        %v272 = vpack.c.b16 %v263, %v262
        %v273 = vpack.c.b16 %v265, %v264
        %282 = vst [vmem:[#allocation2] sm:$0xff] %v266
        %283 = vst [vmem:[#allocation2 + $0x8] sm:$0xff] %v267
        %284 = vst [vmem:[#allocation2 + $0x10] sm:$0xff] %v268
        %285 = vst [vmem:[#allocation2 + $0x18] sm:$0xff] %v269
        %286 = vst [vmem:[#allocation2 + $0x20] sm:$0xff] %v270
        %287 = vst [vmem:[#allocation2 + $0x28] sm:$0xff] %v271
        %288 = vst [vmem:[#allocation2 + $0x30] sm:$0xff] %v272
        %289 = vst [vmem:[#allocation2 + $0x38] sm:$0xff] %v273
      $region32: #{gume_forward.8} parent=27 // pred_fallthru
        _
      %p290 = scmp.lt.s32.totalorder %s19, 0
      %s291 = ssub.s32 0, %s19
      %s292 = scalar_select %p290, %s291, %s19
      %s293 = sand.u32 %s292, 1
      %s294 = ssub.s32 0, %s293
      %s295 = scalar_select %p290, %s294, %s293
      %s296 = smul.u32 %s295, 128
      %s297 = ssub.s32 1, %s295
      %s298 = smul.u32 %s297, 128
      %v299 = vld [vmem:[%s198] sm:$0xf]
      %v300 = vld [vmem:[%s198 + $0x4] sm:$0xf]
      %v301 = vld [vmem:[%s198 + $0x8] sm:$0xf]
      %v302 = vld [vmem:[%s198 + $0xc] sm:$0xf]
      %v303 = vld [vmem:[%s198 + $0x10] sm:$0xf]
      %v304 = vld [vmem:[%s198 + $0x14] sm:$0xf]
      %v305 = vld [vmem:[%s198 + $0x18] sm:$0xf]
      %v306 = vld [vmem:[%s198 + $0x1c] sm:$0xf]
      %v307 = vld [vmem:[%s198 + $0x20] sm:$0xf]
      %v308 = vld [vmem:[%s198 + $0x24] sm:$0xf]
      %v309 = vld [vmem:[%s198 + $0x28] sm:$0xf]
      %v310 = vld [vmem:[%s198 + $0x2c] sm:$0xf]
      %v311 = vld [vmem:[%s198 + $0x30] sm:$0xf]
      %v312 = vld [vmem:[%s198 + $0x34] sm:$0xf]
      %v313 = vld [vmem:[%s198 + $0x38] sm:$0xf]
      %v314 = vld [vmem:[%s198 + $0x3c] sm:$0xf]
      %s315 = sshra.s32 %s296, 4
      %s316 = sand.u32 %s296, 15
      %s317 = smul.addr %s315, 8
      %s318 = scalar_lea.vmem [#allocation2], %s317
      %v319 = vld [vmem:[%s318] sm:$0xff]
      %v320 = vld [vmem:[%s318 + $0x8] sm:$0xff]
      %v321 = vld [vmem:[%s318 + $0x10] sm:$0xff]
      %v322 = vld [vmem:[%s318 + $0x18] sm:$0xff]
      %v323 = vld [vmem:[%s318 + $0x20] sm:$0xff]
      %v324 = vld [vmem:[%s318 + $0x28] sm:$0xff]
      %v325 = vld [vmem:[%s318 + $0x30] sm:$0xff]
      %v326 = vld [vmem:[%s318 + $0x38] sm:$0xff]
      %v343 = vunpack.c.l.b16 %v299
      %v344 = vunpack.c.l.b16 %v300
      %v345 = vunpack.c.l.b16 %v301
      %v346 = vunpack.c.l.b16 %v302
      %v347 = vunpack.c.l.b16 %v303
      %v348 = vunpack.c.l.b16 %v304
      %v349 = vunpack.c.l.b16 %v305
      %v350 = vunpack.c.l.b16 %v306
      %v351 = vunpack.c.l.b16 %v307
      %v352 = vunpack.c.l.b16 %v308
      %v353 = vunpack.c.l.b16 %v309
      %v354 = vunpack.c.l.b16 %v310
      %v355 = vunpack.c.l.b16 %v311
      %v356 = vunpack.c.l.b16 %v312
      %v357 = vunpack.c.l.b16 %v313
      %v358 = vunpack.c.l.b16 %v314
      %v359 = vpack.c.b16 %v344, %v343
      %v360 = vpack.c.b16 %v346, %v345
      %v361 = vpack.c.b16 %v348, %v347
      %v362 = vpack.c.b16 %v350, %v349
      %v363 = vpack.c.b16 %v352, %v351
      %v364 = vpack.c.b16 %v354, %v353
      %v365 = vpack.c.b16 %v356, %v355
      %v366 = vpack.c.b16 %v358, %v357
      %375 = vmatprep.subr.bf16.mxu0 0
      %376 = vmatpush1.bf16.msra.mxu0 %v319
      %377 = vmatprep.subr.bf16.mxu0 0
      %378 = vmatpush1.bf16.msra.mxu0 %v320
      %379 = vmatprep.subr.bf16.mxu0 0
      %380 = vmatpush1.bf16.msra.mxu0 %v321
      %381 = vmatprep.subr.bf16.mxu0 0
      %382 = vmatpush1.bf16.msra.mxu0 %v322
      %383 = vmatprep.subr.bf16.mxu0 0
      %384 = vmatpush1.bf16.msra.mxu0 %v323
      %385 = vmatprep.subr.bf16.mxu0 0
      %386 = vmatpush1.bf16.msra.mxu0 %v324
      %387 = vmatprep.subr.bf16.mxu0 0
      %388 = vmatpush1.bf16.msra.mxu0 %v325
      %389 = vmatprep.subr.bf16.mxu0 0
      %390 = vmatpush1.bf16.msra.mxu0 %v326
      %391 = vmatprep.subr.bf16.mxu0 0
      %392 = vmatpush1.bf16.msra.mxu0 0
      %393 = vmatprep.subr.bf16.mxu0 0
      %394 = vmatpush1.bf16.msra.mxu0 0
      %395 = vmatprep.subr.bf16.mxu0 0
      %396 = vmatpush1.bf16.msra.mxu0 0
      %397 = vmatprep.subr.bf16.mxu0 0
      %398 = vmatpush1.bf16.msra.mxu0 0
      %399 = vmatprep.subr.bf16.mxu0 0
      %400 = vmatpush1.bf16.msra.mxu0 0
      %401 = vmatprep.subr.bf16.mxu0 0
      %402 = vmatpush1.bf16.msra.mxu0 0
      %403 = vmatprep.subr.bf16.mxu0 0
      %404 = vmatpush1.bf16.msra.mxu0 0
      %405 = vmatprep.subr.bf16.mxu0 0
      %406 = vmatpush1.bf16.msra.mxu0 0
      %407 = vmatprep.mubr.bf16.mxu0 0
      %408 = vmatmul.mubr.bf16.gmra.mrb[0].mxu0 %v359
      %v409 = vpop.f32.mrb[0].mxu0
      %v410 = vadd.f32 0.0, %v409
      %v411 = vpop.f32.mrb[0].mxu0
      %v412 = vpop.f32.mrb[0].mxu0
      %v413 = vadd.f32 0.0, %v412
      %v414 = vpop.f32.mrb[0].mxu0
      %415 = vmatprep.mubr.bf16.mxu0 0
      %416 = vmatmul.mubr.bf16.gmra.mrb[0].mxu0 %v360
      %v417 = vpop.f32.mrb[0].mxu0
      %v418 = vadd.f32 0.0, %v417
      %v419 = vpop.f32.mrb[0].mxu0
      %v420 = vpop.f32.mrb[0].mxu0
      %v421 = vadd.f32 0.0, %v420
      %v422 = vpop.f32.mrb[0].mxu0
      %423 = vmatprep.mubr.bf16.mxu0 0
      %424 = vmatmul.mubr.bf16.gmra.mrb[0].mxu0 %v361
      %v425 = vpop.f32.mrb[0].mxu0
      %v426 = vadd.f32 0.0, %v425
      %v427 = vpop.f32.mrb[0].mxu0
      %v428 = vpop.f32.mrb[0].mxu0
      %v429 = vadd.f32 0.0, %v428
      %v430 = vpop.f32.mrb[0].mxu0
      %431 = vmatprep.mubr.bf16.mxu0 0
      %432 = vmatmul.mubr.bf16.gmra.mrb[0].mxu0 %v362
      %v433 = vpop.f32.mrb[0].mxu0
      %v434 = vadd.f32 0.0, %v433
      %v435 = vpop.f32.mrb[0].mxu0
      %v436 = vpop.f32.mrb[0].mxu0
      %v437 = vadd.f32 0.0, %v436
      %v438 = vpop.f32.mrb[0].mxu0
      %439 = vmatprep.mubr.bf16.mxu0 0
      %440 = vmatmul.mubr.bf16.gmra.mrb[0].mxu0 %v363
      %v441 = vpop.f32.mrb[0].mxu0
      %v442 = vadd.f32 0.0, %v441
      %v443 = vpop.f32.mrb[0].mxu0
      %v444 = vpop.f32.mrb[0].mxu0
      %v445 = vadd.f32 0.0, %v444
      %v446 = vpop.f32.mrb[0].mxu0
      %447 = vmatprep.mubr.bf16.mxu0 0
      %448 = vmatmul.mubr.bf16.gmra.mrb[0].mxu0 %v364
      %v449 = vpop.f32.mrb[0].mxu0
      %v450 = vadd.f32 0.0, %v449
      %v451 = vpop.f32.mrb[0].mxu0
      %v452 = vpop.f32.mrb[0].mxu0
      %v453 = vadd.f32 0.0, %v452
      %v454 = vpop.f32.mrb[0].mxu0
      %455 = vmatprep.mubr.bf16.mxu0 0
      %456 = vmatmul.mubr.bf16.gmra.mrb[0].mxu0 %v365
      %v457 = vpop.f32.mrb[0].mxu0
      %v458 = vadd.f32 0.0, %v457
      %v459 = vpop.f32.mrb[0].mxu0
      %v460 = vpop.f32.mrb[0].mxu0
      %v461 = vadd.f32 0.0, %v460
      %v462 = vpop.f32.mrb[0].mxu0
      %463 = vmatprep.mubr.bf16.mxu0 0
      %464 = vmatmul.mubr.bf16.gmra.mrb[0].mxu0 %v366
      %v465 = vpop.f32.mrb[0].mxu0
      %v466 = vadd.f32 0.0, %v465
      %v467 = vpop.f32.mrb[0].mxu0
      %v468 = vpop.f32.mrb[0].mxu0
      %v469 = vadd.f32 0.0, %v468
      %v470 = vpop.f32.mrb[0].mxu0
      %471 = vdwg.mxu0
      %v472 = vpack.c.bf16 %v413, %v410
      %v473 = vpack.c.bf16 %v421, %v418
      %v474 = vpack.c.bf16 %v429, %v426
      %v475 = vpack.c.bf16 %v437, %v434
      %v476 = vpack.c.bf16 %v445, %v442
      %v477 = vpack.c.bf16 %v453, %v450
      %v478 = vpack.c.bf16 %v461, %v458
      %v479 = vpack.c.bf16 %v469, %v466
      %s480 = sadd.s32 %s298, %s211
      %s481 = sshra.s32 %s480, 4
      %s482 = sand.u32 %s480, 15
      %s483 = smul.addr %s481, 8
      %s484 = scalar_lea.vmem [#allocation2], %s483
      %485 = vst [vmem:[%s484] sm:$0xff] %v472
      %486 = vst [vmem:[%s484 + $0x8] sm:$0xff] %v473
      %487 = vst [vmem:[%s484 + $0x10] sm:$0xff] %v474
      %488 = vst [vmem:[%s484 + $0x18] sm:$0xff] %v475
      %489 = vst [vmem:[%s484 + $0x20] sm:$0xff] %v476
      %490 = vst [vmem:[%s484 + $0x28] sm:$0xff] %v477
      %491 = vst [vmem:[%s484 + $0x30] sm:$0xff] %v478
      %492 = vst [vmem:[%s484 + $0x38] sm:$0xff] %v479
      // Predicated region
      $region33: #{gume_forward.8} parent=27 // pred_check
        %p493 = pneg %p212
      $region34: #{gume_forward.8} parent=27 // pred_check_branch
        %495 = sbr.rel (%p493) target = $region36
      $region35: #{gume_forward.8} parent=27 // pred_region
        %496 = vst [vmem:[%s208] sm:$0xff] %v410
        %497 = vst [vmem:[%s208 + $0x8] sm:$0xff] %v413
        %498 = vst [vmem:[%s208 + $0x10] sm:$0xff] %v418
        %499 = vst [vmem:[%s208 + $0x18] sm:$0xff] %v421
        %500 = vst [vmem:[%s208 + $0x20] sm:$0xff] %v426
        %501 = vst [vmem:[%s208 + $0x28] sm:$0xff] %v429
        %502 = vst [vmem:[%s208 + $0x30] sm:$0xff] %v434
        %503 = vst [vmem:[%s208 + $0x38] sm:$0xff] %v437
        %504 = vst [vmem:[%s208 + $0x40] sm:$0xff] %v442
        %505 = vst [vmem:[%s208 + $0x48] sm:$0xff] %v445
        %506 = vst [vmem:[%s208 + $0x50] sm:$0xff] %v450
        %507 = vst [vmem:[%s208 + $0x58] sm:$0xff] %v453
        %508 = vst [vmem:[%s208 + $0x60] sm:$0xff] %v458
        %509 = vst [vmem:[%s208 + $0x68] sm:$0xff] %v461
        %510 = vst [vmem:[%s208 + $0x70] sm:$0xff] %v466
        %511 = vst [vmem:[%s208 + $0x78] sm:$0xff] %v469
      $region36: #{gume_forward.8} parent=27 // pred_fallthru
        _
      %s512 = smul.u32 16, %s20
      %p513 = scmp.lt.s32.totalorder %s18, 1
      %s514 = scalar_select %p513, %s18, 1
      %p515 = scmp.lt.s32.totalorder %s512, 15
      %s516 = scalar_select %p515, %s512, 15
      %s517 = smul.addr %s514, 16
      %s518 = sadd.s32 %s516, %s517
      %s519 = smul.addr %s518, 8
      %s520 = scalar_lea.vmem %s2, %s519
      // Predicated region
      $region37: #{gume_forward.8} parent=27 // pred_check
        %p521 = pneg %p106
      $region38: #{gume_forward.8} parent=27 // pred_check_branch
        %523 = sbr.rel (%p521) target = $region40
      $region39: #{gume_forward.8} parent=27 // pred_region
        %s524 = smul.u32 16, %s20
      $region40: #{gume_forward.8} parent=27 // pred_fallthru
        _
    $region28: #{gume_forward.8} parent=5 // pred_fallthru
      _
    %p525 = scmp.le.s32.totalorder 2, %s8
    // Predicated region
    $region41: #{gume_forward.8} parent=5 // pred_check
      %p526 = pneg %p525
    $region42: #{gume_forward.8} parent=5 // pred_check_branch
      %528 = sbr.rel (%p526) target = $region44
    $region43: #{gume_forward.8} parent=5 // pred_region
      %s529 = ssub.s32 %s8, 2
      // Predicated region
      $region45: #{gume_forward.8} parent=43 // pred_check
        %p530 = pneg %p112
      $region46: #{gume_forward.8} parent=43 // pred_check_branch
        %532 = sbr.rel (%p530) target = $region48
      $region47: #{gume_forward.8} parent=43 // pred_region
        %s533 = smul.u32 16, %s23
        %p534 = scmp.lt.s32.totalorder %s21, 1
        %s535 = scalar_select %p534, %s21, 1
        %p536 = scmp.lt.s32.totalorder %s533, 15
        %s537 = scalar_select %p536, %s533, 15
        %s538 = smul.addr %s535, 16
        %s539 = sadd.s32 %s537, %s538
        %s540 = smul.addr %s539, 8
        %s541 = scalar_lea.vmem %s2, %s540
      $region48: #{gume_forward.8} parent=43 // pred_fallthru
        _
    $region44: #{gume_forward.8} parent=5 // pred_fallthru
      _
  $region6: #{gume_forward.8} parent=0 // loop_footer
    %s12 = sadd.s32 1, %s8
  $region7: #{gume_forward.8} parent=0 // loop_footer_branch
    %7 = sbr.rel target = $region3
  $region8: #{gume_forward.8} parent=0 // loop_exit
    _

// kernel: gume_forward.6
$region0: #{gume_forward.6}
  #allocation0 [shape = 'u32[]', space=smem, size = 0x4, offset = 0x4, fixed_abs, tag = 'smem constant byte address 0x4 - core index']
  #allocation1 [shape = 'u32[144,128]{1,0:T(1,128)}', space=vmem, size = 0x12000, scoped, tag = 'internal scratch']
  %s0 = inlined_call_operand.hbm [shape: bf16[128,128], index: 0, kind: input, shape index: {}]
  %s1 = inlined_call_operand.hbm [shape: bf16[128,128], index: 1, kind: input, shape index: {}]
  %s2 = inlined_call_operand.hbm [shape: f32[128,128], index: 2, kind: input, shape index: {}]
  %s3 = inlined_call_operand.hbm [shape: bf16[128,128], index: 3, kind: input, shape index: {}]
  %s4 = inlined_call_operand.hbm [shape: f32[1,128], index: 4, kind: input, shape index: {}]
  %s5 = inlined_call_operand.hbm [shape: bf16[128,128], index: 5, kind: input, shape index: {}]
  %s6 = inlined_call_operand.vmem [shape: f32[1,128], index: 6, kind: input, shape index: {}]
  %s7 = inlined_call_operand.hbm [shape: bf16[128,128], index: 7, kind: input, shape index: {}]
  %s8 = inlined_call_operand.vmem [shape: f32[1,128], index: 8, kind: input, shape index: {}]
  %s9 = inlined_call_operand.hbm [shape: bf16[128,128], index: 9, kind: input, shape index: {}]
  %s10 = inlined_call_operand.vmem [shape: f32[1,128], index: 10, kind: input, shape index: {}]
  %s11 = inlined_call_operand.vmem [shape: bf16[2,128,128], index: 11, kind: output, shape index: {}]
  %s12 = sld [smem:[#allocation0]]
  $region86: #{gume_forward.6} parent=0
    _
  %s14 = ssub.s32 1, %s12
  %s15 = scalar_select 0, %s14, %s12
  $region1: #{gume_forward.6} parent=0
    #allocation2 [shape = 'u8[32768]{0}', space=vmem, size = 0x8000, scoped, tag = 'input window, operand 0, single buffered']
    #allocation3 [shape = 's32[1]{0}', space=sflag, size = 0x4, scoped, tag = 'scoped memory for gume_forward.6']
    #allocation4 [shape = 'u8[32768]{0}', space=vmem, size = 0x8000, scoped, tag = 'input window, operand 1, single buffered']
    #allocation5 [shape = 's32[1]{0}', space=sflag, size = 0x4, scoped, tag = 'scoped memory for gume_forward.6']
    #allocation6 [shape = 'u8[65536]{0}', space=vmem, size = 0x10000, scoped, tag = 'input window, operand 2, single buffered']
    #allocation7 [shape = 'u8[32768]{0}', space=vmem, size = 0x8000, scoped, tag = 'input window, operand 3, single buffered']
    #allocation8 [shape = 's32[1]{0}', space=sflag, size = 0x4, scoped, tag = 'scoped memory for gume_forward.6']
    #allocation9 [shape = 'u8[512]{0}', space=vmem, size = 0x400, scoped, tag = 'input window, operand 4, single buffered']
    #allocation10 [shape = 'u8[32768]{0}', space=vmem, size = 0x8000, scoped, tag = 'input window, operand 5, single buffered']
    #allocation11 [shape = 's32[1]{0}', space=sflag, size = 0x4, scoped, tag = 'scoped memory for gume_forward.6']
    #allocation12 [shape = 'u8[32768]{0}', space=vmem, size = 0x8000, scoped, tag = 'input window, operand 7, single buffered']
    #allocation13 [shape = 'u8[32768]{0}', space=vmem, size = 0x8000, scoped, tag = 'input window, operand 9, single buffered']
    #allocation14 [shape = 's32[1]{0}', space=sflag, size = 0x4, scoped, tag = 'scoped memory for gume_forward.6']
    %16 = vsyncpa [#allocation3], 0
    %17 = vsyncpa [#allocation5], 0
    %18 = vsyncpa [#allocation8], 0
    %19 = vsyncpa [#allocation11], 0
    %20 = vsyncpa [#allocation14], 0
    // Predicated region
    $region2: #{gume_forward.6} parent=1 // pred_check
      _
    $region3: #{gume_forward.6} parent=1 // pred_check_branch
      %22 = sbr.rel (0) target = $region5
    $region4: #{gume_forward.6} parent=1 // pred_region
      %s24 = ssub.s32 1024, 1024
      %25 = vsyncadd [#allocation3], %s24
      %s26 = sshll.u32 [#allocation2], 4
      %s27 = int_to_ptr.vmem [resolvable:$true] %s26
      %32 = dma.hbm_to_vmem [thread:$0]  %s0, 1024, %s27, [#allocation3], 64, 64, 4
    $region5: #{gume_forward.6} parent=1 // pred_fallthru
      _
    // Predicated region
    $region6: #{gume_forward.6} parent=1 // pred_check
      _
    $region7: #{gume_forward.6} parent=1 // pred_check_branch
      %34 = sbr.rel (0) target = $region9
    $region8: #{gume_forward.6} parent=1 // pred_region
      %s36 = ssub.s32 1024, 1024
      %37 = vsyncadd [#allocation5], %s36
      %s38 = sshll.u32 [#allocation4], 4
      %s39 = int_to_ptr.vmem [resolvable:$true] %s38
      %44 = dma.hbm_to_vmem [thread:$0]  %s1, 1024, %s39, [#allocation5], 64, 64, 4
    $region9: #{gume_forward.6} parent=1 // pred_fallthru
      _
    // Predicated region
    $region10: #{gume_forward.6} parent=1 // pred_check
      _
    $region11: #{gume_forward.6} parent=1 // pred_check_branch
      %46 = sbr.rel (0) target = $region13
    $region12: #{gume_forward.6} parent=1 // pred_region
      %s48 = ssub.s32 2048, 2048
      %49 = vsyncadd [#allocation5], %s48
      %s50 = sshll.u32 [#allocation6], 4
      %s51 = int_to_ptr.vmem [resolvable:$true] %s50
      %56 = dma.hbm_to_vmem [thread:$0]  %s2, 2048, %s51, [#allocation5], 128, 128, 8
    $region13: #{gume_forward.6} parent=1 // pred_fallthru
      _
    // Predicated region
    $region14: #{gume_forward.6} parent=1 // pred_check
      _
    $region15: #{gume_forward.6} parent=1 // pred_check_branch
      %58 = sbr.rel (0) target = $region17
    $region16: #{gume_forward.6} parent=1 // pred_region
      %s60 = ssub.s32 1024, 1024
      %61 = vsyncadd [#allocation8], %s60
      %s62 = sshll.u32 [#allocation7], 4
      %s63 = int_to_ptr.vmem [resolvable:$true] %s62
      %68 = dma.hbm_to_vmem [thread:$0]  %s3, 1024, %s63, [#allocation8], 64, 64, 4
    $region17: #{gume_forward.6} parent=1 // pred_fallthru
      _
    // Predicated region
    $region18: #{gume_forward.6} parent=1 // pred_check
      _
    $region19: #{gume_forward.6} parent=1 // pred_check_branch
      %70 = sbr.rel (0) target = $region21
    $region20: #{gume_forward.6} parent=1 // pred_region
      %s72 = ssub.s32 16, 16
      %73 = vsyncadd [#allocation8], %s72
      %s75 = sshll.u32 [#allocation9], 4
      %s76 = int_to_ptr.vmem [resolvable:$true] %s75
      %78 = dma.hbm_to_vmem [thread:$0]  %s4, 16, %s76, [#allocation8]
    $region21: #{gume_forward.6} parent=1 // pred_fallthru
      _
    // Predicated region
    $region22: #{gume_forward.6} parent=1 // pred_check
      _
    $region23: #{gume_forward.6} parent=1 // pred_check_branch
      %80 = sbr.rel (0) target = $region25
    $region24: #{gume_forward.6} parent=1 // pred_region
      %s82 = ssub.s32 1024, 1024
      %83 = vsyncadd [#allocation11], %s82
      %s84 = sshll.u32 [#allocation10], 4
      %s85 = int_to_ptr.vmem [resolvable:$true] %s84
      %90 = dma.hbm_to_vmem [thread:$0]  %s5, 1024, %s85, [#allocation11], 64, 64, 4
    $region25: #{gume_forward.6} parent=1 // pred_fallthru
      _
    // Predicated region
    $region26: #{gume_forward.6} parent=1 // pred_check
      _
    $region27: #{gume_forward.6} parent=1 // pred_check_branch
      %92 = sbr.rel (0) target = $region29
    $region28: #{gume_forward.6} parent=1 // pred_region
      _
    $region29: #{gume_forward.6} parent=1 // pred_fallthru
      _
    // Predicated region
    $region30: #{gume_forward.6} parent=1 // pred_check
      _
    $region31: #{gume_forward.6} parent=1 // pred_check_branch
      %94 = sbr.rel (0) target = $region33
    $region32: #{gume_forward.6} parent=1 // pred_region
      %s96 = ssub.s32 1024, 1024
      %97 = vsyncadd [#allocation11], %s96
      %s98 = sshll.u32 [#allocation12], 4
      %s99 = int_to_ptr.vmem [resolvable:$true] %s98
      %104 = dma.hbm_to_vmem [thread:$0]  %s7, 1024, %s99, [#allocation11], 64, 64, 4
    $region33: #{gume_forward.6} parent=1 // pred_fallthru
      _
    // Predicated region
    $region34: #{gume_forward.6} parent=1 // pred_check
      _
    $region35: #{gume_forward.6} parent=1 // pred_check_branch
      %106 = sbr.rel (0) target = $region37
    $region36: #{gume_forward.6} parent=1 // pred_region
      _
    $region37: #{gume_forward.6} parent=1 // pred_fallthru
      _
    // Predicated region
    $region38: #{gume_forward.6} parent=1 // pred_check
      _
    $region39: #{gume_forward.6} parent=1 // pred_check_branch
      %108 = sbr.rel (0) target = $region41
    $region40: #{gume_forward.6} parent=1 // pred_region
      %s110 = ssub.s32 1024, 1024
      %111 = vsyncadd [#allocation14], %s110
      %s112 = sshll.u32 [#allocation13], 4
      %s113 = int_to_ptr.vmem [resolvable:$true] %s112
      %118 = dma.hbm_to_vmem [thread:$0]  %s9, 1024, %s113, [#allocation14], 64, 64, 4
    $region41: #{gume_forward.6} parent=1 // pred_fallthru
      _
    // Predicated region
    $region42: #{gume_forward.6} parent=1 // pred_check
      _
    $region43: #{gume_forward.6} parent=1 // pred_check_branch
      %120 = sbr.rel (0) target = $region45
    $region44: #{gume_forward.6} parent=1 // pred_region
      _
    $region45: #{gume_forward.6} parent=1 // pred_fallthru
      _
    // Predicated region
    $region46: #{gume_forward.6} parent=1 // pred_check
      _
    $region47: #{gume_forward.6} parent=1 // pred_check_branch
      %122 = sbr.rel (0) target = $region49
    $region48: #{gume_forward.6} parent=1 // pred_region
      %123 = dma.done [#allocation3], 1024
    $region49: #{gume_forward.6} parent=1 // pred_fallthru
      _
    // Predicated region
    $region50: #{gume_forward.6} parent=1 // pred_check
      _
    $region51: #{gume_forward.6} parent=1 // pred_check_branch
      %125 = sbr.rel (0) target = $region53
    $region52: #{gume_forward.6} parent=1 // pred_region
      %126 = dma.done [#allocation5], 1024
    $region53: #{gume_forward.6} parent=1 // pred_fallthru
      _
    // Predicated region
    $region54: #{gume_forward.6} parent=1 // pred_check
      _
    $region55: #{gume_forward.6} parent=1 // pred_check_branch
      %128 = sbr.rel (0) target = $region57
    $region56: #{gume_forward.6} parent=1 // pred_region
      %129 = dma.done [#allocation5], 2048
    $region57: #{gume_forward.6} parent=1 // pred_fallthru
      _
    // Predicated region
    $region58: #{gume_forward.6} parent=1 // pred_check
      _
    $region59: #{gume_forward.6} parent=1 // pred_check_branch
      %131 = sbr.rel (0) target = $region61
    $region60: #{gume_forward.6} parent=1 // pred_region
      %132 = dma.done [#allocation8], 1024
    $region61: #{gume_forward.6} parent=1 // pred_fallthru
      _
    // Predicated region
    $region62: #{gume_forward.6} parent=1 // pred_check
      _
    $region63: #{gume_forward.6} parent=1 // pred_check_branch
      %134 = sbr.rel (0) target = $region65
    $region64: #{gume_forward.6} parent=1 // pred_region
      %135 = dma.done [#allocation8], 16
    $region65: #{gume_forward.6} parent=1 // pred_fallthru
      _
    // Predicated region
    $region66: #{gume_forward.6} parent=1 // pred_check
      _
    $region67: #{gume_forward.6} parent=1 // pred_check_branch
      %137 = sbr.rel (0) target = $region69
    $region68: #{gume_forward.6} parent=1 // pred_region
      %138 = dma.done [#allocation11], 1024
    $region69: #{gume_forward.6} parent=1 // pred_fallthru
      _
    // Predicated region
    $region70: #{gume_forward.6} parent=1 // pred_check
      _
    $region71: #{gume_forward.6} parent=1 // pred_check_branch
      %140 = sbr.rel (0) target = $region73
    $region72: #{gume_forward.6} parent=1 // pred_region
      %141 = dma.done [#allocation11], 1024
    $region73: #{gume_forward.6} parent=1 // pred_fallthru
      _
    // Predicated region
    $region74: #{gume_forward.6} parent=1 // pred_check
      _
    $region75: #{gume_forward.6} parent=1 // pred_check_branch
      %143 = sbr.rel (0) target = $region77
    $region76: #{gume_forward.6} parent=1 // pred_region
      %144 = dma.done [#allocation14], 1024
    $region77: #{gume_forward.6} parent=1 // pred_fallthru
      _
    %v146 = vld [vmem:[#allocation6] sm:$0xff]
    %v147 = vld [vmem:[#allocation6 + $0x8] sm:$0xff]
    %v148 = vld [vmem:[#allocation6 + $0x10] sm:$0xff]
    %v149 = vld [vmem:[#allocation6 + $0x18] sm:$0xff]
    %v150 = vld [vmem:[#allocation6 + $0x20] sm:$0xff]
    %v151 = vld [vmem:[#allocation6 + $0x28] sm:$0xff]
    %v152 = vld [vmem:[#allocation6 + $0x30] sm:$0xff]
    %v153 = vld [vmem:[#allocation6 + $0x38] sm:$0xff]
    %v154 = vld [vmem:[#allocation6 + $0x40] sm:$0xff]
    %v155 = vld [vmem:[#allocation6 + $0x48] sm:$0xff]
    %v156 = vld [vmem:[#allocation6 + $0x50] sm:$0xff]
    %v157 = vld [vmem:[#allocation6 + $0x58] sm:$0xff]
    %v158 = vld [vmem:[#allocation6 + $0x60] sm:$0xff]
    %v159 = vld [vmem:[#allocation6 + $0x68] sm:$0xff]
    %v160 = vld [vmem:[#allocation6 + $0x70] sm:$0xff]
    %v161 = vld [vmem:[#allocation6 + $0x78] sm:$0xff]
    %v162 = vld [vmem:[#allocation2] sm:$0xf]
    %v163 = vld [vmem:[#allocation2 + $0x4] sm:$0xf]
    %v164 = vld [vmem:[#allocation2 + $0x8] sm:$0xf]
    %v165 = vld [vmem:[#allocation2 + $0xc] sm:$0xf]
    %v166 = vld [vmem:[#allocation2 + $0x10] sm:$0xf]
    %v167 = vld [vmem:[#allocation2 + $0x14] sm:$0xf]
    %v168 = vld [vmem:[#allocation2 + $0x18] sm:$0xf]
    %v169 = vld [vmem:[#allocation2 + $0x1c] sm:$0xf]
    %v170 = vld [vmem:[#allocation2 + $0x20] sm:$0xf]
    %v171 = vld [vmem:[#allocation2 + $0x24] sm:$0xf]
    %v172 = vld [vmem:[#allocation2 + $0x28] sm:$0xf]
    %v173 = vld [vmem:[#allocation2 + $0x2c] sm:$0xf]
    %v174 = vld [vmem:[#allocation2 + $0x30] sm:$0xf]
    %v175 = vld [vmem:[#allocation2 + $0x34] sm:$0xf]
    %v176 = vld [vmem:[#allocation2 + $0x38] sm:$0xf]
    %v177 = vld [vmem:[#allocation2 + $0x3c] sm:$0xf]
    %v178 = vld [vmem:[#allocation7] sm:$0xf]
    %v179 = vld [vmem:[#allocation7 + $0x4] sm:$0xf]
    %v180 = vld [vmem:[#allocation7 + $0x8] sm:$0xf]
    %v181 = vld [vmem:[#allocation7 + $0xc] sm:$0xf]
    %v182 = vld [vmem:[#allocation7 + $0x10] sm:$0xf]
    %v183 = vld [vmem:[#allocation7 + $0x14] sm:$0xf]
    %v184 = vld [vmem:[#allocation7 + $0x18] sm:$0xf]
    %v185 = vld [vmem:[#allocation7 + $0x1c] sm:$0xf]
    %v186 = vld [vmem:[#allocation7 + $0x20] sm:$0xf]
    %v187 = vld [vmem:[#allocation7 + $0x24] sm:$0xf]
    %v188 = vld [vmem:[#allocation7 + $0x28] sm:$0xf]
    %v189 = vld [vmem:[#allocation7 + $0x2c] sm:$0xf]
    %v190 = vld [vmem:[#allocation7 + $0x30] sm:$0xf]
    %v191 = vld [vmem:[#allocation7 + $0x34] sm:$0xf]
    %v192 = vld [vmem:[#allocation7 + $0x38] sm:$0xf]
    %v193 = vld [vmem:[#allocation7 + $0x3c] sm:$0xf]
    %v194 = vld [vmem:[#allocation9] sm:$0x1]
    %v196 = vlaneseq
    %v197 = vshrl.u32 %v196, 7
    %v198 = vsub.s32 0, %v197
    %v199 = vrot.slane %v194, %v198
    %v217 = vunpack.c.l.b16 %v162
    %v218 = vunpack.c.l.b16 %v163
    %v219 = vunpack.c.l.b16 %v164
    %v220 = vunpack.c.l.b16 %v165
    %v221 = vunpack.c.l.b16 %v166
    %v222 = vunpack.c.l.b16 %v167
    %v223 = vunpack.c.l.b16 %v168
    %v224 = vunpack.c.l.b16 %v169
    %v225 = vunpack.c.l.b16 %v170
    %v226 = vunpack.c.l.b16 %v171
    %v227 = vunpack.c.l.b16 %v172
    %v228 = vunpack.c.l.b16 %v173
    %v229 = vunpack.c.l.b16 %v174
    %v230 = vunpack.c.l.b16 %v175
    %v231 = vunpack.c.l.b16 %v176
    %v232 = vunpack.c.l.b16 %v177
    %v233 = vpack.c.b16 %v218, %v217
    %v234 = vpack.c.b16 %v220, %v219
    %v235 = vpack.c.b16 %v222, %v221
    %v236 = vpack.c.b16 %v224, %v223
    %v237 = vpack.c.b16 %v226, %v225
    %v238 = vpack.c.b16 %v228, %v227
    %v239 = vpack.c.b16 %v230, %v229
    %v240 = vpack.c.b16 %v232, %v231
    %v265 = vunpack.c.l.b16 %v178
    %v266 = vunpack.c.l.b16 %v179
    %v267 = vunpack.c.l.b16 %v180
    %v268 = vunpack.c.l.b16 %v181
    %v269 = vunpack.c.l.b16 %v182
    %v270 = vunpack.c.l.b16 %v183
    %v271 = vunpack.c.l.b16 %v184
    %v272 = vunpack.c.l.b16 %v185
    %v273 = vunpack.c.l.b16 %v186
    %v274 = vunpack.c.l.b16 %v187
    %v275 = vunpack.c.l.b16 %v188
    %v276 = vunpack.c.l.b16 %v189
    %v277 = vunpack.c.l.b16 %v190
    %v278 = vunpack.c.l.b16 %v191
    %v279 = vunpack.c.l.b16 %v192
    %v280 = vunpack.c.l.b16 %v193
    %v281 = vpack.c.b16 %v266, %v265
    %v282 = vpack.c.b16 %v268, %v267
    %v283 = vpack.c.b16 %v270, %v269
    %v284 = vpack.c.b16 %v272, %v271
    %v285 = vpack.c.b16 %v274, %v273
    %v286 = vpack.c.b16 %v276, %v275
    %v287 = vpack.c.b16 %v278, %v277
    %v288 = vpack.c.b16 %v280, %v279
    %297 = vmatprep.subr.bf16.mxu0 0
    %298 = vmatpush1.bf16.msra.mxu0 %v281
    %299 = vmatprep.subr.bf16.mxu0 0
    %300 = vmatpush1.bf16.msra.mxu0 %v282
    %301 = vmatprep.subr.bf16.mxu0 0
    %302 = vmatpush1.bf16.msra.mxu0 %v283
    %303 = vmatprep.subr.bf16.mxu0 0
    %304 = vmatpush1.bf16.msra.mxu0 %v284
    %305 = vmatprep.subr.bf16.mxu0 0
    %306 = vmatpush1.bf16.msra.mxu0 %v285
    %307 = vmatprep.subr.bf16.mxu0 0
    %308 = vmatpush1.bf16.msra.mxu0 %v286
    %309 = vmatprep.subr.bf16.mxu0 0
    %310 = vmatpush1.bf16.msra.mxu0 %v287
    %311 = vmatprep.subr.bf16.mxu0 0
    %312 = vmatpush1.bf16.msra.mxu0 %v288
    %313 = vmatprep.subr.bf16.mxu0 0
    %314 = vmatpush1.bf16.msra.mxu0 0
    %315 = vmatprep.subr.bf16.mxu0 0
    %316 = vmatpush1.bf16.msra.mxu0 0
    %317 = vmatprep.subr.bf16.mxu0 0
    %318 = vmatpush1.bf16.msra.mxu0 0
    %319 = vmatprep.subr.bf16.mxu0 0
    %320 = vmatpush1.bf16.msra.mxu0 0
    %321 = vmatprep.subr.bf16.mxu0 0
    %322 = vmatpush1.bf16.msra.mxu0 0
    %323 = vmatprep.subr.bf16.mxu0 0
    %324 = vmatpush1.bf16.msra.mxu0 0
    %325 = vmatprep.subr.bf16.mxu0 0
    %326 = vmatpush1.bf16.msra.mxu0 0
    %327 = vmatprep.subr.bf16.mxu0 0
    %328 = vmatpush1.bf16.msra.mxu0 0
    %329 = vmatprep.mubr.bf16.mxu0 0
    %330 = vmatmul.mubr.bf16.gmra.mrb[0].mxu0 %v233
    %v331 = vpop.f32.mrb[0].mxu0
    %v332 = vadd.f32 %v199, %v331
    %v333 = vpop.f32.mrb[0].mxu0
    %v334 = vpop.f32.mrb[0].mxu0
    %v335 = vadd.f32 %v199, %v334
    %v336 = vpop.f32.mrb[0].mxu0
    %337 = vmatprep.mubr.bf16.mxu0 0
    %338 = vmatmul.mubr.bf16.gmra.mrb[0].mxu0 %v234
    %v339 = vpop.f32.mrb[0].mxu0
    %v340 = vadd.f32 %v199, %v339
    %v341 = vpop.f32.mrb[0].mxu0
    %v342 = vpop.f32.mrb[0].mxu0
    %v343 = vadd.f32 %v199, %v342
    %v344 = vpop.f32.mrb[0].mxu0
    %345 = vmatprep.mubr.bf16.mxu0 0
    %346 = vmatmul.mubr.bf16.gmra.mrb[0].mxu0 %v235
    %v347 = vpop.f32.mrb[0].mxu0
    %v348 = vadd.f32 %v199, %v347
    %v349 = vpop.f32.mrb[0].mxu0
    %v350 = vpop.f32.mrb[0].mxu0
    %v351 = vadd.f32 %v199, %v350
    %v352 = vpop.f32.mrb[0].mxu0
    %353 = vmatprep.mubr.bf16.mxu0 0
    %354 = vmatmul.mubr.bf16.gmra.mrb[0].mxu0 %v236
    %v355 = vpop.f32.mrb[0].mxu0
    %v356 = vadd.f32 %v199, %v355
    %v357 = vpop.f32.mrb[0].mxu0
    %v358 = vpop.f32.mrb[0].mxu0
    %v359 = vadd.f32 %v199, %v358
    %v360 = vpop.f32.mrb[0].mxu0
    %361 = vmatprep.mubr.bf16.mxu0 0
    %362 = vmatmul.mubr.bf16.gmra.mrb[0].mxu0 %v237
    %v363 = vpop.f32.mrb[0].mxu0
    %v364 = vadd.f32 %v199, %v363
    %v365 = vpop.f32.mrb[0].mxu0
    %v366 = vpop.f32.mrb[0].mxu0
    %v367 = vadd.f32 %v199, %v366
    %v368 = vpop.f32.mrb[0].mxu0
    %369 = vmatprep.mubr.bf16.mxu0 0
    %370 = vmatmul.mubr.bf16.gmra.mrb[0].mxu0 %v238
    %v371 = vpop.f32.mrb[0].mxu0
    %v372 = vadd.f32 %v199, %v371
    %v373 = vpop.f32.mrb[0].mxu0
    %v374 = vpop.f32.mrb[0].mxu0
    %v375 = vadd.f32 %v199, %v374
    %v376 = vpop.f32.mrb[0].mxu0
    %377 = vmatprep.mubr.bf16.mxu0 0
    %378 = vmatmul.mubr.bf16.gmra.mrb[0].mxu0 %v239
    %v379 = vpop.f32.mrb[0].mxu0
    %v380 = vadd.f32 %v199, %v379
    %v381 = vpop.f32.mrb[0].mxu0
    %v382 = vpop.f32.mrb[0].mxu0
    %v383 = vadd.f32 %v199, %v382
    %v384 = vpop.f32.mrb[0].mxu0
    %385 = vmatprep.mubr.bf16.mxu0 0
    %386 = vmatmul.mubr.bf16.gmra.mrb[0].mxu0 %v240
    %v387 = vpop.f32.mrb[0].mxu0
    %v388 = vadd.f32 %v199, %v387
    %v389 = vpop.f32.mrb[0].mxu0
    %v390 = vpop.f32.mrb[0].mxu0
    %v391 = vadd.f32 %v199, %v390
    %v392 = vpop.f32.mrb[0].mxu0
    %393 = vdwg.mxu0
    %v394 = vpack.c.bf16 %v335, %v332
    %v395 = vpack.c.bf16 %v343, %v340
    %v396 = vpack.c.bf16 %v351, %v348
    %v397 = vpack.c.bf16 %v359, %v356
    %v398 = vpack.c.bf16 %v367, %v364
    %v399 = vpack.c.bf16 %v375, %v372
    %v400 = vpack.c.bf16 %v383, %v380
    %v401 = vpack.c.bf16 %v391, %v388
    %v402 = vld [vmem:[#allocation10] sm:$0xf]
    %v403 = vld [vmem:[#allocation10 + $0x4] sm:$0xf]
    %v404 = vld [vmem:[#allocation10 + $0x8] sm:$0xf]
    %v405 = vld [vmem:[#allocation10 + $0xc] sm:$0xf]
    %v406 = vld [vmem:[#allocation10 + $0x10] sm:$0xf]
    %v407 = vld [vmem:[#allocation10 + $0x14] sm:$0xf]
    %v408 = vld [vmem:[#allocation10 + $0x18] sm:$0xf]
    %v409 = vld [vmem:[#allocation10 + $0x1c] sm:$0xf]
    %v410 = vld [vmem:[#allocation10 + $0x20] sm:$0xf]
    %v411 = vld [vmem:[#allocation10 + $0x24] sm:$0xf]
    %v412 = vld [vmem:[#allocation10 + $0x28] sm:$0xf]
    %v413 = vld [vmem:[#allocation10 + $0x2c] sm:$0xf]
    %v414 = vld [vmem:[#allocation10 + $0x30] sm:$0xf]
    %v415 = vld [vmem:[#allocation10 + $0x34] sm:$0xf]
    %v416 = vld [vmem:[#allocation10 + $0x38] sm:$0xf]
    %v417 = vld [vmem:[#allocation10 + $0x3c] sm:$0xf]
    %v418 = vld [vmem:[%s6] sm:$0x1]
    %v420 = vlaneseq
    %v421 = vshrl.u32 %v420, 7
    %v422 = vsub.s32 0, %v421
    %v423 = vrot.slane %v418, %v422
    %v441 = vunpack.c.l.b16 %v402
    %v442 = vunpack.c.l.b16 %v403
    %v443 = vunpack.c.l.b16 %v404
    %v444 = vunpack.c.l.b16 %v405
    %v445 = vunpack.c.l.b16 %v406
    %v446 = vunpack.c.l.b16 %v407
    %v447 = vunpack.c.l.b16 %v408
    %v448 = vunpack.c.l.b16 %v409
    %v449 = vunpack.c.l.b16 %v410
    %v450 = vunpack.c.l.b16 %v411
    %v451 = vunpack.c.l.b16 %v412
    %v452 = vunpack.c.l.b16 %v413
    %v453 = vunpack.c.l.b16 %v414
    %v454 = vunpack.c.l.b16 %v415
    %v455 = vunpack.c.l.b16 %v416
    %v456 = vunpack.c.l.b16 %v417
    %v457 = vpack.c.b16 %v442, %v441
    %v458 = vpack.c.b16 %v444, %v443
    %v459 = vpack.c.b16 %v446, %v445
    %v460 = vpack.c.b16 %v448, %v447
    %v461 = vpack.c.b16 %v450, %v449
    %v462 = vpack.c.b16 %v452, %v451
    %v463 = vpack.c.b16 %v454, %v453
    %v464 = vpack.c.b16 %v456, %v455
    %473 = vmatprep.subr.bf16.mxu0 0
    %474 = vmatpush1.bf16.msra.mxu0 %v457
    %475 = vmatprep.subr.bf16.mxu0 0
    %476 = vmatpush1.bf16.msra.mxu0 %v458
    %477 = vmatprep.subr.bf16.mxu0 0
    %478 = vmatpush1.bf16.msra.mxu0 %v459
    %479 = vmatprep.subr.bf16.mxu0 0
    %480 = vmatpush1.bf16.msra.mxu0 %v460
    %481 = vmatprep.subr.bf16.mxu0 0
    %482 = vmatpush1.bf16.msra.mxu0 %v461
    %483 = vmatprep.subr.bf16.mxu0 0
    %484 = vmatpush1.bf16.msra.mxu0 %v462
    %485 = vmatprep.subr.bf16.mxu0 0
    %486 = vmatpush1.bf16.msra.mxu0 %v463
    %487 = vmatprep.subr.bf16.mxu0 0
    %488 = vmatpush1.bf16.msra.mxu0 %v464
    %489 = vmatprep.subr.bf16.mxu0 0
    %490 = vmatpush1.bf16.msra.mxu0 0
    %491 = vmatprep.subr.bf16.mxu0 0
    %492 = vmatpush1.bf16.msra.mxu0 0
    %493 = vmatprep.subr.bf16.mxu0 0
    %494 = vmatpush1.bf16.msra.mxu0 0
    %495 = vmatprep.subr.bf16.mxu0 0
    %496 = vmatpush1.bf16.msra.mxu0 0
    %497 = vmatprep.subr.bf16.mxu0 0
    %498 = vmatpush1.bf16.msra.mxu0 0
    %499 = vmatprep.subr.bf16.mxu0 0
    %500 = vmatpush1.bf16.msra.mxu0 0
    %501 = vmatprep.subr.bf16.mxu0 0
    %502 = vmatpush1.bf16.msra.mxu0 0
    %503 = vmatprep.subr.bf16.mxu0 0
    %504 = vmatpush1.bf16.msra.mxu0 0
    %505 = vmatprep.mubr.bf16.mxu0 0
    %506 = vmatmul.mubr.bf16.gmra.mrb[0].mxu0 %v394
    %v507 = vpop.f32.mrb[0].mxu0
    %v508 = vadd.f32 %v423, %v507
    %v509 = vpop.f32.mrb[0].mxu0
    %v510 = vpop.f32.mrb[0].mxu0
    %v511 = vadd.f32 %v423, %v510
    %v512 = vpop.f32.mrb[0].mxu0
    %513 = vmatprep.mubr.bf16.mxu0 0
    %514 = vmatmul.mubr.bf16.gmra.mrb[0].mxu0 %v395
    %v515 = vpop.f32.mrb[0].mxu0
    %v516 = vadd.f32 %v423, %v515
    %v517 = vpop.f32.mrb[0].mxu0
    %v518 = vpop.f32.mrb[0].mxu0
    %v519 = vadd.f32 %v423, %v518
    %v520 = vpop.f32.mrb[0].mxu0
    %521 = vmatprep.mubr.bf16.mxu0 0
    %522 = vmatmul.mubr.bf16.gmra.mrb[0].mxu0 %v396
    %v523 = vpop.f32.mrb[0].mxu0
    %v524 = vadd.f32 %v423, %v523
    %v525 = vpop.f32.mrb[0].mxu0
    %v526 = vpop.f32.mrb[0].mxu0
    %v527 = vadd.f32 %v423, %v526
    %v528 = vpop.f32.mrb[0].mxu0
    %529 = vmatprep.mubr.bf16.mxu0 0
    %530 = vmatmul.mubr.bf16.gmra.mrb[0].mxu0 %v397
    %v531 = vpop.f32.mrb[0].mxu0
    %v532 = vadd.f32 %v423, %v531
    %v533 = vpop.f32.mrb[0].mxu0
    %v534 = vpop.f32.mrb[0].mxu0
    %v535 = vadd.f32 %v423, %v534
    %v536 = vpop.f32.mrb[0].mxu0
    %537 = vmatprep.mubr.bf16.mxu0 0
    %538 = vmatmul.mubr.bf16.gmra.mrb[0].mxu0 %v398
    %v539 = vpop.f32.mrb[0].mxu0
    %v540 = vadd.f32 %v423, %v539
    %v541 = vpop.f32.mrb[0].mxu0
    %v542 = vpop.f32.mrb[0].mxu0
    %v543 = vadd.f32 %v423, %v542
    %v544 = vpop.f32.mrb[0].mxu0
    %545 = vmatprep.mubr.bf16.mxu0 0
    %546 = vmatmul.mubr.bf16.gmra.mrb[0].mxu0 %v399
    %v547 = vpop.f32.mrb[0].mxu0
    %v548 = vadd.f32 %v423, %v547
    %v549 = vpop.f32.mrb[0].mxu0
    %v550 = vpop.f32.mrb[0].mxu0
    %v551 = vadd.f32 %v423, %v550
    %v552 = vpop.f32.mrb[0].mxu0
    %553 = vmatprep.mubr.bf16.mxu0 0
    %554 = vmatmul.mubr.bf16.gmra.mrb[0].mxu0 %v400
    %v555 = vpop.f32.mrb[0].mxu0
    %v556 = vadd.f32 %v423, %v555
    %v557 = vpop.f32.mrb[0].mxu0
    %v558 = vpop.f32.mrb[0].mxu0
    %v559 = vadd.f32 %v423, %v558
    %v560 = vpop.f32.mrb[0].mxu0
    %561 = vmatprep.mubr.bf16.mxu0 0
    %562 = vmatmul.mubr.bf16.gmra.mrb[0].mxu0 %v401
    %v563 = vpop.f32.mrb[0].mxu0
    %v564 = vadd.f32 %v423, %v563
    %v565 = vpop.f32.mrb[0].mxu0
    %v566 = vpop.f32.mrb[0].mxu0
    %v567 = vadd.f32 %v423, %v566
    %v568 = vpop.f32.mrb[0].mxu0
    %569 = vdwg.mxu0
    %v570 = vxor.u32 %v508, 2147483648
    %v571 = vxor.u32 %v511, 2147483648
    %v572 = vxor.u32 %v516, 2147483648
    %v573 = vxor.u32 %v519, 2147483648
    %v574 = vxor.u32 %v524, 2147483648
    %v575 = vxor.u32 %v527, 2147483648
    %v576 = vxor.u32 %v532, 2147483648
    %v577 = vxor.u32 %v535, 2147483648
    %v578 = vxor.u32 %v540, 2147483648
    %v579 = vxor.u32 %v543, 2147483648
    %v580 = vxor.u32 %v548, 2147483648
    %v581 = vxor.u32 %v551, 2147483648
    %v582 = vxor.u32 %v556, 2147483648
    %v583 = vxor.u32 %v559, 2147483648
    %v584 = vxor.u32 %v564, 2147483648
    %v585 = vxor.u32 %v567, 2147483648
    %v586 = vmul.f32 %v570, 1.442695
    %v587 = vpow.pop %v586
    %v588 = vmul.f32 %v571, 1.442695
    %v589 = vpow.pop %v588
    %v590 = vmul.f32 %v572, 1.442695
    %v591 = vpow.pop %v590
    %v592 = vmul.f32 %v573, 1.442695
    %v593 = vpow.pop %v592
    %v594 = vmul.f32 %v574, 1.442695
    %v595 = vpow.pop %v594
    %v596 = vmul.f32 %v575, 1.442695
    %v597 = vpow.pop %v596
    %v598 = vmul.f32 %v576, 1.442695
    %v599 = vpow.pop %v598
    %v600 = vmul.f32 %v577, 1.442695
    %v601 = vpow.pop %v600
    %v602 = vmul.f32 %v578, 1.442695
    %v603 = vpow.pop %v602
    %v604 = vmul.f32 %v579, 1.442695
    %v605 = vpow.pop %v604
    %v606 = vmul.f32 %v580, 1.442695
    %v607 = vpow.pop %v606
    %v608 = vmul.f32 %v581, 1.442695
    %v609 = vpow.pop %v608
    %v610 = vmul.f32 %v582, 1.442695
    %v611 = vpow.pop %v610
    %v612 = vmul.f32 %v583, 1.442695
    %v613 = vpow.pop %v612
    %v614 = vmul.f32 %v584, 1.442695
    %v615 = vpow.pop %v614
    %v616 = vmul.f32 %v585, 1.442695
    %v617 = vpow.pop %v616
    %v618 = vadd.f32 %v587, 1.0
    %v619 = vadd.f32 %v589, 1.0
    %v620 = vadd.f32 %v591, 1.0
    %v621 = vadd.f32 %v593, 1.0
    %v622 = vadd.f32 %v595, 1.0
    %v623 = vadd.f32 %v597, 1.0
    %v624 = vadd.f32 %v599, 1.0
    %v625 = vadd.f32 %v601, 1.0
    %v626 = vadd.f32 %v603, 1.0
    %v627 = vadd.f32 %v605, 1.0
    %v628 = vadd.f32 %v607, 1.0
    %v629 = vadd.f32 %v609, 1.0
    %v630 = vadd.f32 %v611, 1.0
    %v631 = vadd.f32 %v613, 1.0
    %v632 = vadd.f32 %v615, 1.0
    %v633 = vadd.f32 %v617, 1.0
    %v634 = vrcp.pop %v618
    %v635 = vmul.f32 1.0, %v634
    %v636 = vrcp.pop %v619
    %v637 = vmul.f32 1.0, %v636
    %v638 = vrcp.pop %v620
    %v639 = vmul.f32 1.0, %v638
    %v640 = vrcp.pop %v621
    %v641 = vmul.f32 1.0, %v640
    %v642 = vrcp.pop %v622
    %v643 = vmul.f32 1.0, %v642
    %v644 = vrcp.pop %v623
    %v645 = vmul.f32 1.0, %v644
    %v646 = vrcp.pop %v624
    %v647 = vmul.f32 1.0, %v646
    %v648 = vrcp.pop %v625
    %v649 = vmul.f32 1.0, %v648
    %v650 = vrcp.pop %v626
    %v651 = vmul.f32 1.0, %v650
    %v652 = vrcp.pop %v627
    %v653 = vmul.f32 1.0, %v652
    %v654 = vrcp.pop %v628
    %v655 = vmul.f32 1.0, %v654
    %v656 = vrcp.pop %v629
    %v657 = vmul.f32 1.0, %v656
    %v658 = vrcp.pop %v630
    %v659 = vmul.f32 1.0, %v658
    %v660 = vrcp.pop %v631
    %v661 = vmul.f32 1.0, %v660
    %v662 = vrcp.pop %v632
    %v663 = vmul.f32 1.0, %v662
    %v664 = vrcp.pop %v633
    %v665 = vmul.f32 1.0, %v664
    %v666 = vmul.f32 %v146, %v635
    %v667 = vmul.f32 %v147, %v637
    %v668 = vmul.f32 %v148, %v639
    %v669 = vmul.f32 %v149, %v641
    %v670 = vmul.f32 %v150, %v643
    %v671 = vmul.f32 %v151, %v645
    %v672 = vmul.f32 %v152, %v647
    %v673 = vmul.f32 %v153, %v649
    %v674 = vmul.f32 %v154, %v651
    %v675 = vmul.f32 %v155, %v653
    %v676 = vmul.f32 %v156, %v655
    %v677 = vmul.f32 %v157, %v657
    %v678 = vmul.f32 %v158, %v659
    %v679 = vmul.f32 %v159, %v661
    %v680 = vmul.f32 %v160, %v663
    %v681 = vmul.f32 %v161, %v665
    %v682 = vpack.c.bf16 %v667, %v666
    %v683 = vpack.c.bf16 %v669, %v668
    %v684 = vpack.c.bf16 %v671, %v670
    %v685 = vpack.c.bf16 %v673, %v672
    %v686 = vpack.c.bf16 %v675, %v674
    %v687 = vpack.c.bf16 %v677, %v676
    %v688 = vpack.c.bf16 %v679, %v678
    %v689 = vpack.c.bf16 %v681, %v680
    %v698 = vunpack.c.l.b16 %v682
    %v699 = vunpack.c.h.b16 %v682
    %v700 = vunpack.c.l.b16 %v683
    %v701 = vunpack.c.h.b16 %v683
    %v702 = vunpack.c.l.b16 %v684
    %v703 = vunpack.c.h.b16 %v684
    %v704 = vunpack.c.l.b16 %v685
    %v705 = vunpack.c.h.b16 %v685
    %v706 = vunpack.c.l.b16 %v686
    %v707 = vunpack.c.h.b16 %v686
    %v708 = vunpack.c.l.b16 %v687
    %v709 = vunpack.c.h.b16 %v687
    %v710 = vunpack.c.l.b16 %v688
    %v711 = vunpack.c.h.b16 %v688
    %v712 = vunpack.c.l.b16 %v689
    %v713 = vunpack.c.h.b16 %v689
    %v714 = vpack.c.b16 %v698, %v698
    %v715 = vpack.c.b16 %v699, %v699
    %v716 = vpack.c.b16 %v700, %v700
    %v717 = vpack.c.b16 %v701, %v701
    %v718 = vpack.c.b16 %v702, %v702
    %v719 = vpack.c.b16 %v703, %v703
    %v720 = vpack.c.b16 %v704, %v704
    %v721 = vpack.c.b16 %v705, %v705
    %v722 = vpack.c.b16 %v706, %v706
    %v723 = vpack.c.b16 %v707, %v707
    %v724 = vpack.c.b16 %v708, %v708
    %v725 = vpack.c.b16 %v709, %v709
    %v726 = vpack.c.b16 %v710, %v710
    %v727 = vpack.c.b16 %v711, %v711
    %v728 = vpack.c.b16 %v712, %v712
    %v729 = vpack.c.b16 %v713, %v713
    %746 = vst [vmem:[%s11] sm:$0xf] %v714
    %747 = vst [vmem:[%s11 + $0x4] sm:$0xf] %v715
    %748 = vst [vmem:[%s11 + $0x8] sm:$0xf] %v716
    %749 = vst [vmem:[%s11 + $0xc] sm:$0xf] %v717
    %750 = vst [vmem:[%s11 + $0x10] sm:$0xf] %v718
    %751 = vst [vmem:[%s11 + $0x14] sm:$0xf] %v719
    %752 = vst [vmem:[%s11 + $0x18] sm:$0xf] %v720
    %753 = vst [vmem:[%s11 + $0x1c] sm:$0xf] %v721
    %754 = vst [vmem:[%s11 + $0x20] sm:$0xf] %v722
    %755 = vst [vmem:[%s11 + $0x24] sm:$0xf] %v723
    %756 = vst [vmem:[%s11 + $0x28] sm:$0xf] %v724
    %757 = vst [vmem:[%s11 + $0x2c] sm:$0xf] %v725
    %758 = vst [vmem:[%s11 + $0x30] sm:$0xf] %v726
    %759 = vst [vmem:[%s11 + $0x34] sm:$0xf] %v727
    %760 = vst [vmem:[%s11 + $0x38] sm:$0xf] %v728
    %761 = vst [vmem:[%s11 + $0x3c] sm:$0xf] %v729
    %v762 = vld [vmem:[#allocation4] sm:$0xf]
    %v763 = vld [vmem:[#allocation4 + $0x4] sm:$0xf]
    %v764 = vld [vmem:[#allocation4 + $0x8] sm:$0xf]
    %v765 = vld [vmem:[#allocation4 + $0xc] sm:$0xf]
    %v766 = vld [vmem:[#allocation4 + $0x10] sm:$0xf]
    %v767 = vld [vmem:[#allocation4 + $0x14] sm:$0xf]
    %v768 = vld [vmem:[#allocation4 + $0x18] sm:$0xf]
    %v769 = vld [vmem:[#allocation4 + $0x1c] sm:$0xf]
    %v770 = vld [vmem:[#allocation4 + $0x20] sm:$0xf]
    %v771 = vld [vmem:[#allocation4 + $0x24] sm:$0xf]
    %v772 = vld [vmem:[#allocation4 + $0x28] sm:$0xf]
    %v773 = vld [vmem:[#allocation4 + $0x2c] sm:$0xf]
    %v774 = vld [vmem:[#allocation4 + $0x30] sm:$0xf]
    %v775 = vld [vmem:[#allocation4 + $0x34] sm:$0xf]
    %v776 = vld [vmem:[#allocation4 + $0x38] sm:$0xf]
    %v777 = vld [vmem:[#allocation4 + $0x3c] sm:$0xf]
    %v778 = vld [vmem:[#allocation12] sm:$0xf]
    %v779 = vld [vmem:[#allocation12 + $0x4] sm:$0xf]
    %v780 = vld [vmem:[#allocation12 + $0x8] sm:$0xf]
    %v781 = vld [vmem:[#allocation12 + $0xc] sm:$0xf]
    %v782 = vld [vmem:[#allocation12 + $0x10] sm:$0xf]
    %v783 = vld [vmem:[#allocation12 + $0x14] sm:$0xf]
    %v784 = vld [vmem:[#allocation12 + $0x18] sm:$0xf]
    %v785 = vld [vmem:[#allocation12 + $0x1c] sm:$0xf]
    %v786 = vld [vmem:[#allocation12 + $0x20] sm:$0xf]
    %v787 = vld [vmem:[#allocation12 + $0x24] sm:$0xf]
    %v788 = vld [vmem:[#allocation12 + $0x28] sm:$0xf]
    %v789 = vld [vmem:[#allocation12 + $0x2c] sm:$0xf]
    %v790 = vld [vmem:[#allocation12 + $0x30] sm:$0xf]
    %v791 = vld [vmem:[#allocation12 + $0x34] sm:$0xf]
    %v792 = vld [vmem:[#allocation12 + $0x38] sm:$0xf]
    %v793 = vld [vmem:[#allocation12 + $0x3c] sm:$0xf]
    %v794 = vld [vmem:[%s8] sm:$0x1]
    %v796 = vlaneseq
    %v797 = vshrl.u32 %v796, 7
    %v798 = vsub.s32 0, %v797
    %v799 = vrot.slane %v794, %v798
    %v817 = vunpack.c.l.b16 %v762
    %v818 = vunpack.c.l.b16 %v763
    %v819 = vunpack.c.l.b16 %v764
    %v820 = vunpack.c.l.b16 %v765
    %v821 = vunpack.c.l.b16 %v766
    %v822 = vunpack.c.l.b16 %v767
    %v823 = vunpack.c.l.b16 %v768
    %v824 = vunpack.c.l.b16 %v769
    %v825 = vunpack.c.l.b16 %v770
    %v826 = vunpack.c.l.b16 %v771
    %v827 = vunpack.c.l.b16 %v772
    %v828 = vunpack.c.l.b16 %v773
    %v829 = vunpack.c.l.b16 %v774
    %v830 = vunpack.c.l.b16 %v775
    %v831 = vunpack.c.l.b16 %v776
    %v832 = vunpack.c.l.b16 %v777
    %v833 = vpack.c.b16 %v818, %v817
    %v834 = vpack.c.b16 %v820, %v819
    %v835 = vpack.c.b16 %v822, %v821
    %v836 = vpack.c.b16 %v824, %v823
    %v837 = vpack.c.b16 %v826, %v825
    %v838 = vpack.c.b16 %v828, %v827
    %v839 = vpack.c.b16 %v830, %v829
    %v840 = vpack.c.b16 %v832, %v831
    %v865 = vunpack.c.l.b16 %v778
    %v866 = vunpack.c.l.b16 %v779
    %v867 = vunpack.c.l.b16 %v780
    %v868 = vunpack.c.l.b16 %v781
    %v869 = vunpack.c.l.b16 %v782
    %v870 = vunpack.c.l.b16 %v783
    %v871 = vunpack.c.l.b16 %v784
    %v872 = vunpack.c.l.b16 %v785
    %v873 = vunpack.c.l.b16 %v786
    %v874 = vunpack.c.l.b16 %v787
    %v875 = vunpack.c.l.b16 %v788
    %v876 = vunpack.c.l.b16 %v789
    %v877 = vunpack.c.l.b16 %v790
    %v878 = vunpack.c.l.b16 %v791
    %v879 = vunpack.c.l.b16 %v792
    %v880 = vunpack.c.l.b16 %v793
    %v881 = vpack.c.b16 %v866, %v865
    %v882 = vpack.c.b16 %v868, %v867
    %v883 = vpack.c.b16 %v870, %v869
    %v884 = vpack.c.b16 %v872, %v871
    %v885 = vpack.c.b16 %v874, %v873
    %v886 = vpack.c.b16 %v876, %v875
    %v887 = vpack.c.b16 %v878, %v877
    %v888 = vpack.c.b16 %v880, %v879
    %897 = vmatprep.subr.bf16.mxu0 0
    %898 = vmatpush1.bf16.msra.mxu0 %v881
    %899 = vmatprep.subr.bf16.mxu0 0
    %900 = vmatpush1.bf16.msra.mxu0 %v882
    %901 = vmatprep.subr.bf16.mxu0 0
    %902 = vmatpush1.bf16.msra.mxu0 %v883
    %903 = vmatprep.subr.bf16.mxu0 0
    %904 = vmatpush1.bf16.msra.mxu0 %v884
    %905 = vmatprep.subr.bf16.mxu0 0
    %906 = vmatpush1.bf16.msra.mxu0 %v885
    %907 = vmatprep.subr.bf16.mxu0 0
    %908 = vmatpush1.bf16.msra.mxu0 %v886
    %909 = vmatprep.subr.bf16.mxu0 0
    %910 = vmatpush1.bf16.msra.mxu0 %v887
    %911 = vmatprep.subr.bf16.mxu0 0
    %912 = vmatpush1.bf16.msra.mxu0 %v888
    %913 = vmatprep.subr.bf16.mxu0 0
    %914 = vmatpush1.bf16.msra.mxu0 0
    %915 = vmatprep.subr.bf16.mxu0 0
    %916 = vmatpush1.bf16.msra.mxu0 0
    %917 = vmatprep.subr.bf16.mxu0 0
    %918 = vmatpush1.bf16.msra.mxu0 0
    %919 = vmatprep.subr.bf16.mxu0 0
    %920 = vmatpush1.bf16.msra.mxu0 0
    %921 = vmatprep.subr.bf16.mxu0 0
    %922 = vmatpush1.bf16.msra.mxu0 0
    %923 = vmatprep.subr.bf16.mxu0 0
    %924 = vmatpush1.bf16.msra.mxu0 0
    %925 = vmatprep.subr.bf16.mxu0 0
    %926 = vmatpush1.bf16.msra.mxu0 0
    %927 = vmatprep.subr.bf16.mxu0 0
    %928 = vmatpush1.bf16.msra.mxu0 0
    %929 = vmatprep.mubr.bf16.mxu0 0
    %930 = vmatmul.mubr.bf16.gmra.mrb[0].mxu0 %v833
    %v931 = vpop.f32.mrb[0].mxu0
    %v932 = vadd.f32 %v799, %v931
    %v933 = vpop.f32.mrb[0].mxu0
    %v934 = vpop.f32.mrb[0].mxu0
    %v935 = vadd.f32 %v799, %v934
    %v936 = vpop.f32.mrb[0].mxu0
    %937 = vmatprep.mubr.bf16.mxu0 0
    %938 = vmatmul.mubr.bf16.gmra.mrb[0].mxu0 %v834
    %v939 = vpop.f32.mrb[0].mxu0
    %v940 = vadd.f32 %v799, %v939
    %v941 = vpop.f32.mrb[0].mxu0
    %v942 = vpop.f32.mrb[0].mxu0
    %v943 = vadd.f32 %v799, %v942
    %v944 = vpop.f32.mrb[0].mxu0
    %945 = vmatprep.mubr.bf16.mxu0 0
    %946 = vmatmul.mubr.bf16.gmra.mrb[0].mxu0 %v835
    %v947 = vpop.f32.mrb[0].mxu0
    %v948 = vadd.f32 %v799, %v947
    %v949 = vpop.f32.mrb[0].mxu0
    %v950 = vpop.f32.mrb[0].mxu0
    %v951 = vadd.f32 %v799, %v950
    %v952 = vpop.f32.mrb[0].mxu0
    %953 = vmatprep.mubr.bf16.mxu0 0
    %954 = vmatmul.mubr.bf16.gmra.mrb[0].mxu0 %v836
    %v955 = vpop.f32.mrb[0].mxu0
    %v956 = vadd.f32 %v799, %v955
    %v957 = vpop.f32.mrb[0].mxu0
    %v958 = vpop.f32.mrb[0].mxu0
    %v959 = vadd.f32 %v799, %v958
    %v960 = vpop.f32.mrb[0].mxu0
    %961 = vmatprep.mubr.bf16.mxu0 0
    %962 = vmatmul.mubr.bf16.gmra.mrb[0].mxu0 %v837
    %v963 = vpop.f32.mrb[0].mxu0
    %v964 = vadd.f32 %v799, %v963
    %v965 = vpop.f32.mrb[0].mxu0
    %v966 = vpop.f32.mrb[0].mxu0
    %v967 = vadd.f32 %v799, %v966
    %v968 = vpop.f32.mrb[0].mxu0
    %969 = vmatprep.mubr.bf16.mxu0 0
    %970 = vmatmul.mubr.bf16.gmra.mrb[0].mxu0 %v838
    %v971 = vpop.f32.mrb[0].mxu0
    %v972 = vadd.f32 %v799, %v971
    %v973 = vpop.f32.mrb[0].mxu0
    %v974 = vpop.f32.mrb[0].mxu0
    %v975 = vadd.f32 %v799, %v974
    %v976 = vpop.f32.mrb[0].mxu0
    %977 = vmatprep.mubr.bf16.mxu0 0
    %978 = vmatmul.mubr.bf16.gmra.mrb[0].mxu0 %v839
    %v979 = vpop.f32.mrb[0].mxu0
    %v980 = vadd.f32 %v799, %v979
    %v981 = vpop.f32.mrb[0].mxu0
    %v982 = vpop.f32.mrb[0].mxu0
    %v983 = vadd.f32 %v799, %v982
    %v984 = vpop.f32.mrb[0].mxu0
    %985 = vmatprep.mubr.bf16.mxu0 0
    %986 = vmatmul.mubr.bf16.gmra.mrb[0].mxu0 %v840
    %v987 = vpop.f32.mrb[0].mxu0
    %v988 = vadd.f32 %v799, %v987
    %v989 = vpop.f32.mrb[0].mxu0
    %v990 = vpop.f32.mrb[0].mxu0
    %v991 = vadd.f32 %v799, %v990
    %v992 = vpop.f32.mrb[0].mxu0
    %993 = vdwg.mxu0
    %v994 = vpack.c.bf16 %v935, %v932
    %v995 = vpack.c.bf16 %v943, %v940
    %v996 = vpack.c.bf16 %v951, %v948
    %v997 = vpack.c.bf16 %v959, %v956
    %v998 = vpack.c.bf16 %v967, %v964
    %v999 = vpack.c.bf16 %v975, %v972
    %v1000 = vpack.c.bf16 %v983, %v980
    %v1001 = vpack.c.bf16 %v991, %v988
    %v1002 = vld [vmem:[#allocation13] sm:$0xf]
    %v1003 = vld [vmem:[#allocation13 + $0x4] sm:$0xf]
    %v1004 = vld [vmem:[#allocation13 + $0x8] sm:$0xf]
    %v1005 = vld [vmem:[#allocation13 + $0xc] sm:$0xf]
    %v1006 = vld [vmem:[#allocation13 + $0x10] sm:$0xf]
    %v1007 = vld [vmem:[#allocation13 + $0x14] sm:$0xf]
    %v1008 = vld [vmem:[#allocation13 + $0x18] sm:$0xf]
    %v1009 = vld [vmem:[#allocation13 + $0x1c] sm:$0xf]
    %v1010 = vld [vmem:[#allocation13 + $0x20] sm:$0xf]
    %v1011 = vld [vmem:[#allocation13 + $0x24] sm:$0xf]
    %v1012 = vld [vmem:[#allocation13 + $0x28] sm:$0xf]
    %v1013 = vld [vmem:[#allocation13 + $0x2c] sm:$0xf]
    %v1014 = vld [vmem:[#allocation13 + $0x30] sm:$0xf]
    %v1015 = vld [vmem:[#allocation13 + $0x34] sm:$0xf]
    %v1016 = vld [vmem:[#allocation13 + $0x38] sm:$0xf]
    %v1017 = vld [vmem:[#allocation13 + $0x3c] sm:$0xf]
    %v1018 = vld [vmem:[%s10] sm:$0x1]
    %v1020 = vlaneseq
    %v1021 = vshrl.u32 %v1020, 7
    %v1022 = vsub.s32 0, %v1021
    %v1023 = vrot.slane %v1018, %v1022
    %v1041 = vunpack.c.l.b16 %v1002
    %v1042 = vunpack.c.l.b16 %v1003
    %v1043 = vunpack.c.l.b16 %v1004
    %v1044 = vunpack.c.l.b16 %v1005
    %v1045 = vunpack.c.l.b16 %v1006
    %v1046 = vunpack.c.l.b16 %v1007
    %v1047 = vunpack.c.l.b16 %v1008
    %v1048 = vunpack.c.l.b16 %v1009
    %v1049 = vunpack.c.l.b16 %v1010
    %v1050 = vunpack.c.l.b16 %v1011
    %v1051 = vunpack.c.l.b16 %v1012
    %v1052 = vunpack.c.l.b16 %v1013
    %v1053 = vunpack.c.l.b16 %v1014
    %v1054 = vunpack.c.l.b16 %v1015
    %v1055 = vunpack.c.l.b16 %v1016
    %v1056 = vunpack.c.l.b16 %v1017
    %v1057 = vpack.c.b16 %v1042, %v1041
    %v1058 = vpack.c.b16 %v1044, %v1043
    %v1059 = vpack.c.b16 %v1046, %v1045
    %v1060 = vpack.c.b16 %v1048, %v1047
    %v1061 = vpack.c.b16 %v1050, %v1049
    %v1062 = vpack.c.b16 %v1052, %v1051
    %v1063 = vpack.c.b16 %v1054, %v1053
    %v1064 = vpack.c.b16 %v1056, %v1055
    %1073 = vmatprep.subr.bf16.mxu0 0
    %1074 = vmatpush1.bf16.msra.mxu0 %v1057
    %1075 = vmatprep.subr.bf16.mxu0 0
    %1076 = vmatpush1.bf16.msra.mxu0 %v1058
    %1077 = vmatprep.subr.bf16.mxu0 0
    %1078 = vmatpush1.bf16.msra.mxu0 %v1059
    %1079 = vmatprep.subr.bf16.mxu0 0
    %1080 = vmatpush1.bf16.msra.mxu0 %v1060
    %1081 = vmatprep.subr.bf16.mxu0 0
    %1082 = vmatpush1.bf16.msra.mxu0 %v1061
    %1083 = vmatprep.subr.bf16.mxu0 0
    %1084 = vmatpush1.bf16.msra.mxu0 %v1062
    %1085 = vmatprep.subr.bf16.mxu0 0
    %1086 = vmatpush1.bf16.msra.mxu0 %v1063
    %1087 = vmatprep.subr.bf16.mxu0 0
    %1088 = vmatpush1.bf16.msra.mxu0 %v1064
    %1089 = vmatprep.subr.bf16.mxu0 0
    %1090 = vmatpush1.bf16.msra.mxu0 0
    %1091 = vmatprep.subr.bf16.mxu0 0
    %1092 = vmatpush1.bf16.msra.mxu0 0
    %1093 = vmatprep.subr.bf16.mxu0 0
    %1094 = vmatpush1.bf16.msra.mxu0 0
    %1095 = vmatprep.subr.bf16.mxu0 0
    %1096 = vmatpush1.bf16.msra.mxu0 0
    %1097 = vmatprep.subr.bf16.mxu0 0
    %1098 = vmatpush1.bf16.msra.mxu0 0
    %1099 = vmatprep.subr.bf16.mxu0 0
    %1100 = vmatpush1.bf16.msra.mxu0 0
    %1101 = vmatprep.subr.bf16.mxu0 0
    %1102 = vmatpush1.bf16.msra.mxu0 0
    %1103 = vmatprep.subr.bf16.mxu0 0
    %1104 = vmatpush1.bf16.msra.mxu0 0
    %1105 = vmatprep.mubr.bf16.mxu0 0
    %1106 = vmatmul.mubr.bf16.gmra.mrb[0].mxu0 %v994
    %v1107 = vpop.f32.mrb[0].mxu0
    %v1108 = vadd.f32 %v1023, %v1107
    %v1109 = vpop.f32.mrb[0].mxu0
    %v1110 = vpop.f32.mrb[0].mxu0
    %v1111 = vadd.f32 %v1023, %v1110
    %v1112 = vpop.f32.mrb[0].mxu0
    %1113 = vmatprep.mubr.bf16.mxu0 0
    %1114 = vmatmul.mubr.bf16.gmra.mrb[0].mxu0 %v995
    %v1115 = vpop.f32.mrb[0].mxu0
    %v1116 = vadd.f32 %v1023, %v1115
    %v1117 = vpop.f32.mrb[0].mxu0
    %v1118 = vpop.f32.mrb[0].mxu0
    %v1119 = vadd.f32 %v1023, %v1118
    %v1120 = vpop.f32.mrb[0].mxu0
    %1121 = vmatprep.mubr.bf16.mxu0 0
    %1122 = vmatmul.mubr.bf16.gmra.mrb[0].mxu0 %v996
    %v1123 = vpop.f32.mrb[0].mxu0
    %v1124 = vadd.f32 %v1023, %v1123
    %v1125 = vpop.f32.mrb[0].mxu0
    %v1126 = vpop.f32.mrb[0].mxu0
    %v1127 = vadd.f32 %v1023, %v1126
    %v1128 = vpop.f32.mrb[0].mxu0
    %1129 = vmatprep.mubr.bf16.mxu0 0
    %1130 = vmatmul.mubr.bf16.gmra.mrb[0].mxu0 %v997
    %v1131 = vpop.f32.mrb[0].mxu0
    %v1132 = vadd.f32 %v1023, %v1131
    %v1133 = vpop.f32.mrb[0].mxu0
    %v1134 = vpop.f32.mrb[0].mxu0
    %v1135 = vadd.f32 %v1023, %v1134
    %v1136 = vpop.f32.mrb[0].mxu0
    %1137 = vmatprep.mubr.bf16.mxu0 0
    %1138 = vmatmul.mubr.bf16.gmra.mrb[0].mxu0 %v998
    %v1139 = vpop.f32.mrb[0].mxu0
    %v1140 = vadd.f32 %v1023, %v1139
    %v1141 = vpop.f32.mrb[0].mxu0
    %v1142 = vpop.f32.mrb[0].mxu0
    %v1143 = vadd.f32 %v1023, %v1142
    %v1144 = vpop.f32.mrb[0].mxu0
    %1145 = vmatprep.mubr.bf16.mxu0 0
    %1146 = vmatmul.mubr.bf16.gmra.mrb[0].mxu0 %v999
    %v1147 = vpop.f32.mrb[0].mxu0
    %v1148 = vadd.f32 %v1023, %v1147
    %v1149 = vpop.f32.mrb[0].mxu0
    %v1150 = vpop.f32.mrb[0].mxu0
    %v1151 = vadd.f32 %v1023, %v1150
    %v1152 = vpop.f32.mrb[0].mxu0
    %1153 = vmatprep.mubr.bf16.mxu0 0
    %1154 = vmatmul.mubr.bf16.gmra.mrb[0].mxu0 %v1000
    %v1155 = vpop.f32.mrb[0].mxu0
    %v1156 = vadd.f32 %v1023, %v1155
    %v1157 = vpop.f32.mrb[0].mxu0
    %v1158 = vpop.f32.mrb[0].mxu0
    %v1159 = vadd.f32 %v1023, %v1158
    %v1160 = vpop.f32.mrb[0].mxu0
    %1161 = vmatprep.mubr.bf16.mxu0 0
    %1162 = vmatmul.mubr.bf16.gmra.mrb[0].mxu0 %v1001
    %v1163 = vpop.f32.mrb[0].mxu0
    %v1164 = vadd.f32 %v1023, %v1163
    %v1165 = vpop.f32.mrb[0].mxu0
    %v1166 = vpop.f32.mrb[0].mxu0
    %v1167 = vadd.f32 %v1023, %v1166
    %v1168 = vpop.f32.mrb[0].mxu0
    %1169 = vdwg.mxu0
    %v1170 = vxor.u32 %v1108, 2147483648
    %v1171 = vxor.u32 %v1111, 2147483648
    %v1172 = vxor.u32 %v1116, 2147483648
    %v1173 = vxor.u32 %v1119, 2147483648
    %v1174 = vxor.u32 %v1124, 2147483648
    %v1175 = vxor.u32 %v1127, 2147483648
    %v1176 = vxor.u32 %v1132, 2147483648
    %v1177 = vxor.u32 %v1135, 2147483648
    %v1178 = vxor.u32 %v1140, 2147483648
    %v1179 = vxor.u32 %v1143, 2147483648
    %v1180 = vxor.u32 %v1148, 2147483648
    %v1181 = vxor.u32 %v1151, 2147483648
    %v1182 = vxor.u32 %v1156, 2147483648
    %v1183 = vxor.u32 %v1159, 2147483648
    %v1184 = vxor.u32 %v1164, 2147483648
    %v1185 = vxor.u32 %v1167, 2147483648
    %v1186 = vmul.f32 %v1170, 1.442695
    %v1187 = vpow.pop %v1186
    %v1188 = vmul.f32 %v1171, 1.442695
    %v1189 = vpow.pop %v1188
    %v1190 = vmul.f32 %v1172, 1.442695
    %v1191 = vpow.pop %v1190
    %v1192 = vmul.f32 %v1173, 1.442695
    %v1193 = vpow.pop %v1192
    %v1194 = vmul.f32 %v1174, 1.442695
    %v1195 = vpow.pop %v1194
    %v1196 = vmul.f32 %v1175, 1.442695
    %v1197 = vpow.pop %v1196
    %v1198 = vmul.f32 %v1176, 1.442695
    %v1199 = vpow.pop %v1198
    %v1200 = vmul.f32 %v1177, 1.442695
    %v1201 = vpow.pop %v1200
    %v1202 = vmul.f32 %v1178, 1.442695
    %v1203 = vpow.pop %v1202
    %v1204 = vmul.f32 %v1179, 1.442695
    %v1205 = vpow.pop %v1204
    %v1206 = vmul.f32 %v1180, 1.442695
    %v1207 = vpow.pop %v1206
    %v1208 = vmul.f32 %v1181, 1.442695
    %v1209 = vpow.pop %v1208
    %v1210 = vmul.f32 %v1182, 1.442695
    %v1211 = vpow.pop %v1210
    %v1212 = vmul.f32 %v1183, 1.442695
    %v1213 = vpow.pop %v1212
    %v1214 = vmul.f32 %v1184, 1.442695
    %v1215 = vpow.pop %v1214
    %v1216 = vmul.f32 %v1185, 1.442695
    %v1217 = vpow.pop %v1216
    %v1218 = vadd.f32 %v1187, 1.0
    %v1219 = vadd.f32 %v1189, 1.0
    %v1220 = vadd.f32 %v1191, 1.0
    %v1221 = vadd.f32 %v1193, 1.0
    %v1222 = vadd.f32 %v1195, 1.0
    %v1223 = vadd.f32 %v1197, 1.0
    %v1224 = vadd.f32 %v1199, 1.0
    %v1225 = vadd.f32 %v1201, 1.0
    %v1226 = vadd.f32 %v1203, 1.0
    %v1227 = vadd.f32 %v1205, 1.0
    %v1228 = vadd.f32 %v1207, 1.0
    %v1229 = vadd.f32 %v1209, 1.0
    %v1230 = vadd.f32 %v1211, 1.0
    %v1231 = vadd.f32 %v1213, 1.0
    %v1232 = vadd.f32 %v1215, 1.0
    %v1233 = vadd.f32 %v1217, 1.0
    %v1234 = vrcp.pop %v1218
    %v1235 = vmul.f32 1.0, %v1234
    %v1236 = vrcp.pop %v1219
    %v1237 = vmul.f32 1.0, %v1236
    %v1238 = vrcp.pop %v1220
    %v1239 = vmul.f32 1.0, %v1238
    %v1240 = vrcp.pop %v1221
    %v1241 = vmul.f32 1.0, %v1240
    %v1242 = vrcp.pop %v1222
    %v1243 = vmul.f32 1.0, %v1242
    %v1244 = vrcp.pop %v1223
    %v1245 = vmul.f32 1.0, %v1244
    %v1246 = vrcp.pop %v1224
    %v1247 = vmul.f32 1.0, %v1246
    %v1248 = vrcp.pop %v1225
    %v1249 = vmul.f32 1.0, %v1248
    %v1250 = vrcp.pop %v1226
    %v1251 = vmul.f32 1.0, %v1250
    %v1252 = vrcp.pop %v1227
    %v1253 = vmul.f32 1.0, %v1252
    %v1254 = vrcp.pop %v1228
    %v1255 = vmul.f32 1.0, %v1254
    %v1256 = vrcp.pop %v1229
    %v1257 = vmul.f32 1.0, %v1256
    %v1258 = vrcp.pop %v1230
    %v1259 = vmul.f32 1.0, %v1258
    %v1260 = vrcp.pop %v1231
    %v1261 = vmul.f32 1.0, %v1260
    %v1262 = vrcp.pop %v1232
    %v1263 = vmul.f32 1.0, %v1262
    %v1264 = vrcp.pop %v1233
    %v1265 = vmul.f32 1.0, %v1264
    %v1266 = vmul.f32 %v146, %v1235
    %v1267 = vmul.f32 %v147, %v1237
    %v1268 = vmul.f32 %v148, %v1239
    %v1269 = vmul.f32 %v149, %v1241
    %v1270 = vmul.f32 %v150, %v1243
    %v1271 = vmul.f32 %v151, %v1245
    %v1272 = vmul.f32 %v152, %v1247
    %v1273 = vmul.f32 %v153, %v1249
    %v1274 = vmul.f32 %v154, %v1251
    %v1275 = vmul.f32 %v155, %v1253
    %v1276 = vmul.f32 %v156, %v1255
    %v1277 = vmul.f32 %v157, %v1257
    %v1278 = vmul.f32 %v158, %v1259
    %v1279 = vmul.f32 %v159, %v1261
    %v1280 = vmul.f32 %v160, %v1263
    %v1281 = vmul.f32 %v161, %v1265
    %v1282 = vpack.c.bf16 %v1267, %v1266
    %v1283 = vpack.c.bf16 %v1269, %v1268
    %v1284 = vpack.c.bf16 %v1271, %v1270
    %v1285 = vpack.c.bf16 %v1273, %v1272
    %v1286 = vpack.c.bf16 %v1275, %v1274
    %v1287 = vpack.c.bf16 %v1277, %v1276
    %v1288 = vpack.c.bf16 %v1279, %v1278
    %v1289 = vpack.c.bf16 %v1281, %v1280
    %v1298 = vunpack.c.l.b16 %v1282
    %v1299 = vunpack.c.h.b16 %v1282
    %v1300 = vunpack.c.l.b16 %v1283
    %v1301 = vunpack.c.h.b16 %v1283
    %v1302 = vunpack.c.l.b16 %v1284
    %v1303 = vunpack.c.h.b16 %v1284
    %v1304 = vunpack.c.l.b16 %v1285
    %v1305 = vunpack.c.h.b16 %v1285
    %v1306 = vunpack.c.l.b16 %v1286
    %v1307 = vunpack.c.h.b16 %v1286
    %v1308 = vunpack.c.l.b16 %v1287
    %v1309 = vunpack.c.h.b16 %v1287
    %v1310 = vunpack.c.l.b16 %v1288
    %v1311 = vunpack.c.h.b16 %v1288
    %v1312 = vunpack.c.l.b16 %v1289
    %v1313 = vunpack.c.h.b16 %v1289
    %v1314 = vpack.c.b16 %v1298, %v1298
    %v1315 = vpack.c.b16 %v1299, %v1299
    %v1316 = vpack.c.b16 %v1300, %v1300
    %v1317 = vpack.c.b16 %v1301, %v1301
    %v1318 = vpack.c.b16 %v1302, %v1302
    %v1319 = vpack.c.b16 %v1303, %v1303
    %v1320 = vpack.c.b16 %v1304, %v1304
    %v1321 = vpack.c.b16 %v1305, %v1305
    %v1322 = vpack.c.b16 %v1306, %v1306
    %v1323 = vpack.c.b16 %v1307, %v1307
    %v1324 = vpack.c.b16 %v1308, %v1308
    %v1325 = vpack.c.b16 %v1309, %v1309
    %v1326 = vpack.c.b16 %v1310, %v1310
    %v1327 = vpack.c.b16 %v1311, %v1311
    %v1328 = vpack.c.b16 %v1312, %v1312
    %v1329 = vpack.c.b16 %v1313, %v1313
    %s1346 = scalar_lea.vmem %s11, 64
    %1347 = vst [vmem:[%s1346] sm:$0xf] %v1314
    %1348 = vst [vmem:[%s1346 + $0x4] sm:$0xf] %v1315
    %1349 = vst [vmem:[%s1346 + $0x8] sm:$0xf] %v1316
    %1350 = vst [vmem:[%s1346 + $0xc] sm:$0xf] %v1317
    %1351 = vst [vmem:[%s1346 + $0x10] sm:$0xf] %v1318
    %1352 = vst [vmem:[%s1346 + $0x14] sm:$0xf] %v1319
    %1353 = vst [vmem:[%s1346 + $0x18] sm:$0xf] %v1320
    %1354 = vst [vmem:[%s1346 + $0x1c] sm:$0xf] %v1321
    %1355 = vst [vmem:[%s1346 + $0x20] sm:$0xf] %v1322
    %1356 = vst [vmem:[%s1346 + $0x24] sm:$0xf] %v1323
    %1357 = vst [vmem:[%s1346 + $0x28] sm:$0xf] %v1324
    %1358 = vst [vmem:[%s1346 + $0x2c] sm:$0xf] %v1325
    %1359 = vst [vmem:[%s1346 + $0x30] sm:$0xf] %v1326
    %1360 = vst [vmem:[%s1346 + $0x34] sm:$0xf] %v1327
    %1361 = vst [vmem:[%s1346 + $0x38] sm:$0xf] %v1328
    %1362 = vst [vmem:[%s1346 + $0x3c] sm:$0xf] %v1329
    // Predicated region
    $region78: #{gume_forward.6} parent=1 // pred_check
      _
    $region79: #{gume_forward.6} parent=1 // pred_check_branch
      %1364 = sbr.rel (0) target = $region81
    $region80: #{gume_forward.6} parent=1 // pred_region
      _
    $region81: #{gume_forward.6} parent=1 // pred_fallthru
      _
    // Predicated region
    $region82: #{gume_forward.6} parent=1 // pred_check
      _
    $region83: #{gume_forward.6} parent=1 // pred_check_branch
      %1366 = sbr.rel (0) target = $region85
    $region84: #{gume_forward.6} parent=1 // pred_region
      _
    $region85: #{gume_forward.6} parent=1 // pred_fallthru
      _
    %1367 = vsyncpa [#allocation3], 1
    %1368 = vsyncpa [#allocation5], 1
    %1369 = vsyncpa [#allocation8], 1
    %1370 = vsyncpa [#allocation11], 1
    %1371 = vsyncpa [#allocation14], 1

// kernel: gume_forward.7
$region0: #{gume_forward.7}
  #allocation0 [shape = 'u32[]', space=smem, size = 0x4, offset = 0x4, fixed_abs, tag = 'smem constant byte address 0x4 - core index']
  #allocation1 [shape = 'u32[144,128]{1,0:T(1,128)}', space=vmem, size = 0x12000, scoped, tag = 'internal scratch']
  #allocation2 [shape = 'bf16[512,128]{1,0:T(16,128)(2,1)}', space=vmem, size = 0x20000, scoped, tag = 'scratch operand']
  #allocation3 [shape = 'f32[256,128]{1,0:T(8,128)}', space=vmem, size = 0x20000, scoped, tag = 'scratch operand']
  %s0 = inlined_call_operand.vmem [shape: bf16[256,128], index: 0, kind: input, shape index: {}]
  %s1 = inlined_call_operand.vmem [shape: bf16[256,256], index: 1, kind: input, shape index: {}]
  %s2 = inlined_call_operand.vmem [shape: f32[256,128], index: 2, kind: output, shape index: {}]
  %s3 = sld [smem:[#allocation0]]
  $region49: #{gume_forward.7} parent=0
    _
  %s5 = ssub.s32 1, %s3
  %s6 = scalar_select 0, %s5, %s3
  loop: start=0, step=1, limit=4
  $region2: #{gume_forward.7} parent=0 // loop_pre_header
    _
  $region3: #{gume_forward.7} parent=0 // loop_header
    %s8 = sphi 0, %s12
    %p9 = scmp.ge.s32.totalorder %s8, 4
    %s15 = sphi 0, %s27
    %s16 = sphi 0, %s23
    %s17 = sphi 0, %s15
    %s18 = sphi 0, %s16
    %s19 = sphi 0, %s17
    %s20 = sphi 0, %s18
    %s28 = sphi 0, %s28
    %s30 = sphi 0, %s28
    %s31 = sphi 0, %s30
    %s45 = sphi 0, %s31
    %s51 = sphi 0, %s53
    %s54 = sphi 0, %s51
    %s55 = sphi 0, %s54
    %s71 = sphi 0, %s55
    %s77 = sphi 0, %s79
    %s80 = sphi 0, %s77
    %s81 = sphi 0, %s80
    %s97 = sphi 0, %s81
  $region4: #{gume_forward.7} parent=0 // loop_header_branch
    %11 = sbr.rel (%p9) target = $region8
  $region5: #{gume_forward.7} parent=0 // loop_body
    %s13 = ssub.s32 %s8, 1
    %s14 = ssub.s32 %s8, 2
    %s21 = sadd.s32 1, %s16
    %p22 = scmp.ge.s32.totalorder %s21, 1
    %s23 = scalar_select %p22, 0, %s21
    %s24 = sadd.s32 1, %s15
    %s25 = scalar_select %p22, %s24, %s15
    %p26 = scmp.ge.s32.totalorder %s25, 2
    %s27 = scalar_select %p26, 0, %s25
    %s29 = sadd.s32 %s28, 1
    %p32 = scmp.eq.s32.totalorder %s8, 1
    %p33 = scmp.ne.s32.totalorder %s28, %s30
    %p34 = scmp.eq.s32.totalorder %s8, 0
    %p35 = por %p33, %p34
    %p36 = scmp.ne.s32.totalorder %s28, %s30
    %p37 = scmp.eq.s32.totalorder %s13, 1
    %p38 = por %p36, %p37
    %p39 = scmp.ne.s32.totalorder %s30, %s31
    %p40 = scmp.eq.s32.totalorder %s13, 0
    %p41 = por %p39, %p40
    %p42 = scmp.ne.s32.totalorder %s30, %s31
    %p43 = scmp.eq.s32.totalorder %s14, 1
    %p44 = por %p42, %p43
    %p46 = scmp.ne.s32.totalorder %s31, %s45
    %p47 = scmp.eq.s32.totalorder %s14, 0
    %p48 = por %p46, %p47
    %s49 = ssub.s32 %s16, %s23
    %p50 = scmp.eq.s32.totalorder %s49, 0
    %s52 = sadd.s32 %s51, 1
    %s53 = scalar_select %p50, %s51, %s52
    %p56 = pneg %p50
    %p57 = scmp.eq.s32.totalorder %s8, 1
    %p58 = por %p56, %p57
    %p59 = scmp.ne.s32.totalorder %s51, %s54
    %p60 = scmp.eq.s32.totalorder %s8, 0
    %p61 = por %p59, %p60
    %p62 = scmp.ne.s32.totalorder %s51, %s54
    %p63 = scmp.eq.s32.totalorder %s13, 1
    %p64 = por %p62, %p63
    %p65 = scmp.ne.s32.totalorder %s54, %s55
    %p66 = scmp.eq.s32.totalorder %s13, 0
    %p67 = por %p65, %p66
    %p68 = scmp.ne.s32.totalorder %s54, %s55
    %p69 = scmp.eq.s32.totalorder %s14, 1
    %p70 = por %p68, %p69
    %p72 = scmp.ne.s32.totalorder %s55, %s71
    %p73 = scmp.eq.s32.totalorder %s14, 0
    %p74 = por %p72, %p73
    %s75 = ssub.s32 %s16, %s23
    %p76 = scmp.eq.s32.totalorder %s75, 0
    %s78 = sadd.s32 %s77, 1
    %s79 = scalar_select %p76, %s77, %s78
    %p82 = pneg %p76
    %p83 = scmp.eq.s32.totalorder %s8, 1
    %p84 = por %p82, %p83
    %p85 = scmp.ne.s32.totalorder %s77, %s80
    %p86 = scmp.eq.s32.totalorder %s8, 0
    %p87 = por %p85, %p86
    %p88 = scmp.ne.s32.totalorder %s77, %s80
    %p89 = scmp.eq.s32.totalorder %s13, 1
    %p90 = por %p88, %p89
    %p91 = scmp.ne.s32.totalorder %s80, %s81
    %p92 = scmp.eq.s32.totalorder %s13, 0
    %p93 = por %p91, %p92
    %p94 = scmp.ne.s32.totalorder %s80, %s81
    %p95 = scmp.eq.s32.totalorder %s14, 1
    %p96 = por %p94, %p95
    %p98 = scmp.ne.s32.totalorder %s81, %s97
    %p99 = scmp.eq.s32.totalorder %s14, 0
    %p100 = por %p98, %p99
    %p101 = scmp.le.s32.totalorder 1, %s8
    %p102 = scmp.lt.s32.totalorder %s8, 3
    %p103 = pnand %p101, %p102
    %p104 = pneg %p103
    // Predicated region
    $region9: #{gume_forward.7} parent=5 // pred_check
      _
    $region10: #{gume_forward.7} parent=5 // pred_check_branch
      %106 = sbr.rel (%p103) target = $region12
    $region11: #{gume_forward.7} parent=5 // pred_region
      %s107 = ssub.s32 %s8, 1
      // Predicated region
      $region13: #{gume_forward.7} parent=11 // pred_check
        %p108 = pneg %p41
      $region14: #{gume_forward.7} parent=11 // pred_check_branch
        %110 = sbr.rel (%p108) target = $region16
      $region15: #{gume_forward.7} parent=11 // pred_region
        _
      $region16: #{gume_forward.7} parent=11 // pred_fallthru
        _
      // Predicated region
      $region17: #{gume_forward.7} parent=11 // pred_check
        %p111 = pneg %p67
      $region18: #{gume_forward.7} parent=11 // pred_check_branch
        %113 = sbr.rel (%p111) target = $region20
      $region19: #{gume_forward.7} parent=11 // pred_region
        %s114 = smul.u32 32, %s18
        %p115 = scmp.lt.s32.totalorder %s114, 31
        %s116 = scalar_select %p115, %s114, 31
        %s117 = smul.addr %s116, 2
        %s118 = smul.addr %s117, 4
        %s119 = scalar_lea.vmem %s1, %s118
        %s120 = smul.u32 32, %s18
      $region20: #{gume_forward.7} parent=11 // pred_fallthru
        _
    $region12: #{gume_forward.7} parent=5 // pred_fallthru
      _
    %p121 = scmp.lt.s32.totalorder %s8, 2
    // Predicated region
    $region21: #{gume_forward.7} parent=5 // pred_check
      %p122 = pneg %p121
    $region22: #{gume_forward.7} parent=5 // pred_check_branch
      %124 = sbr.rel (%p122) target = $region24
    $region23: #{gume_forward.7} parent=5 // pred_region
      _
    $region24: #{gume_forward.7} parent=5 // pred_fallthru
      _
    %p125 = scmp.le.s32.totalorder 1, %s8
    %p126 = scmp.lt.s32.totalorder %s8, 3
    %p127 = pnand %p125, %p126
    %p128 = pneg %p127
    // Predicated region
    $region25: #{gume_forward.7} parent=5 // pred_check
      _
    $region26: #{gume_forward.7} parent=5 // pred_check_branch
      %130 = sbr.rel (%p127) target = $region28
    $region27: #{gume_forward.7} parent=5 // pred_region
      %s131 = ssub.s32 %s8, 1
      %p132 = pneg %p41
      %p133 = pneg %p38
      %s134 = smul.u32 32, %s18
      %p135 = scmp.lt.s32.totalorder %s134, 31
      %s136 = scalar_select %p135, %s134, 31
      %s137 = smul.addr %s136, 2
      %s138 = smul.addr %s137, 4
      %s139 = scalar_lea.vmem %s1, %s138
      %p140 = pneg %p67
      %p141 = pneg %p64
      %p142 = pneg %p93
      %p143 = pneg %p90
      %s144 = smul.u32 32, %s18
      %p145 = scmp.lt.s32.totalorder %s144, 31
      %s146 = scalar_select %p145, %s144, 31
      %s147 = smul.addr %s146, 8
      %s148 = scalar_lea.vmem %s2, %s147
      %s149 = smul.u32 32, %s18
      %p150 = scmp.lt.s32.totalorder %s149, 31
      %s151 = scalar_select %p150, %s149, 31
      %s152 = smul.addr %s151, 2
      %s153 = smul.addr %s152, 4
      %s154 = scalar_lea.vmem %s1, %s153
      %s155 = smul.u32 32, %s18
      %s156 = smul.u32 32, %s18
      %p157 = scmp.lt.s32.totalorder %s156, 31
      %s158 = scalar_select %p157, %s156, 31
      %s159 = smul.addr %s158, 8
      %s160 = scalar_lea.vmem %s2, %s159
      %s161 = smul.u32 32, %s18
      %s163 = smul.u32 %s18, 256
      %p164 = scmp.eq.s32.totalorder %s17, 0
      %p165 = scmp.eq.s32.totalorder %s18, 0
      %p166 = pnand %p164, %p165
      %p167 = pneg %p166
      // Predicated region
      $region29: #{gume_forward.7} parent=27 // pred_check
        _
      $region30: #{gume_forward.7} parent=27 // pred_check_branch
        %169 = sbr.rel (%p166) target = $region32
      $region31: #{gume_forward.7} parent=27 // pred_region
        %v170 = vld [vmem:[%s0] sm:$0xf]
        %v171 = vld [vmem:[%s0 + $0x4] sm:$0xf]
        %v172 = vld [vmem:[%s0 + $0x8] sm:$0xf]
        %v173 = vld [vmem:[%s0 + $0xc] sm:$0xf]
        %v174 = vld [vmem:[%s0 + $0x10] sm:$0xf]
        %v175 = vld [vmem:[%s0 + $0x14] sm:$0xf]
        %v176 = vld [vmem:[%s0 + $0x18] sm:$0xf]
        %v177 = vld [vmem:[%s0 + $0x1c] sm:$0xf]
        %v178 = vld [vmem:[%s0 + $0x20] sm:$0xf]
        %v179 = vld [vmem:[%s0 + $0x24] sm:$0xf]
        %v180 = vld [vmem:[%s0 + $0x28] sm:$0xf]
        %v181 = vld [vmem:[%s0 + $0x2c] sm:$0xf]
        %v182 = vld [vmem:[%s0 + $0x30] sm:$0xf]
        %v183 = vld [vmem:[%s0 + $0x34] sm:$0xf]
        %v184 = vld [vmem:[%s0 + $0x38] sm:$0xf]
        %v185 = vld [vmem:[%s0 + $0x3c] sm:$0xf]
        %v186 = vld [vmem:[%s0 + $0x40] sm:$0xf]
        %v187 = vld [vmem:[%s0 + $0x44] sm:$0xf]
        %v188 = vld [vmem:[%s0 + $0x48] sm:$0xf]
        %v189 = vld [vmem:[%s0 + $0x4c] sm:$0xf]
        %v190 = vld [vmem:[%s0 + $0x50] sm:$0xf]
        %v191 = vld [vmem:[%s0 + $0x54] sm:$0xf]
        %v192 = vld [vmem:[%s0 + $0x58] sm:$0xf]
        %v193 = vld [vmem:[%s0 + $0x5c] sm:$0xf]
        %v194 = vld [vmem:[%s0 + $0x60] sm:$0xf]
        %v195 = vld [vmem:[%s0 + $0x64] sm:$0xf]
        %v196 = vld [vmem:[%s0 + $0x68] sm:$0xf]
        %v197 = vld [vmem:[%s0 + $0x6c] sm:$0xf]
        %v198 = vld [vmem:[%s0 + $0x70] sm:$0xf]
        %v199 = vld [vmem:[%s0 + $0x74] sm:$0xf]
        %v200 = vld [vmem:[%s0 + $0x78] sm:$0xf]
        %v201 = vld [vmem:[%s0 + $0x7c] sm:$0xf]
        %v234 = vunpack.c.l.b16 %v170
        %v235 = vunpack.c.l.b16 %v171
        %v236 = vunpack.c.l.b16 %v172
        %v237 = vunpack.c.l.b16 %v173
        %v238 = vunpack.c.l.b16 %v174
        %v239 = vunpack.c.l.b16 %v175
        %v240 = vunpack.c.l.b16 %v176
        %v241 = vunpack.c.l.b16 %v177
        %v242 = vunpack.c.l.b16 %v178
        %v243 = vunpack.c.l.b16 %v179
        %v244 = vunpack.c.l.b16 %v180
        %v245 = vunpack.c.l.b16 %v181
        %v246 = vunpack.c.l.b16 %v182
        %v247 = vunpack.c.l.b16 %v183
        %v248 = vunpack.c.l.b16 %v184
        %v249 = vunpack.c.l.b16 %v185
        %v250 = vunpack.c.l.b16 %v186
        %v251 = vunpack.c.l.b16 %v187
        %v252 = vunpack.c.l.b16 %v188
        %v253 = vunpack.c.l.b16 %v189
        %v254 = vunpack.c.l.b16 %v190
        %v255 = vunpack.c.l.b16 %v191
        %v256 = vunpack.c.l.b16 %v192
        %v257 = vunpack.c.l.b16 %v193
        %v258 = vunpack.c.l.b16 %v194
        %v259 = vunpack.c.l.b16 %v195
        %v260 = vunpack.c.l.b16 %v196
        %v261 = vunpack.c.l.b16 %v197
        %v262 = vunpack.c.l.b16 %v198
        %v263 = vunpack.c.l.b16 %v199
        %v264 = vunpack.c.l.b16 %v200
        %v265 = vunpack.c.l.b16 %v201
        %v266 = vpack.c.b16 %v235, %v234
        %v267 = vpack.c.b16 %v237, %v236
        %v268 = vpack.c.b16 %v239, %v238
        %v269 = vpack.c.b16 %v241, %v240
        %v270 = vpack.c.b16 %v243, %v242
        %v271 = vpack.c.b16 %v245, %v244
        %v272 = vpack.c.b16 %v247, %v246
        %v273 = vpack.c.b16 %v249, %v248
        %v274 = vpack.c.b16 %v251, %v250
        %v275 = vpack.c.b16 %v253, %v252
        %v276 = vpack.c.b16 %v255, %v254
        %v277 = vpack.c.b16 %v257, %v256
        %v278 = vpack.c.b16 %v259, %v258
        %v279 = vpack.c.b16 %v261, %v260
        %v280 = vpack.c.b16 %v263, %v262
        %v281 = vpack.c.b16 %v265, %v264
        %298 = vst [vmem:[#allocation2] sm:$0xff] %v266
        %299 = vst [vmem:[#allocation2 + $0x8] sm:$0xff] %v267
        %300 = vst [vmem:[#allocation2 + $0x10] sm:$0xff] %v268
        %301 = vst [vmem:[#allocation2 + $0x18] sm:$0xff] %v269
        %302 = vst [vmem:[#allocation2 + $0x20] sm:$0xff] %v270
        %303 = vst [vmem:[#allocation2 + $0x28] sm:$0xff] %v271
        %304 = vst [vmem:[#allocation2 + $0x30] sm:$0xff] %v272
        %305 = vst [vmem:[#allocation2 + $0x38] sm:$0xff] %v273
        %306 = vst [vmem:[#allocation2 + $0x40] sm:$0xff] %v274
        %307 = vst [vmem:[#allocation2 + $0x48] sm:$0xff] %v275
        %308 = vst [vmem:[#allocation2 + $0x50] sm:$0xff] %v276
        %309 = vst [vmem:[#allocation2 + $0x58] sm:$0xff] %v277
        %310 = vst [vmem:[#allocation2 + $0x60] sm:$0xff] %v278
        %311 = vst [vmem:[#allocation2 + $0x68] sm:$0xff] %v279
        %312 = vst [vmem:[#allocation2 + $0x70] sm:$0xff] %v280
        %313 = vst [vmem:[#allocation2 + $0x78] sm:$0xff] %v281
        %v314 = vld [vmem:[%s0] sm:$0xf]
        %v315 = vld [vmem:[%s0 + $0x4] sm:$0xf]
        %v316 = vld [vmem:[%s0 + $0x8] sm:$0xf]
        %v317 = vld [vmem:[%s0 + $0xc] sm:$0xf]
        %v318 = vld [vmem:[%s0 + $0x10] sm:$0xf]
        %v319 = vld [vmem:[%s0 + $0x14] sm:$0xf]
        %v320 = vld [vmem:[%s0 + $0x18] sm:$0xf]
        %v321 = vld [vmem:[%s0 + $0x1c] sm:$0xf]
        %v322 = vld [vmem:[%s0 + $0x20] sm:$0xf]
        %v323 = vld [vmem:[%s0 + $0x24] sm:$0xf]
        %v324 = vld [vmem:[%s0 + $0x28] sm:$0xf]
        %v325 = vld [vmem:[%s0 + $0x2c] sm:$0xf]
        %v326 = vld [vmem:[%s0 + $0x30] sm:$0xf]
        %v327 = vld [vmem:[%s0 + $0x34] sm:$0xf]
        %v328 = vld [vmem:[%s0 + $0x38] sm:$0xf]
        %v329 = vld [vmem:[%s0 + $0x3c] sm:$0xf]
        %v330 = vld [vmem:[%s0 + $0x40] sm:$0xf]
        %v331 = vld [vmem:[%s0 + $0x44] sm:$0xf]
        %v332 = vld [vmem:[%s0 + $0x48] sm:$0xf]
        %v333 = vld [vmem:[%s0 + $0x4c] sm:$0xf]
        %v334 = vld [vmem:[%s0 + $0x50] sm:$0xf]
        %v335 = vld [vmem:[%s0 + $0x54] sm:$0xf]
        %v336 = vld [vmem:[%s0 + $0x58] sm:$0xf]
        %v337 = vld [vmem:[%s0 + $0x5c] sm:$0xf]
        %v338 = vld [vmem:[%s0 + $0x60] sm:$0xf]
        %v339 = vld [vmem:[%s0 + $0x64] sm:$0xf]
        %v340 = vld [vmem:[%s0 + $0x68] sm:$0xf]
        %v341 = vld [vmem:[%s0 + $0x6c] sm:$0xf]
        %v342 = vld [vmem:[%s0 + $0x70] sm:$0xf]
        %v343 = vld [vmem:[%s0 + $0x74] sm:$0xf]
        %v344 = vld [vmem:[%s0 + $0x78] sm:$0xf]
        %v345 = vld [vmem:[%s0 + $0x7c] sm:$0xf]
        %v346 = vunpack.c.l.bf16 %v314
        %v347 = vunpack.c.l.bf16 %v315
        %v348 = vunpack.c.l.bf16 %v316
        %v349 = vunpack.c.l.bf16 %v317
        %v350 = vunpack.c.l.bf16 %v318
        %v351 = vunpack.c.l.bf16 %v319
        %v352 = vunpack.c.l.bf16 %v320
        %v353 = vunpack.c.l.bf16 %v321
        %v354 = vunpack.c.l.bf16 %v322
        %v355 = vunpack.c.l.bf16 %v323
        %v356 = vunpack.c.l.bf16 %v324
        %v357 = vunpack.c.l.bf16 %v325
        %v358 = vunpack.c.l.bf16 %v326
        %v359 = vunpack.c.l.bf16 %v327
        %v360 = vunpack.c.l.bf16 %v328
        %v361 = vunpack.c.l.bf16 %v329
        %v362 = vunpack.c.l.bf16 %v330
        %v363 = vunpack.c.l.bf16 %v331
        %v364 = vunpack.c.l.bf16 %v332
        %v365 = vunpack.c.l.bf16 %v333
        %v366 = vunpack.c.l.bf16 %v334
        %v367 = vunpack.c.l.bf16 %v335
        %v368 = vunpack.c.l.bf16 %v336
        %v369 = vunpack.c.l.bf16 %v337
        %v370 = vunpack.c.l.bf16 %v338
        %v371 = vunpack.c.l.bf16 %v339
        %v372 = vunpack.c.l.bf16 %v340
        %v373 = vunpack.c.l.bf16 %v341
        %v374 = vunpack.c.l.bf16 %v342
        %v375 = vunpack.c.l.bf16 %v343
        %v376 = vunpack.c.l.bf16 %v344
        %v377 = vunpack.c.l.bf16 %v345
        %378 = vst [vmem:[#allocation3] sm:$0xff] %v346
        %379 = vst [vmem:[#allocation3 + $0x8] sm:$0xff] %v347
        %380 = vst [vmem:[#allocation3 + $0x10] sm:$0xff] %v348
        %381 = vst [vmem:[#allocation3 + $0x18] sm:$0xff] %v349
        %382 = vst [vmem:[#allocation3 + $0x20] sm:$0xff] %v350
        %383 = vst [vmem:[#allocation3 + $0x28] sm:$0xff] %v351
        %384 = vst [vmem:[#allocation3 + $0x30] sm:$0xff] %v352
        %385 = vst [vmem:[#allocation3 + $0x38] sm:$0xff] %v353
        %386 = vst [vmem:[#allocation3 + $0x40] sm:$0xff] %v354
        %387 = vst [vmem:[#allocation3 + $0x48] sm:$0xff] %v355
        %388 = vst [vmem:[#allocation3 + $0x50] sm:$0xff] %v356
        %389 = vst [vmem:[#allocation3 + $0x58] sm:$0xff] %v357
        %390 = vst [vmem:[#allocation3 + $0x60] sm:$0xff] %v358
        %391 = vst [vmem:[#allocation3 + $0x68] sm:$0xff] %v359
        %392 = vst [vmem:[#allocation3 + $0x70] sm:$0xff] %v360
        %393 = vst [vmem:[#allocation3 + $0x78] sm:$0xff] %v361
        %394 = vst [vmem:[#allocation3 + $0x80] sm:$0xff] %v362
        %395 = vst [vmem:[#allocation3 + $0x88] sm:$0xff] %v363
        %396 = vst [vmem:[#allocation3 + $0x90] sm:$0xff] %v364
        %397 = vst [vmem:[#allocation3 + $0x98] sm:$0xff] %v365
        %398 = vst [vmem:[#allocation3 + $0xa0] sm:$0xff] %v366
        %399 = vst [vmem:[#allocation3 + $0xa8] sm:$0xff] %v367
        %400 = vst [vmem:[#allocation3 + $0xb0] sm:$0xff] %v368
        %401 = vst [vmem:[#allocation3 + $0xb8] sm:$0xff] %v369
        %402 = vst [vmem:[#allocation3 + $0xc0] sm:$0xff] %v370
        %403 = vst [vmem:[#allocation3 + $0xc8] sm:$0xff] %v371
        %404 = vst [vmem:[#allocation3 + $0xd0] sm:$0xff] %v372
        %405 = vst [vmem:[#allocation3 + $0xd8] sm:$0xff] %v373
        %406 = vst [vmem:[#allocation3 + $0xe0] sm:$0xff] %v374
        %407 = vst [vmem:[#allocation3 + $0xe8] sm:$0xff] %v375
        %408 = vst [vmem:[#allocation3 + $0xf0] sm:$0xff] %v376
        %409 = vst [vmem:[#allocation3 + $0xf8] sm:$0xff] %v377
      $region32: #{gume_forward.7} parent=27 // pred_fallthru
        _
      %p410 = scmp.lt.s32.totalorder %s17, 0
      %s411 = ssub.s32 0, %s17
      %s412 = scalar_select %p410, %s411, %s17
      %s413 = sand.u32 %s412, 1
      %s414 = ssub.s32 0, %s413
      %s415 = scalar_select %p410, %s414, %s413
      %s416 = smul.u32 %s415, 256
      %s417 = ssub.s32 1, %s415
      %s418 = smul.u32 %s417, 256
      %v419 = vld [vmem:[%s154] sm:$0xff]
      %v420 = vld [vmem:[%s154 + $0x8] sm:$0xff]
      %v421 = vld [vmem:[%s154 + $0x10] sm:$0xff]
      %v422 = vld [vmem:[%s154 + $0x18] sm:$0xff]
      %v423 = vld [vmem:[%s154 + $0x20] sm:$0xff]
      %v424 = vld [vmem:[%s154 + $0x28] sm:$0xff]
      %v425 = vld [vmem:[%s154 + $0x30] sm:$0xff]
      %v426 = vld [vmem:[%s154 + $0x38] sm:$0xff]
      %v427 = vld [vmem:[%s154 + $0x40] sm:$0xff]
      %v428 = vld [vmem:[%s154 + $0x48] sm:$0xff]
      %v429 = vld [vmem:[%s154 + $0x50] sm:$0xff]
      %v430 = vld [vmem:[%s154 + $0x58] sm:$0xff]
      %v431 = vld [vmem:[%s154 + $0x60] sm:$0xff]
      %v432 = vld [vmem:[%s154 + $0x68] sm:$0xff]
      %v433 = vld [vmem:[%s154 + $0x70] sm:$0xff]
      %v434 = vld [vmem:[%s154 + $0x78] sm:$0xff]
      %v435 = vld [vmem:[%s154 + $0x80] sm:$0xff]
      %v436 = vld [vmem:[%s154 + $0x88] sm:$0xff]
      %v437 = vld [vmem:[%s154 + $0x90] sm:$0xff]
      %v438 = vld [vmem:[%s154 + $0x98] sm:$0xff]
      %v439 = vld [vmem:[%s154 + $0xa0] sm:$0xff]
      %v440 = vld [vmem:[%s154 + $0xa8] sm:$0xff]
      %v441 = vld [vmem:[%s154 + $0xb0] sm:$0xff]
      %v442 = vld [vmem:[%s154 + $0xb8] sm:$0xff]
      %v443 = vld [vmem:[%s154 + $0xc0] sm:$0xff]
      %v444 = vld [vmem:[%s154 + $0xc8] sm:$0xff]
      %v445 = vld [vmem:[%s154 + $0xd0] sm:$0xff]
      %v446 = vld [vmem:[%s154 + $0xd8] sm:$0xff]
      %v447 = vld [vmem:[%s154 + $0xe0] sm:$0xff]
      %v448 = vld [vmem:[%s154 + $0xe8] sm:$0xff]
      %v449 = vld [vmem:[%s154 + $0xf0] sm:$0xff]
      %v450 = vld [vmem:[%s154 + $0xf8] sm:$0xff]
      %s451 = sshra.s32 %s416, 4
      %s452 = sand.u32 %s416, 15
      %s453 = smul.addr %s451, 8
      %s454 = scalar_lea.vmem [#allocation2], %s453
      %v455 = vld [vmem:[%s454] sm:$0xff]
      %v456 = vld [vmem:[%s454 + $0x8] sm:$0xff]
      %v457 = vld [vmem:[%s454 + $0x10] sm:$0xff]
      %v458 = vld [vmem:[%s454 + $0x18] sm:$0xff]
      %v459 = vld [vmem:[%s454 + $0x20] sm:$0xff]
      %v460 = vld [vmem:[%s454 + $0x28] sm:$0xff]
      %v461 = vld [vmem:[%s454 + $0x30] sm:$0xff]
      %v462 = vld [vmem:[%s454 + $0x38] sm:$0xff]
      %v463 = vld [vmem:[%s454 + $0x40] sm:$0xff]
      %v464 = vld [vmem:[%s454 + $0x48] sm:$0xff]
      %v465 = vld [vmem:[%s454 + $0x50] sm:$0xff]
      %v466 = vld [vmem:[%s454 + $0x58] sm:$0xff]
      %v467 = vld [vmem:[%s454 + $0x60] sm:$0xff]
      %v468 = vld [vmem:[%s454 + $0x68] sm:$0xff]
      %v469 = vld [vmem:[%s454 + $0x70] sm:$0xff]
      %v470 = vld [vmem:[%s454 + $0x78] sm:$0xff]
      %v503 = vunpack.c.l.b16 %v419
      %v504 = vunpack.c.h.b16 %v419
      %v505 = vunpack.c.l.b16 %v420
      %v506 = vunpack.c.h.b16 %v420
      %v507 = vunpack.c.l.b16 %v421
      %v508 = vunpack.c.h.b16 %v421
      %v509 = vunpack.c.l.b16 %v422
      %v510 = vunpack.c.h.b16 %v422
      %v511 = vunpack.c.l.b16 %v423
      %v512 = vunpack.c.h.b16 %v423
      %v513 = vunpack.c.l.b16 %v424
      %v514 = vunpack.c.h.b16 %v424
      %v515 = vunpack.c.l.b16 %v425
      %v516 = vunpack.c.h.b16 %v425
      %v517 = vunpack.c.l.b16 %v426
      %v518 = vunpack.c.h.b16 %v426
      %v519 = vunpack.c.l.b16 %v427
      %v520 = vunpack.c.h.b16 %v427
      %v521 = vunpack.c.l.b16 %v428
      %v522 = vunpack.c.h.b16 %v428
      %v523 = vunpack.c.l.b16 %v429
      %v524 = vunpack.c.h.b16 %v429
      %v525 = vunpack.c.l.b16 %v430
      %v526 = vunpack.c.h.b16 %v430
      %v527 = vunpack.c.l.b16 %v431
      %v528 = vunpack.c.h.b16 %v431
      %v529 = vunpack.c.l.b16 %v432
      %v530 = vunpack.c.h.b16 %v432
      %v531 = vunpack.c.l.b16 %v433
      %v532 = vunpack.c.h.b16 %v433
      %v533 = vunpack.c.l.b16 %v434
      %v534 = vunpack.c.h.b16 %v434
      %v535 = vunpack.c.l.b16 %v435
      %v536 = vunpack.c.h.b16 %v435
      %v537 = vunpack.c.l.b16 %v436
      %v538 = vunpack.c.h.b16 %v436
      %v539 = vunpack.c.l.b16 %v437
      %v540 = vunpack.c.h.b16 %v437
      %v541 = vunpack.c.l.b16 %v438
      %v542 = vunpack.c.h.b16 %v438
      %v543 = vunpack.c.l.b16 %v439
      %v544 = vunpack.c.h.b16 %v439
      %v545 = vunpack.c.l.b16 %v440
      %v546 = vunpack.c.h.b16 %v440
      %v547 = vunpack.c.l.b16 %v441
      %v548 = vunpack.c.h.b16 %v441
      %v549 = vunpack.c.l.b16 %v442
      %v550 = vunpack.c.h.b16 %v442
      %v551 = vunpack.c.l.b16 %v443
      %v552 = vunpack.c.h.b16 %v443
      %v553 = vunpack.c.l.b16 %v444
      %v554 = vunpack.c.h.b16 %v444
      %v555 = vunpack.c.l.b16 %v445
      %v556 = vunpack.c.h.b16 %v445
      %v557 = vunpack.c.l.b16 %v446
      %v558 = vunpack.c.h.b16 %v446
      %v559 = vunpack.c.l.b16 %v447
      %v560 = vunpack.c.h.b16 %v447
      %v561 = vunpack.c.l.b16 %v448
      %v562 = vunpack.c.h.b16 %v448
      %v563 = vunpack.c.l.b16 %v449
      %v564 = vunpack.c.h.b16 %v449
      %v565 = vunpack.c.l.b16 %v450
      %v566 = vunpack.c.h.b16 %v450
      %v567 = vpack.c.b16 %v505, %v503
      %v568 = vpack.c.b16 %v506, %v504
      %v569 = vpack.c.b16 %v509, %v507
      %v570 = vpack.c.b16 %v510, %v508
      %v571 = vpack.c.b16 %v513, %v511
      %v572 = vpack.c.b16 %v514, %v512
      %v573 = vpack.c.b16 %v517, %v515
      %v574 = vpack.c.b16 %v518, %v516
      %v575 = vpack.c.b16 %v521, %v519
      %v576 = vpack.c.b16 %v522, %v520
      %v577 = vpack.c.b16 %v525, %v523
      %v578 = vpack.c.b16 %v526, %v524
      %v579 = vpack.c.b16 %v529, %v527
      %v580 = vpack.c.b16 %v530, %v528
      %v581 = vpack.c.b16 %v533, %v531
      %v582 = vpack.c.b16 %v534, %v532
      %v583 = vpack.c.b16 %v537, %v535
      %v584 = vpack.c.b16 %v538, %v536
      %v585 = vpack.c.b16 %v541, %v539
      %v586 = vpack.c.b16 %v542, %v540
      %v587 = vpack.c.b16 %v545, %v543
      %v588 = vpack.c.b16 %v546, %v544
      %v589 = vpack.c.b16 %v549, %v547
      %v590 = vpack.c.b16 %v550, %v548
      %v591 = vpack.c.b16 %v553, %v551
      %v592 = vpack.c.b16 %v554, %v552
      %v593 = vpack.c.b16 %v557, %v555
      %v594 = vpack.c.b16 %v558, %v556
      %v595 = vpack.c.b16 %v561, %v559
      %v596 = vpack.c.b16 %v562, %v560
      %v597 = vpack.c.b16 %v565, %v563
      %v598 = vpack.c.b16 %v566, %v564
      %631 = vmatprep.subr.bf16.mxu0 0
      %632 = vmatpush1.bf16.msra.mxu0 %v455
      %633 = vmatprep.subr.bf16.mxu0 0
      %634 = vmatpush1.bf16.msra.mxu0 %v456
      %635 = vmatprep.subr.bf16.mxu0 0
      %636 = vmatpush1.bf16.msra.mxu0 %v457
      %637 = vmatprep.subr.bf16.mxu0 0
      %638 = vmatpush1.bf16.msra.mxu0 %v458
      %639 = vmatprep.subr.bf16.mxu0 0
      %640 = vmatpush1.bf16.msra.mxu0 %v459
      %641 = vmatprep.subr.bf16.mxu0 0
      %642 = vmatpush1.bf16.msra.mxu0 %v460
      %643 = vmatprep.subr.bf16.mxu0 0
      %644 = vmatpush1.bf16.msra.mxu0 %v461
      %645 = vmatprep.subr.bf16.mxu0 0
      %646 = vmatpush1.bf16.msra.mxu0 %v462
      %647 = vmatprep.subr.bf16.mxu0 0
      %648 = vmatpush1.bf16.msra.mxu0 %v463
      %649 = vmatprep.subr.bf16.mxu0 0
      %650 = vmatpush1.bf16.msra.mxu0 %v464
      %651 = vmatprep.subr.bf16.mxu0 0
      %652 = vmatpush1.bf16.msra.mxu0 %v465
      %653 = vmatprep.subr.bf16.mxu0 0
      %654 = vmatpush1.bf16.msra.mxu0 %v466
      %655 = vmatprep.subr.bf16.mxu0 0
      %656 = vmatpush1.bf16.msra.mxu0 %v467
      %657 = vmatprep.subr.bf16.mxu0 0
      %658 = vmatpush1.bf16.msra.mxu0 %v468
      %659 = vmatprep.subr.bf16.mxu0 0
      %660 = vmatpush1.bf16.msra.mxu0 %v469
      %661 = vmatprep.subr.bf16.mxu0 0
      %662 = vmatpush1.bf16.msra.mxu0 %v470
      %663 = vmatprep.mubr.bf16.mxu0 %v568
      %664 = vmatmul.mubr.bf16.gmra.mrb[0].mxu0 %v567
      %v665 = vpop.f32.mrb[0].mxu0
      %v666 = vadd.f32 0.0, %v665
      %v667 = vpop.f32.mrb[0].mxu0
      %v668 = vpop.f32.mrb[0].mxu0
      %v669 = vadd.f32 0.0, %v668
      %v670 = vpop.f32.mrb[0].mxu0
      %671 = vmatprep.mubr.bf16.mxu0 %v570
      %672 = vmatmul.mubr.bf16.gmra.mrb[0].mxu0 %v569
      %v673 = vpop.f32.mrb[0].mxu0
      %v674 = vadd.f32 0.0, %v673
      %v675 = vpop.f32.mrb[0].mxu0
      %v676 = vpop.f32.mrb[0].mxu0
      %v677 = vadd.f32 0.0, %v676
      %v678 = vpop.f32.mrb[0].mxu0
      %679 = vmatprep.mubr.bf16.mxu0 %v572
      %680 = vmatmul.mubr.bf16.gmra.mrb[0].mxu0 %v571
      %v681 = vpop.f32.mrb[0].mxu0
      %v682 = vadd.f32 0.0, %v681
      %v683 = vpop.f32.mrb[0].mxu0
      %v684 = vpop.f32.mrb[0].mxu0
      %v685 = vadd.f32 0.0, %v684
      %v686 = vpop.f32.mrb[0].mxu0
      %687 = vmatprep.mubr.bf16.mxu0 %v574
      %688 = vmatmul.mubr.bf16.gmra.mrb[0].mxu0 %v573
      %v689 = vpop.f32.mrb[0].mxu0
      %v690 = vadd.f32 0.0, %v689
      %v691 = vpop.f32.mrb[0].mxu0
      %v692 = vpop.f32.mrb[0].mxu0
      %v693 = vadd.f32 0.0, %v692
      %v694 = vpop.f32.mrb[0].mxu0
      %695 = vmatprep.mubr.bf16.mxu0 %v576
      %696 = vmatmul.mubr.bf16.gmra.mrb[0].mxu0 %v575
      %v697 = vpop.f32.mrb[0].mxu0
      %v698 = vadd.f32 0.0, %v697
      %v699 = vpop.f32.mrb[0].mxu0
      %v700 = vpop.f32.mrb[0].mxu0
      %v701 = vadd.f32 0.0, %v700
      %v702 = vpop.f32.mrb[0].mxu0
      %703 = vmatprep.mubr.bf16.mxu0 %v578
      %704 = vmatmul.mubr.bf16.gmra.mrb[0].mxu0 %v577
      %v705 = vpop.f32.mrb[0].mxu0
      %v706 = vadd.f32 0.0, %v705
      %v707 = vpop.f32.mrb[0].mxu0
      %v708 = vpop.f32.mrb[0].mxu0
      %v709 = vadd.f32 0.0, %v708
      %v710 = vpop.f32.mrb[0].mxu0
      %711 = vmatprep.mubr.bf16.mxu0 %v580
      %712 = vmatmul.mubr.bf16.gmra.mrb[0].mxu0 %v579
      %v713 = vpop.f32.mrb[0].mxu0
      %v714 = vadd.f32 0.0, %v713
      %v715 = vpop.f32.mrb[0].mxu0
      %v716 = vpop.f32.mrb[0].mxu0
      %v717 = vadd.f32 0.0, %v716
      %v718 = vpop.f32.mrb[0].mxu0
      %719 = vmatprep.mubr.bf16.mxu0 %v582
      %720 = vmatmul.mubr.bf16.gmra.mrb[0].mxu0 %v581
      %v721 = vpop.f32.mrb[0].mxu0
      %v722 = vadd.f32 0.0, %v721
      %v723 = vpop.f32.mrb[0].mxu0
      %v724 = vpop.f32.mrb[0].mxu0
      %v725 = vadd.f32 0.0, %v724
      %v726 = vpop.f32.mrb[0].mxu0
      %727 = vmatprep.mubr.bf16.mxu0 %v584
      %728 = vmatmul.mubr.bf16.gmra.mrb[0].mxu0 %v583
      %v729 = vpop.f32.mrb[0].mxu0
      %v730 = vadd.f32 0.0, %v729
      %v731 = vpop.f32.mrb[0].mxu0
      %v732 = vpop.f32.mrb[0].mxu0
      %v733 = vadd.f32 0.0, %v732
      %v734 = vpop.f32.mrb[0].mxu0
      %735 = vmatprep.mubr.bf16.mxu0 %v586
      %736 = vmatmul.mubr.bf16.gmra.mrb[0].mxu0 %v585
      %v737 = vpop.f32.mrb[0].mxu0
      %v738 = vadd.f32 0.0, %v737
      %v739 = vpop.f32.mrb[0].mxu0
      %v740 = vpop.f32.mrb[0].mxu0
      %v741 = vadd.f32 0.0, %v740
      %v742 = vpop.f32.mrb[0].mxu0
      %743 = vmatprep.mubr.bf16.mxu0 %v588
      %744 = vmatmul.mubr.bf16.gmra.mrb[0].mxu0 %v587
      %v745 = vpop.f32.mrb[0].mxu0
      %v746 = vadd.f32 0.0, %v745
      %v747 = vpop.f32.mrb[0].mxu0
      %v748 = vpop.f32.mrb[0].mxu0
      %v749 = vadd.f32 0.0, %v748
      %v750 = vpop.f32.mrb[0].mxu0
      %751 = vmatprep.mubr.bf16.mxu0 %v590
      %752 = vmatmul.mubr.bf16.gmra.mrb[0].mxu0 %v589
      %v753 = vpop.f32.mrb[0].mxu0
      %v754 = vadd.f32 0.0, %v753
      %v755 = vpop.f32.mrb[0].mxu0
      %v756 = vpop.f32.mrb[0].mxu0
      %v757 = vadd.f32 0.0, %v756
      %v758 = vpop.f32.mrb[0].mxu0
      %759 = vmatprep.mubr.bf16.mxu0 %v592
      %760 = vmatmul.mubr.bf16.gmra.mrb[0].mxu0 %v591
      %v761 = vpop.f32.mrb[0].mxu0
      %v762 = vadd.f32 0.0, %v761
      %v763 = vpop.f32.mrb[0].mxu0
      %v764 = vpop.f32.mrb[0].mxu0
      %v765 = vadd.f32 0.0, %v764
      %v766 = vpop.f32.mrb[0].mxu0
      %767 = vmatprep.mubr.bf16.mxu0 %v594
      %768 = vmatmul.mubr.bf16.gmra.mrb[0].mxu0 %v593
      %v769 = vpop.f32.mrb[0].mxu0
      %v770 = vadd.f32 0.0, %v769
      %v771 = vpop.f32.mrb[0].mxu0
      %v772 = vpop.f32.mrb[0].mxu0
      %v773 = vadd.f32 0.0, %v772
      %v774 = vpop.f32.mrb[0].mxu0
      %775 = vmatprep.mubr.bf16.mxu0 %v596
      %776 = vmatmul.mubr.bf16.gmra.mrb[0].mxu0 %v595
      %v777 = vpop.f32.mrb[0].mxu0
      %v778 = vadd.f32 0.0, %v777
      %v779 = vpop.f32.mrb[0].mxu0
      %v780 = vpop.f32.mrb[0].mxu0
      %v781 = vadd.f32 0.0, %v780
      %v782 = vpop.f32.mrb[0].mxu0
      %783 = vmatprep.mubr.bf16.mxu0 %v598
      %784 = vmatmul.mubr.bf16.gmra.mrb[0].mxu0 %v597
      %v785 = vpop.f32.mrb[0].mxu0
      %v786 = vadd.f32 0.0, %v785
      %v787 = vpop.f32.mrb[0].mxu0
      %v788 = vpop.f32.mrb[0].mxu0
      %v789 = vadd.f32 0.0, %v788
      %v790 = vpop.f32.mrb[0].mxu0
      %791 = vdwg.mxu0
      %v792 = vpack.c.bf16 %v669, %v666
      %v793 = vpack.c.bf16 %v677, %v674
      %v794 = vpack.c.bf16 %v685, %v682
      %v795 = vpack.c.bf16 %v693, %v690
      %v796 = vpack.c.bf16 %v701, %v698
      %v797 = vpack.c.bf16 %v709, %v706
      %v798 = vpack.c.bf16 %v717, %v714
      %v799 = vpack.c.bf16 %v725, %v722
      %v800 = vpack.c.bf16 %v733, %v730
      %v801 = vpack.c.bf16 %v741, %v738
      %v802 = vpack.c.bf16 %v749, %v746
      %v803 = vpack.c.bf16 %v757, %v754
      %v804 = vpack.c.bf16 %v765, %v762
      %v805 = vpack.c.bf16 %v773, %v770
      %v806 = vpack.c.bf16 %v781, %v778
      %v807 = vpack.c.bf16 %v789, %v786
      %s808 = sadd.s32 %s418, %s163
      %s809 = sshra.s32 %s808, 4
      %s810 = sand.u32 %s808, 15
      %s811 = smul.addr %s809, 8
      %s812 = scalar_lea.vmem [#allocation2], %s811
      %813 = vst [vmem:[%s812] sm:$0xff] %v792
      %814 = vst [vmem:[%s812 + $0x8] sm:$0xff] %v793
      %815 = vst [vmem:[%s812 + $0x10] sm:$0xff] %v794
      %816 = vst [vmem:[%s812 + $0x18] sm:$0xff] %v795
      %817 = vst [vmem:[%s812 + $0x20] sm:$0xff] %v796
      %818 = vst [vmem:[%s812 + $0x28] sm:$0xff] %v797
      %819 = vst [vmem:[%s812 + $0x30] sm:$0xff] %v798
      %820 = vst [vmem:[%s812 + $0x38] sm:$0xff] %v799
      %821 = vst [vmem:[%s812 + $0x40] sm:$0xff] %v800
      %822 = vst [vmem:[%s812 + $0x48] sm:$0xff] %v801
      %823 = vst [vmem:[%s812 + $0x50] sm:$0xff] %v802
      %824 = vst [vmem:[%s812 + $0x58] sm:$0xff] %v803
      %825 = vst [vmem:[%s812 + $0x60] sm:$0xff] %v804
      %826 = vst [vmem:[%s812 + $0x68] sm:$0xff] %v805
      %827 = vst [vmem:[%s812 + $0x70] sm:$0xff] %v806
      %828 = vst [vmem:[%s812 + $0x78] sm:$0xff] %v807
      %s829 = scalar_lea.vmem [#allocation3], %s163
      %v830 = vld [vmem:[%s829] sm:$0xff]
      %v831 = vld [vmem:[%s829 + $0x8] sm:$0xff]
      %v832 = vld [vmem:[%s829 + $0x10] sm:$0xff]
      %v833 = vld [vmem:[%s829 + $0x18] sm:$0xff]
      %v834 = vld [vmem:[%s829 + $0x20] sm:$0xff]
      %v835 = vld [vmem:[%s829 + $0x28] sm:$0xff]
      %v836 = vld [vmem:[%s829 + $0x30] sm:$0xff]
      %v837 = vld [vmem:[%s829 + $0x38] sm:$0xff]
      %v838 = vld [vmem:[%s829 + $0x40] sm:$0xff]
      %v839 = vld [vmem:[%s829 + $0x48] sm:$0xff]
      %v840 = vld [vmem:[%s829 + $0x50] sm:$0xff]
      %v841 = vld [vmem:[%s829 + $0x58] sm:$0xff]
      %v842 = vld [vmem:[%s829 + $0x60] sm:$0xff]
      %v843 = vld [vmem:[%s829 + $0x68] sm:$0xff]
      %v844 = vld [vmem:[%s829 + $0x70] sm:$0xff]
      %v845 = vld [vmem:[%s829 + $0x78] sm:$0xff]
      %v846 = vld [vmem:[%s829 + $0x80] sm:$0xff]
      %v847 = vld [vmem:[%s829 + $0x88] sm:$0xff]
      %v848 = vld [vmem:[%s829 + $0x90] sm:$0xff]
      %v849 = vld [vmem:[%s829 + $0x98] sm:$0xff]
      %v850 = vld [vmem:[%s829 + $0xa0] sm:$0xff]
      %v851 = vld [vmem:[%s829 + $0xa8] sm:$0xff]
      %v852 = vld [vmem:[%s829 + $0xb0] sm:$0xff]
      %v853 = vld [vmem:[%s829 + $0xb8] sm:$0xff]
      %v854 = vld [vmem:[%s829 + $0xc0] sm:$0xff]
      %v855 = vld [vmem:[%s829 + $0xc8] sm:$0xff]
      %v856 = vld [vmem:[%s829 + $0xd0] sm:$0xff]
      %v857 = vld [vmem:[%s829 + $0xd8] sm:$0xff]
      %v858 = vld [vmem:[%s829 + $0xe0] sm:$0xff]
      %v859 = vld [vmem:[%s829 + $0xe8] sm:$0xff]
      %v860 = vld [vmem:[%s829 + $0xf0] sm:$0xff]
      %v861 = vld [vmem:[%s829 + $0xf8] sm:$0xff]
      %v862 = vadd.f32 %v830, %v666
      %v863 = vadd.f32 %v831, %v669
      %v864 = vadd.f32 %v832, %v674
      %v865 = vadd.f32 %v833, %v677
      %v866 = vadd.f32 %v834, %v682
      %v867 = vadd.f32 %v835, %v685
      %v868 = vadd.f32 %v836, %v690
      %v869 = vadd.f32 %v837, %v693
      %v870 = vadd.f32 %v838, %v698
      %v871 = vadd.f32 %v839, %v701
      %v872 = vadd.f32 %v840, %v706
      %v873 = vadd.f32 %v841, %v709
      %v874 = vadd.f32 %v842, %v714
      %v875 = vadd.f32 %v843, %v717
      %v876 = vadd.f32 %v844, %v722
      %v877 = vadd.f32 %v845, %v725
      %v878 = vadd.f32 %v846, %v730
      %v879 = vadd.f32 %v847, %v733
      %v880 = vadd.f32 %v848, %v738
      %v881 = vadd.f32 %v849, %v741
      %v882 = vadd.f32 %v850, %v746
      %v883 = vadd.f32 %v851, %v749
      %v884 = vadd.f32 %v852, %v754
      %v885 = vadd.f32 %v853, %v757
      %v886 = vadd.f32 %v854, %v762
      %v887 = vadd.f32 %v855, %v765
      %v888 = vadd.f32 %v856, %v770
      %v889 = vadd.f32 %v857, %v773
      %v890 = vadd.f32 %v858, %v778
      %v891 = vadd.f32 %v859, %v781
      %v892 = vadd.f32 %v860, %v786
      %v893 = vadd.f32 %v861, %v789
      %894 = vst [vmem:[%s829] sm:$0xff] %v862
      %895 = vst [vmem:[%s829 + $0x8] sm:$0xff] %v863
      %896 = vst [vmem:[%s829 + $0x10] sm:$0xff] %v864
      %897 = vst [vmem:[%s829 + $0x18] sm:$0xff] %v865
      %898 = vst [vmem:[%s829 + $0x20] sm:$0xff] %v866
      %899 = vst [vmem:[%s829 + $0x28] sm:$0xff] %v867
      %900 = vst [vmem:[%s829 + $0x30] sm:$0xff] %v868
      %901 = vst [vmem:[%s829 + $0x38] sm:$0xff] %v869
      %902 = vst [vmem:[%s829 + $0x40] sm:$0xff] %v870
      %903 = vst [vmem:[%s829 + $0x48] sm:$0xff] %v871
      %904 = vst [vmem:[%s829 + $0x50] sm:$0xff] %v872
      %905 = vst [vmem:[%s829 + $0x58] sm:$0xff] %v873
      %906 = vst [vmem:[%s829 + $0x60] sm:$0xff] %v874
      %907 = vst [vmem:[%s829 + $0x68] sm:$0xff] %v875
      %908 = vst [vmem:[%s829 + $0x70] sm:$0xff] %v876
      %909 = vst [vmem:[%s829 + $0x78] sm:$0xff] %v877
      %910 = vst [vmem:[%s829 + $0x80] sm:$0xff] %v878
      %911 = vst [vmem:[%s829 + $0x88] sm:$0xff] %v879
      %912 = vst [vmem:[%s829 + $0x90] sm:$0xff] %v880
      %913 = vst [vmem:[%s829 + $0x98] sm:$0xff] %v881
      %914 = vst [vmem:[%s829 + $0xa0] sm:$0xff] %v882
      %915 = vst [vmem:[%s829 + $0xa8] sm:$0xff] %v883
      %916 = vst [vmem:[%s829 + $0xb0] sm:$0xff] %v884
      %917 = vst [vmem:[%s829 + $0xb8] sm:$0xff] %v885
      %918 = vst [vmem:[%s829 + $0xc0] sm:$0xff] %v886
      %919 = vst [vmem:[%s829 + $0xc8] sm:$0xff] %v887
      %920 = vst [vmem:[%s829 + $0xd0] sm:$0xff] %v888
      %921 = vst [vmem:[%s829 + $0xd8] sm:$0xff] %v889
      %922 = vst [vmem:[%s829 + $0xe0] sm:$0xff] %v890
      %923 = vst [vmem:[%s829 + $0xe8] sm:$0xff] %v891
      %924 = vst [vmem:[%s829 + $0xf0] sm:$0xff] %v892
      %925 = vst [vmem:[%s829 + $0xf8] sm:$0xff] %v893
      %p926 = scmp.eq.s32.totalorder %s17, 1
      // Predicated region
      $region33: #{gume_forward.7} parent=27 // pred_check
        %p927 = pneg %p926
      $region34: #{gume_forward.7} parent=27 // pred_check_branch
        %929 = sbr.rel (%p927) target = $region36
      $region35: #{gume_forward.7} parent=27 // pred_region
        %v930 = vld [vmem:[%s829] sm:$0xff]
        %v931 = vld [vmem:[%s829 + $0x8] sm:$0xff]
        %v932 = vld [vmem:[%s829 + $0x10] sm:$0xff]
        %v933 = vld [vmem:[%s829 + $0x18] sm:$0xff]
        %v934 = vld [vmem:[%s829 + $0x20] sm:$0xff]
        %v935 = vld [vmem:[%s829 + $0x28] sm:$0xff]
        %v936 = vld [vmem:[%s829 + $0x30] sm:$0xff]
        %v937 = vld [vmem:[%s829 + $0x38] sm:$0xff]
        %v938 = vld [vmem:[%s829 + $0x40] sm:$0xff]
        %v939 = vld [vmem:[%s829 + $0x48] sm:$0xff]
        %v940 = vld [vmem:[%s829 + $0x50] sm:$0xff]
        %v941 = vld [vmem:[%s829 + $0x58] sm:$0xff]
        %v942 = vld [vmem:[%s829 + $0x60] sm:$0xff]
        %v943 = vld [vmem:[%s829 + $0x68] sm:$0xff]
        %v944 = vld [vmem:[%s829 + $0x70] sm:$0xff]
        %v945 = vld [vmem:[%s829 + $0x78] sm:$0xff]
        %v946 = vld [vmem:[%s829 + $0x80] sm:$0xff]
        %v947 = vld [vmem:[%s829 + $0x88] sm:$0xff]
        %v948 = vld [vmem:[%s829 + $0x90] sm:$0xff]
        %v949 = vld [vmem:[%s829 + $0x98] sm:$0xff]
        %v950 = vld [vmem:[%s829 + $0xa0] sm:$0xff]
        %v951 = vld [vmem:[%s829 + $0xa8] sm:$0xff]
        %v952 = vld [vmem:[%s829 + $0xb0] sm:$0xff]
        %v953 = vld [vmem:[%s829 + $0xb8] sm:$0xff]
        %v954 = vld [vmem:[%s829 + $0xc0] sm:$0xff]
        %v955 = vld [vmem:[%s829 + $0xc8] sm:$0xff]
        %v956 = vld [vmem:[%s829 + $0xd0] sm:$0xff]
        %v957 = vld [vmem:[%s829 + $0xd8] sm:$0xff]
        %v958 = vld [vmem:[%s829 + $0xe0] sm:$0xff]
        %v959 = vld [vmem:[%s829 + $0xe8] sm:$0xff]
        %v960 = vld [vmem:[%s829 + $0xf0] sm:$0xff]
        %v961 = vld [vmem:[%s829 + $0xf8] sm:$0xff]
        %v962 = vmul.f32 %v930, 0.33333334
        %v963 = vmul.f32 %v931, 0.33333334
        %v964 = vmul.f32 %v932, 0.33333334
        %v965 = vmul.f32 %v933, 0.33333334
        %v966 = vmul.f32 %v934, 0.33333334
        %v967 = vmul.f32 %v935, 0.33333334
        %v968 = vmul.f32 %v936, 0.33333334
        %v969 = vmul.f32 %v937, 0.33333334
        %v970 = vmul.f32 %v938, 0.33333334
        %v971 = vmul.f32 %v939, 0.33333334
        %v972 = vmul.f32 %v940, 0.33333334
        %v973 = vmul.f32 %v941, 0.33333334
        %v974 = vmul.f32 %v942, 0.33333334
        %v975 = vmul.f32 %v943, 0.33333334
        %v976 = vmul.f32 %v944, 0.33333334
        %v977 = vmul.f32 %v945, 0.33333334
        %v978 = vmul.f32 %v946, 0.33333334
        %v979 = vmul.f32 %v947, 0.33333334
        %v980 = vmul.f32 %v948, 0.33333334
        %v981 = vmul.f32 %v949, 0.33333334
        %v982 = vmul.f32 %v950, 0.33333334
        %v983 = vmul.f32 %v951, 0.33333334
        %v984 = vmul.f32 %v952, 0.33333334
        %v985 = vmul.f32 %v953, 0.33333334
        %v986 = vmul.f32 %v954, 0.33333334
        %v987 = vmul.f32 %v955, 0.33333334
        %v988 = vmul.f32 %v956, 0.33333334
        %v989 = vmul.f32 %v957, 0.33333334
        %v990 = vmul.f32 %v958, 0.33333334
        %v991 = vmul.f32 %v959, 0.33333334
        %v992 = vmul.f32 %v960, 0.33333334
        %v993 = vmul.f32 %v961, 0.33333334
        %994 = vst [vmem:[%s160] sm:$0xff] %v962
        %995 = vst [vmem:[%s160 + $0x8] sm:$0xff] %v963
        %996 = vst [vmem:[%s160 + $0x10] sm:$0xff] %v964
        %997 = vst [vmem:[%s160 + $0x18] sm:$0xff] %v965
        %998 = vst [vmem:[%s160 + $0x20] sm:$0xff] %v966
        %999 = vst [vmem:[%s160 + $0x28] sm:$0xff] %v967
        %1000 = vst [vmem:[%s160 + $0x30] sm:$0xff] %v968
        %1001 = vst [vmem:[%s160 + $0x38] sm:$0xff] %v969
        %1002 = vst [vmem:[%s160 + $0x40] sm:$0xff] %v970
        %1003 = vst [vmem:[%s160 + $0x48] sm:$0xff] %v971
        %1004 = vst [vmem:[%s160 + $0x50] sm:$0xff] %v972
        %1005 = vst [vmem:[%s160 + $0x58] sm:$0xff] %v973
        %1006 = vst [vmem:[%s160 + $0x60] sm:$0xff] %v974
        %1007 = vst [vmem:[%s160 + $0x68] sm:$0xff] %v975
        %1008 = vst [vmem:[%s160 + $0x70] sm:$0xff] %v976
        %1009 = vst [vmem:[%s160 + $0x78] sm:$0xff] %v977
        %1010 = vst [vmem:[%s160 + $0x80] sm:$0xff] %v978
        %1011 = vst [vmem:[%s160 + $0x88] sm:$0xff] %v979
        %1012 = vst [vmem:[%s160 + $0x90] sm:$0xff] %v980
        %1013 = vst [vmem:[%s160 + $0x98] sm:$0xff] %v981
        %1014 = vst [vmem:[%s160 + $0xa0] sm:$0xff] %v982
        %1015 = vst [vmem:[%s160 + $0xa8] sm:$0xff] %v983
        %1016 = vst [vmem:[%s160 + $0xb0] sm:$0xff] %v984
        %1017 = vst [vmem:[%s160 + $0xb8] sm:$0xff] %v985
        %1018 = vst [vmem:[%s160 + $0xc0] sm:$0xff] %v986
        %1019 = vst [vmem:[%s160 + $0xc8] sm:$0xff] %v987
        %1020 = vst [vmem:[%s160 + $0xd0] sm:$0xff] %v988
        %1021 = vst [vmem:[%s160 + $0xd8] sm:$0xff] %v989
        %1022 = vst [vmem:[%s160 + $0xe0] sm:$0xff] %v990
        %1023 = vst [vmem:[%s160 + $0xe8] sm:$0xff] %v991
        %1024 = vst [vmem:[%s160 + $0xf0] sm:$0xff] %v992
        %1025 = vst [vmem:[%s160 + $0xf8] sm:$0xff] %v993
      $region36: #{gume_forward.7} parent=27 // pred_fallthru
        _
      %s1026 = smul.u32 32, %s18
      %p1027 = scmp.lt.s32.totalorder %s1026, 31
      %s1028 = scalar_select %p1027, %s1026, 31
      %s1029 = smul.addr %s1028, 8
      %s1030 = scalar_lea.vmem %s2, %s1029
      // Predicated region
      $region37: #{gume_forward.7} parent=27 // pred_check
        %p1031 = pneg %p90
      $region38: #{gume_forward.7} parent=27 // pred_check_branch
        %1033 = sbr.rel (%p1031) target = $region40
      $region39: #{gume_forward.7} parent=27 // pred_region
        %s1034 = smul.u32 32, %s18
      $region40: #{gume_forward.7} parent=27 // pred_fallthru
        _
      // Predicated region
      $region41: #{gume_forward.7} parent=27 // pred_check
        %p1035 = pneg %p90
      $region42: #{gume_forward.7} parent=27 // pred_check_branch
        %1037 = sbr.rel (%p1035) target = $region44
      $region43: #{gume_forward.7} parent=27 // pred_region
        %s1038 = smul.u32 32, %s18
        %p1039 = scmp.lt.s32.totalorder %s1038, 31
        %s1040 = scalar_select %p1039, %s1038, 31
        %s1041 = smul.addr %s1040, 8
        %s1042 = scalar_lea.vmem %s2, %s1041
      $region44: #{gume_forward.7} parent=27 // pred_fallthru
        _
    $region28: #{gume_forward.7} parent=5 // pred_fallthru
      _
    %p1043 = scmp.le.s32.totalorder 2, %s8
    // Predicated region
    $region45: #{gume_forward.7} parent=5 // pred_check
      %p1044 = pneg %p1043
    $region46: #{gume_forward.7} parent=5 // pred_check_branch
      %1046 = sbr.rel (%p1044) target = $region48
    $region47: #{gume_forward.7} parent=5 // pred_region
      %s1047 = ssub.s32 %s8, 2
    $region48: #{gume_forward.7} parent=5 // pred_fallthru
      _
  $region6: #{gume_forward.7} parent=0 // loop_footer
    %s12 = sadd.s32 1, %s8
  $region7: #{gume_forward.7} parent=0 // loop_footer_branch
    %7 = sbr.rel target = $region3
  $region8: #{gume_forward.7} parent=0 // loop_exit
    _

// kernel: gume_forward.10
$region0: #{gume_forward.10}
  #allocation0 [shape = 'u32[]', space=smem, size = 0x4, offset = 0x4, fixed_abs, tag = 'smem constant byte address 0x4 - core index']
  #allocation1 [shape = 'u32[144,128]{1,0:T(1,128)}', space=vmem, size = 0x12000, scoped, tag = 'internal scratch']
  %s0 = inlined_call_operand.vmem [shape: f32[128,128], index: 0, kind: input, shape index: {}]
  %s1 = inlined_call_operand.vmem [shape: f32[128,128], index: 1, kind: input, shape index: {}]
  %s2 = inlined_call_operand.vmem [shape: f32[128,128], index: 2, kind: input, shape index: {}]
  %s3 = inlined_call_operand.vmem [shape: bf16[128,128], index: 3, kind: input, shape index: {}]
  %s4 = inlined_call_operand.vmem [shape: f32[1,128], index: 4, kind: input, shape index: {}]
  %s5 = inlined_call_operand.vmem [shape: f32[1,128], index: 5, kind: input, shape index: {}]
  %s6 = inlined_call_operand.vmem [shape: bf16[128,128], index: 6, kind: input, shape index: {}]
  %s7 = inlined_call_operand.vmem [shape: f32[1,128], index: 7, kind: input, shape index: {}]
  %s8 = inlined_call_operand.vmem [shape: bf16[128,128], index: 8, kind: input, shape index: {}]
  %s9 = inlined_call_operand.vmem [shape: f32[1,128], index: 9, kind: input, shape index: {}]
  %s10 = inlined_call_operand.hbm [shape: f32[128,128], index: 10, kind: output, shape index: {}]
  %s11 = sld [smem:[#allocation0]]
  $region50: #{gume_forward.10} parent=0
    _
  %s13 = ssub.s32 1, %s11
  %s14 = scalar_select 0, %s13, %s11
  $region1: #{gume_forward.10} parent=0
    #allocation2 [shape = 'u8[65536]{0}', space=vmem, size = 0x10000, scoped, tag = 'output window, operand 0, single buffered']
    #allocation3 [shape = 's32[1]{0}', space=sflag, size = 0x4, scoped, tag = 'scoped memory for gume_forward.10']
    %15 = vsyncpa [#allocation3], 0
    // Predicated region
    $region2: #{gume_forward.10} parent=1 // pred_check
      _
    $region3: #{gume_forward.10} parent=1 // pred_check_branch
      %17 = sbr.rel (0) target = $region5
    $region4: #{gume_forward.10} parent=1 // pred_region
      _
    $region5: #{gume_forward.10} parent=1 // pred_fallthru
      _
    // Predicated region
    $region6: #{gume_forward.10} parent=1 // pred_check
      _
    $region7: #{gume_forward.10} parent=1 // pred_check_branch
      %19 = sbr.rel (0) target = $region9
    $region8: #{gume_forward.10} parent=1 // pred_region
      _
    $region9: #{gume_forward.10} parent=1 // pred_fallthru
      _
    // Predicated region
    $region10: #{gume_forward.10} parent=1 // pred_check
      _
    $region11: #{gume_forward.10} parent=1 // pred_check_branch
      %21 = sbr.rel (0) target = $region13
    $region12: #{gume_forward.10} parent=1 // pred_region
      _
    $region13: #{gume_forward.10} parent=1 // pred_fallthru
      _
    // Predicated region
    $region14: #{gume_forward.10} parent=1 // pred_check
      _
    $region15: #{gume_forward.10} parent=1 // pred_check_branch
      %23 = sbr.rel (0) target = $region17
    $region16: #{gume_forward.10} parent=1 // pred_region
      _
    $region17: #{gume_forward.10} parent=1 // pred_fallthru
      _
    // Predicated region
    $region18: #{gume_forward.10} parent=1 // pred_check
      _
    $region19: #{gume_forward.10} parent=1 // pred_check_branch
      %25 = sbr.rel (0) target = $region21
    $region20: #{gume_forward.10} parent=1 // pred_region
      _
    $region21: #{gume_forward.10} parent=1 // pred_fallthru
      _
    // Predicated region
    $region22: #{gume_forward.10} parent=1 // pred_check
      _
    $region23: #{gume_forward.10} parent=1 // pred_check_branch
      %27 = sbr.rel (0) target = $region25
    $region24: #{gume_forward.10} parent=1 // pred_region
      _
    $region25: #{gume_forward.10} parent=1 // pred_fallthru
      _
    // Predicated region
    $region26: #{gume_forward.10} parent=1 // pred_check
      _
    $region27: #{gume_forward.10} parent=1 // pred_check_branch
      %29 = sbr.rel (0) target = $region29
    $region28: #{gume_forward.10} parent=1 // pred_region
      _
    $region29: #{gume_forward.10} parent=1 // pred_fallthru
      _
    // Predicated region
    $region30: #{gume_forward.10} parent=1 // pred_check
      _
    $region31: #{gume_forward.10} parent=1 // pred_check_branch
      %31 = sbr.rel (0) target = $region33
    $region32: #{gume_forward.10} parent=1 // pred_region
      _
    $region33: #{gume_forward.10} parent=1 // pred_fallthru
      _
    // Predicated region
    $region34: #{gume_forward.10} parent=1 // pred_check
      _
    $region35: #{gume_forward.10} parent=1 // pred_check_branch
      %33 = sbr.rel (0) target = $region37
    $region36: #{gume_forward.10} parent=1 // pred_region
      _
    $region37: #{gume_forward.10} parent=1 // pred_fallthru
      _
    // Predicated region
    $region38: #{gume_forward.10} parent=1 // pred_check
      _
    $region39: #{gume_forward.10} parent=1 // pred_check_branch
      %35 = sbr.rel (0) target = $region41
    $region40: #{gume_forward.10} parent=1 // pred_region
      _
    $region41: #{gume_forward.10} parent=1 // pred_fallthru
      _
    %v37 = vld [vmem:[%s0] sm:$0xff]
    %v38 = vld [vmem:[%s0 + $0x8] sm:$0xff]
    %v39 = vld [vmem:[%s0 + $0x10] sm:$0xff]
    %v40 = vld [vmem:[%s0 + $0x18] sm:$0xff]
    %v41 = vld [vmem:[%s0 + $0x20] sm:$0xff]
    %v42 = vld [vmem:[%s0 + $0x28] sm:$0xff]
    %v43 = vld [vmem:[%s0 + $0x30] sm:$0xff]
    %v44 = vld [vmem:[%s0 + $0x38] sm:$0xff]
    %v45 = vld [vmem:[%s0 + $0x40] sm:$0xff]
    %v46 = vld [vmem:[%s0 + $0x48] sm:$0xff]
    %v47 = vld [vmem:[%s0 + $0x50] sm:$0xff]
    %v48 = vld [vmem:[%s0 + $0x58] sm:$0xff]
    %v49 = vld [vmem:[%s0 + $0x60] sm:$0xff]
    %v50 = vld [vmem:[%s0 + $0x68] sm:$0xff]
    %v51 = vld [vmem:[%s0 + $0x70] sm:$0xff]
    %v52 = vld [vmem:[%s0 + $0x78] sm:$0xff]
    %v53 = vld [vmem:[%s1] sm:$0xff]
    %v54 = vld [vmem:[%s1 + $0x8] sm:$0xff]
    %v55 = vld [vmem:[%s1 + $0x10] sm:$0xff]
    %v56 = vld [vmem:[%s1 + $0x18] sm:$0xff]
    %v57 = vld [vmem:[%s1 + $0x20] sm:$0xff]
    %v58 = vld [vmem:[%s1 + $0x28] sm:$0xff]
    %v59 = vld [vmem:[%s1 + $0x30] sm:$0xff]
    %v60 = vld [vmem:[%s1 + $0x38] sm:$0xff]
    %v61 = vld [vmem:[%s1 + $0x40] sm:$0xff]
    %v62 = vld [vmem:[%s1 + $0x48] sm:$0xff]
    %v63 = vld [vmem:[%s1 + $0x50] sm:$0xff]
    %v64 = vld [vmem:[%s1 + $0x58] sm:$0xff]
    %v65 = vld [vmem:[%s1 + $0x60] sm:$0xff]
    %v66 = vld [vmem:[%s1 + $0x68] sm:$0xff]
    %v67 = vld [vmem:[%s1 + $0x70] sm:$0xff]
    %v68 = vld [vmem:[%s1 + $0x78] sm:$0xff]
    %v69 = vld [vmem:[%s2] sm:$0xff]
    %v70 = vld [vmem:[%s2 + $0x8] sm:$0xff]
    %v71 = vld [vmem:[%s2 + $0x10] sm:$0xff]
    %v72 = vld [vmem:[%s2 + $0x18] sm:$0xff]
    %v73 = vld [vmem:[%s2 + $0x20] sm:$0xff]
    %v74 = vld [vmem:[%s2 + $0x28] sm:$0xff]
    %v75 = vld [vmem:[%s2 + $0x30] sm:$0xff]
    %v76 = vld [vmem:[%s2 + $0x38] sm:$0xff]
    %v77 = vld [vmem:[%s2 + $0x40] sm:$0xff]
    %v78 = vld [vmem:[%s2 + $0x48] sm:$0xff]
    %v79 = vld [vmem:[%s2 + $0x50] sm:$0xff]
    %v80 = vld [vmem:[%s2 + $0x58] sm:$0xff]
    %v81 = vld [vmem:[%s2 + $0x60] sm:$0xff]
    %v82 = vld [vmem:[%s2 + $0x68] sm:$0xff]
    %v83 = vld [vmem:[%s2 + $0x70] sm:$0xff]
    %v84 = vld [vmem:[%s2 + $0x78] sm:$0xff]
    %v85 = vld [vmem:[%s3] sm:$0xf]
    %v86 = vld [vmem:[%s3 + $0x4] sm:$0xf]
    %v87 = vld [vmem:[%s3 + $0x8] sm:$0xf]
    %v88 = vld [vmem:[%s3 + $0xc] sm:$0xf]
    %v89 = vld [vmem:[%s3 + $0x10] sm:$0xf]
    %v90 = vld [vmem:[%s3 + $0x14] sm:$0xf]
    %v91 = vld [vmem:[%s3 + $0x18] sm:$0xf]
    %v92 = vld [vmem:[%s3 + $0x1c] sm:$0xf]
    %v93 = vld [vmem:[%s3 + $0x20] sm:$0xf]
    %v94 = vld [vmem:[%s3 + $0x24] sm:$0xf]
    %v95 = vld [vmem:[%s3 + $0x28] sm:$0xf]
    %v96 = vld [vmem:[%s3 + $0x2c] sm:$0xf]
    %v97 = vld [vmem:[%s3 + $0x30] sm:$0xf]
    %v98 = vld [vmem:[%s3 + $0x34] sm:$0xf]
    %v99 = vld [vmem:[%s3 + $0x38] sm:$0xf]
    %v100 = vld [vmem:[%s3 + $0x3c] sm:$0xf]
    %v101 = vpack.c.bf16 %v54, %v53
    %v102 = vpack.c.bf16 %v56, %v55
    %v103 = vpack.c.bf16 %v58, %v57
    %v104 = vpack.c.bf16 %v60, %v59
    %v105 = vpack.c.bf16 %v62, %v61
    %v106 = vpack.c.bf16 %v64, %v63
    %v107 = vpack.c.bf16 %v66, %v65
    %v108 = vpack.c.bf16 %v68, %v67
    %v109 = vld [vmem:[%s4] sm:$0x1]
    %v111 = vlaneseq
    %v112 = vshrl.u32 %v111, 7
    %v113 = vsub.s32 0, %v112
    %v114 = vrot.slane %v109, %v113
    %v132 = vunpack.c.l.b16 %v85
    %v133 = vunpack.c.l.b16 %v86
    %v134 = vunpack.c.l.b16 %v87
    %v135 = vunpack.c.l.b16 %v88
    %v136 = vunpack.c.l.b16 %v89
    %v137 = vunpack.c.l.b16 %v90
    %v138 = vunpack.c.l.b16 %v91
    %v139 = vunpack.c.l.b16 %v92
    %v140 = vunpack.c.l.b16 %v93
    %v141 = vunpack.c.l.b16 %v94
    %v142 = vunpack.c.l.b16 %v95
    %v143 = vunpack.c.l.b16 %v96
    %v144 = vunpack.c.l.b16 %v97
    %v145 = vunpack.c.l.b16 %v98
    %v146 = vunpack.c.l.b16 %v99
    %v147 = vunpack.c.l.b16 %v100
    %v148 = vpack.c.b16 %v133, %v132
    %v149 = vpack.c.b16 %v135, %v134
    %v150 = vpack.c.b16 %v137, %v136
    %v151 = vpack.c.b16 %v139, %v138
    %v152 = vpack.c.b16 %v141, %v140
    %v153 = vpack.c.b16 %v143, %v142
    %v154 = vpack.c.b16 %v145, %v144
    %v155 = vpack.c.b16 %v147, %v146
    %164 = vmatprep.subr.bf16.mxu0 0
    %165 = vmatpush1.bf16.msra.mxu0 %v148
    %166 = vmatprep.subr.bf16.mxu0 0
    %167 = vmatpush1.bf16.msra.mxu0 %v149
    %168 = vmatprep.subr.bf16.mxu0 0
    %169 = vmatpush1.bf16.msra.mxu0 %v150
    %170 = vmatprep.subr.bf16.mxu0 0
    %171 = vmatpush1.bf16.msra.mxu0 %v151
    %172 = vmatprep.subr.bf16.mxu0 0
    %173 = vmatpush1.bf16.msra.mxu0 %v152
    %174 = vmatprep.subr.bf16.mxu0 0
    %175 = vmatpush1.bf16.msra.mxu0 %v153
    %176 = vmatprep.subr.bf16.mxu0 0
    %177 = vmatpush1.bf16.msra.mxu0 %v154
    %178 = vmatprep.subr.bf16.mxu0 0
    %179 = vmatpush1.bf16.msra.mxu0 %v155
    %180 = vmatprep.subr.bf16.mxu0 0
    %181 = vmatpush1.bf16.msra.mxu0 0
    %182 = vmatprep.subr.bf16.mxu0 0
    %183 = vmatpush1.bf16.msra.mxu0 0
    %184 = vmatprep.subr.bf16.mxu0 0
    %185 = vmatpush1.bf16.msra.mxu0 0
    %186 = vmatprep.subr.bf16.mxu0 0
    %187 = vmatpush1.bf16.msra.mxu0 0
    %188 = vmatprep.subr.bf16.mxu0 0
    %189 = vmatpush1.bf16.msra.mxu0 0
    %190 = vmatprep.subr.bf16.mxu0 0
    %191 = vmatpush1.bf16.msra.mxu0 0
    %192 = vmatprep.subr.bf16.mxu0 0
    %193 = vmatpush1.bf16.msra.mxu0 0
    %194 = vmatprep.subr.bf16.mxu0 0
    %195 = vmatpush1.bf16.msra.mxu0 0
    %196 = vmatprep.mubr.bf16.mxu0 0
    %197 = vmatmul.mubr.bf16.gmra.mrb[0].mxu0 %v101
    %v198 = vpop.f32.mrb[0].mxu0
    %v199 = vadd.f32 %v114, %v198
    %v200 = vpop.f32.mrb[0].mxu0
    %v201 = vpop.f32.mrb[0].mxu0
    %v202 = vadd.f32 %v114, %v201
    %v203 = vpop.f32.mrb[0].mxu0
    %204 = vmatprep.mubr.bf16.mxu0 0
    %205 = vmatmul.mubr.bf16.gmra.mrb[0].mxu0 %v102
    %v206 = vpop.f32.mrb[0].mxu0
    %v207 = vadd.f32 %v114, %v206
    %v208 = vpop.f32.mrb[0].mxu0
    %v209 = vpop.f32.mrb[0].mxu0
    %v210 = vadd.f32 %v114, %v209
    %v211 = vpop.f32.mrb[0].mxu0
    %212 = vmatprep.mubr.bf16.mxu0 0
    %213 = vmatmul.mubr.bf16.gmra.mrb[0].mxu0 %v103
    %v214 = vpop.f32.mrb[0].mxu0
    %v215 = vadd.f32 %v114, %v214
    %v216 = vpop.f32.mrb[0].mxu0
    %v217 = vpop.f32.mrb[0].mxu0
    %v218 = vadd.f32 %v114, %v217
    %v219 = vpop.f32.mrb[0].mxu0
    %220 = vmatprep.mubr.bf16.mxu0 0
    %221 = vmatmul.mubr.bf16.gmra.mrb[0].mxu0 %v104
    %v222 = vpop.f32.mrb[0].mxu0
    %v223 = vadd.f32 %v114, %v222
    %v224 = vpop.f32.mrb[0].mxu0
    %v225 = vpop.f32.mrb[0].mxu0
    %v226 = vadd.f32 %v114, %v225
    %v227 = vpop.f32.mrb[0].mxu0
    %228 = vmatprep.mubr.bf16.mxu0 0
    %229 = vmatmul.mubr.bf16.gmra.mrb[0].mxu0 %v105
    %v230 = vpop.f32.mrb[0].mxu0
    %v231 = vadd.f32 %v114, %v230
    %v232 = vpop.f32.mrb[0].mxu0
    %v233 = vpop.f32.mrb[0].mxu0
    %v234 = vadd.f32 %v114, %v233
    %v235 = vpop.f32.mrb[0].mxu0
    %236 = vmatprep.mubr.bf16.mxu0 0
    %237 = vmatmul.mubr.bf16.gmra.mrb[0].mxu0 %v106
    %v238 = vpop.f32.mrb[0].mxu0
    %v239 = vadd.f32 %v114, %v238
    %v240 = vpop.f32.mrb[0].mxu0
    %v241 = vpop.f32.mrb[0].mxu0
    %v242 = vadd.f32 %v114, %v241
    %v243 = vpop.f32.mrb[0].mxu0
    %244 = vmatprep.mubr.bf16.mxu0 0
    %245 = vmatmul.mubr.bf16.gmra.mrb[0].mxu0 %v107
    %v246 = vpop.f32.mrb[0].mxu0
    %v247 = vadd.f32 %v114, %v246
    %v248 = vpop.f32.mrb[0].mxu0
    %v249 = vpop.f32.mrb[0].mxu0
    %v250 = vadd.f32 %v114, %v249
    %v251 = vpop.f32.mrb[0].mxu0
    %252 = vmatprep.mubr.bf16.mxu0 0
    %253 = vmatmul.mubr.bf16.gmra.mrb[0].mxu0 %v108
    %v254 = vpop.f32.mrb[0].mxu0
    %v255 = vadd.f32 %v114, %v254
    %v256 = vpop.f32.mrb[0].mxu0
    %v257 = vpop.f32.mrb[0].mxu0
    %v258 = vadd.f32 %v114, %v257
    %v259 = vpop.f32.mrb[0].mxu0
    %260 = vdwg.mxu0
    %v261 = vtanh.pop %v199
    %v262 = vtanh.pop %v202
    %v263 = vtanh.pop %v207
    %v264 = vtanh.pop %v210
    %v265 = vtanh.pop %v215
    %v266 = vtanh.pop %v218
    %v267 = vtanh.pop %v223
    %v268 = vtanh.pop %v226
    %v269 = vtanh.pop %v231
    %v270 = vtanh.pop %v234
    %v271 = vtanh.pop %v239
    %v272 = vtanh.pop %v242
    %v273 = vtanh.pop %v247
    %v274 = vtanh.pop %v250
    %v275 = vtanh.pop %v255
    %v276 = vtanh.pop %v258
    %v277 = vpack.c.bf16 %v70, %v69
    %v278 = vpack.c.bf16 %v72, %v71
    %v279 = vpack.c.bf16 %v74, %v73
    %v280 = vpack.c.bf16 %v76, %v75
    %v281 = vpack.c.bf16 %v78, %v77
    %v282 = vpack.c.bf16 %v80, %v79
    %v283 = vpack.c.bf16 %v82, %v81
    %v284 = vpack.c.bf16 %v84, %v83
    %285 = vmatprep.subr.bf16.mxu0 0
    %286 = vmatpush1.bf16.msra.mxu0 %v148
    %287 = vmatprep.subr.bf16.mxu0 0
    %288 = vmatpush1.bf16.msra.mxu0 %v149
    %289 = vmatprep.subr.bf16.mxu0 0
    %290 = vmatpush1.bf16.msra.mxu0 %v150
    %291 = vmatprep.subr.bf16.mxu0 0
    %292 = vmatpush1.bf16.msra.mxu0 %v151
    %293 = vmatprep.subr.bf16.mxu0 0
    %294 = vmatpush1.bf16.msra.mxu0 %v152
    %295 = vmatprep.subr.bf16.mxu0 0
    %296 = vmatpush1.bf16.msra.mxu0 %v153
    %297 = vmatprep.subr.bf16.mxu0 0
    %298 = vmatpush1.bf16.msra.mxu0 %v154
    %299 = vmatprep.subr.bf16.mxu0 0
    %300 = vmatpush1.bf16.msra.mxu0 %v155
    %301 = vmatprep.subr.bf16.mxu0 0
    %302 = vmatpush1.bf16.msra.mxu0 0
    %303 = vmatprep.subr.bf16.mxu0 0
    %304 = vmatpush1.bf16.msra.mxu0 0
    %305 = vmatprep.subr.bf16.mxu0 0
    %306 = vmatpush1.bf16.msra.mxu0 0
    %307 = vmatprep.subr.bf16.mxu0 0
    %308 = vmatpush1.bf16.msra.mxu0 0
    %309 = vmatprep.subr.bf16.mxu0 0
    %310 = vmatpush1.bf16.msra.mxu0 0
    %311 = vmatprep.subr.bf16.mxu0 0
    %312 = vmatpush1.bf16.msra.mxu0 0
    %313 = vmatprep.subr.bf16.mxu0 0
    %314 = vmatpush1.bf16.msra.mxu0 0
    %315 = vmatprep.subr.bf16.mxu0 0
    %316 = vmatpush1.bf16.msra.mxu0 0
    %317 = vmatprep.mubr.bf16.mxu0 0
    %318 = vmatmul.mubr.bf16.gmra.mrb[0].mxu0 %v277
    %v319 = vpop.f32.mrb[0].mxu0
    %v320 = vadd.f32 %v114, %v319
    %v321 = vpop.f32.mrb[0].mxu0
    %v322 = vpop.f32.mrb[0].mxu0
    %v323 = vadd.f32 %v114, %v322
    %v324 = vpop.f32.mrb[0].mxu0
    %325 = vmatprep.mubr.bf16.mxu0 0
    %326 = vmatmul.mubr.bf16.gmra.mrb[0].mxu0 %v278
    %v327 = vpop.f32.mrb[0].mxu0
    %v328 = vadd.f32 %v114, %v327
    %v329 = vpop.f32.mrb[0].mxu0
    %v330 = vpop.f32.mrb[0].mxu0
    %v331 = vadd.f32 %v114, %v330
    %v332 = vpop.f32.mrb[0].mxu0
    %333 = vmatprep.mubr.bf16.mxu0 0
    %334 = vmatmul.mubr.bf16.gmra.mrb[0].mxu0 %v279
    %v335 = vpop.f32.mrb[0].mxu0
    %v336 = vadd.f32 %v114, %v335
    %v337 = vpop.f32.mrb[0].mxu0
    %v338 = vpop.f32.mrb[0].mxu0
    %v339 = vadd.f32 %v114, %v338
    %v340 = vpop.f32.mrb[0].mxu0
    %341 = vmatprep.mubr.bf16.mxu0 0
    %342 = vmatmul.mubr.bf16.gmra.mrb[0].mxu0 %v280
    %v343 = vpop.f32.mrb[0].mxu0
    %v344 = vadd.f32 %v114, %v343
    %v345 = vpop.f32.mrb[0].mxu0
    %v346 = vpop.f32.mrb[0].mxu0
    %v347 = vadd.f32 %v114, %v346
    %v348 = vpop.f32.mrb[0].mxu0
    %349 = vmatprep.mubr.bf16.mxu0 0
    %350 = vmatmul.mubr.bf16.gmra.mrb[0].mxu0 %v281
    %v351 = vpop.f32.mrb[0].mxu0
    %v352 = vadd.f32 %v114, %v351
    %v353 = vpop.f32.mrb[0].mxu0
    %v354 = vpop.f32.mrb[0].mxu0
    %v355 = vadd.f32 %v114, %v354
    %v356 = vpop.f32.mrb[0].mxu0
    %357 = vmatprep.mubr.bf16.mxu0 0
    %358 = vmatmul.mubr.bf16.gmra.mrb[0].mxu0 %v282
    %v359 = vpop.f32.mrb[0].mxu0
    %v360 = vadd.f32 %v114, %v359
    %v361 = vpop.f32.mrb[0].mxu0
    %v362 = vpop.f32.mrb[0].mxu0
    %v363 = vadd.f32 %v114, %v362
    %v364 = vpop.f32.mrb[0].mxu0
    %365 = vmatprep.mubr.bf16.mxu0 0
    %366 = vmatmul.mubr.bf16.gmra.mrb[0].mxu0 %v283
    %v367 = vpop.f32.mrb[0].mxu0
    %v368 = vadd.f32 %v114, %v367
    %v369 = vpop.f32.mrb[0].mxu0
    %v370 = vpop.f32.mrb[0].mxu0
    %v371 = vadd.f32 %v114, %v370
    %v372 = vpop.f32.mrb[0].mxu0
    %373 = vmatprep.mubr.bf16.mxu0 0
    %374 = vmatmul.mubr.bf16.gmra.mrb[0].mxu0 %v284
    %v375 = vpop.f32.mrb[0].mxu0
    %v376 = vadd.f32 %v114, %v375
    %v377 = vpop.f32.mrb[0].mxu0
    %v378 = vpop.f32.mrb[0].mxu0
    %v379 = vadd.f32 %v114, %v378
    %v380 = vpop.f32.mrb[0].mxu0
    %381 = vdwg.mxu0
    %v382 = vtanh.pop %v320
    %v383 = vtanh.pop %v323
    %v384 = vtanh.pop %v328
    %v385 = vtanh.pop %v331
    %v386 = vtanh.pop %v336
    %v387 = vtanh.pop %v339
    %v388 = vtanh.pop %v344
    %v389 = vtanh.pop %v347
    %v390 = vtanh.pop %v352
    %v391 = vtanh.pop %v355
    %v392 = vtanh.pop %v360
    %v393 = vtanh.pop %v363
    %v394 = vtanh.pop %v368
    %v395 = vtanh.pop %v371
    %v396 = vtanh.pop %v376
    %v397 = vtanh.pop %v379
    %v398 = vld [vmem:[%s5] sm:$0x1]
    %v400 = vlaneseq
    %v401 = vshrl.u32 %v400, 7
    %v402 = vsub.s32 0, %v401
    %v403 = vrot.slane %v398, %v402
    %v405 = vmul.f32 %v261, %v403
    %v406 = vmul.f32 %v262, %v403
    %v407 = vmul.f32 %v263, %v403
    %v408 = vmul.f32 %v264, %v403
    %v409 = vmul.f32 %v265, %v403
    %v410 = vmul.f32 %v266, %v403
    %v411 = vmul.f32 %v267, %v403
    %v412 = vmul.f32 %v268, %v403
    %v413 = vmul.f32 %v269, %v403
    %v414 = vmul.f32 %v270, %v403
    %v415 = vmul.f32 %v271, %v403
    %v416 = vmul.f32 %v272, %v403
    %v417 = vmul.f32 %v273, %v403
    %v418 = vmul.f32 %v274, %v403
    %v419 = vmul.f32 %v275, %v403
    %v420 = vmul.f32 %v276, %v403
    %421 = vadd.xlane.f32.xlu0 %v405
    %v422 = vpop.xlane.xlu0 %421
    %423 = vadd.xlane.f32.xlu0 %v406
    %v424 = vpop.xlane.xlu0 %423
    %425 = vadd.xlane.f32.xlu0 %v407
    %v426 = vpop.xlane.xlu0 %425
    %427 = vadd.xlane.f32.xlu0 %v408
    %v428 = vpop.xlane.xlu0 %427
    %429 = vadd.xlane.f32.xlu0 %v409
    %v430 = vpop.xlane.xlu0 %429
    %431 = vadd.xlane.f32.xlu0 %v410
    %v432 = vpop.xlane.xlu0 %431
    %433 = vadd.xlane.f32.xlu0 %v411
    %v434 = vpop.xlane.xlu0 %433
    %435 = vadd.xlane.f32.xlu0 %v412
    %v436 = vpop.xlane.xlu0 %435
    %437 = vadd.xlane.f32.xlu0 %v413
    %v438 = vpop.xlane.xlu0 %437
    %439 = vadd.xlane.f32.xlu0 %v414
    %v440 = vpop.xlane.xlu0 %439
    %441 = vadd.xlane.f32.xlu0 %v415
    %v442 = vpop.xlane.xlu0 %441
    %443 = vadd.xlane.f32.xlu0 %v416
    %v444 = vpop.xlane.xlu0 %443
    %445 = vadd.xlane.f32.xlu0 %v417
    %v446 = vpop.xlane.xlu0 %445
    %447 = vadd.xlane.f32.xlu0 %v418
    %v448 = vpop.xlane.xlu0 %447
    %449 = vadd.xlane.f32.xlu0 %v419
    %v450 = vpop.xlane.xlu0 %449
    %451 = vadd.xlane.f32.xlu0 %v420
    %v452 = vpop.xlane.xlu0 %451
    %v453 = vmul.f32 %v382, %v403
    %v454 = vmul.f32 %v383, %v403
    %v455 = vmul.f32 %v384, %v403
    %v456 = vmul.f32 %v385, %v403
    %v457 = vmul.f32 %v386, %v403
    %v458 = vmul.f32 %v387, %v403
    %v459 = vmul.f32 %v388, %v403
    %v460 = vmul.f32 %v389, %v403
    %v461 = vmul.f32 %v390, %v403
    %v462 = vmul.f32 %v391, %v403
    %v463 = vmul.f32 %v392, %v403
    %v464 = vmul.f32 %v393, %v403
    %v465 = vmul.f32 %v394, %v403
    %v466 = vmul.f32 %v395, %v403
    %v467 = vmul.f32 %v396, %v403
    %v468 = vmul.f32 %v397, %v403
    %469 = vadd.xlane.f32.xlu0 %v453
    %v470 = vpop.xlane.xlu0 %469
    %471 = vadd.xlane.f32.xlu0 %v454
    %v472 = vpop.xlane.xlu0 %471
    %473 = vadd.xlane.f32.xlu0 %v455
    %v474 = vpop.xlane.xlu0 %473
    %475 = vadd.xlane.f32.xlu0 %v456
    %v476 = vpop.xlane.xlu0 %475
    %477 = vadd.xlane.f32.xlu0 %v457
    %v478 = vpop.xlane.xlu0 %477
    %479 = vadd.xlane.f32.xlu0 %v458
    %v480 = vpop.xlane.xlu0 %479
    %481 = vadd.xlane.f32.xlu0 %v459
    %v482 = vpop.xlane.xlu0 %481
    %483 = vadd.xlane.f32.xlu0 %v460
    %v484 = vpop.xlane.xlu0 %483
    %485 = vadd.xlane.f32.xlu0 %v461
    %v486 = vpop.xlane.xlu0 %485
    %487 = vadd.xlane.f32.xlu0 %v462
    %v488 = vpop.xlane.xlu0 %487
    %489 = vadd.xlane.f32.xlu0 %v463
    %v490 = vpop.xlane.xlu0 %489
    %491 = vadd.xlane.f32.xlu0 %v464
    %v492 = vpop.xlane.xlu0 %491
    %493 = vadd.xlane.f32.xlu0 %v465
    %v494 = vpop.xlane.xlu0 %493
    %495 = vadd.xlane.f32.xlu0 %v466
    %v496 = vpop.xlane.xlu0 %495
    %497 = vadd.xlane.f32.xlu0 %v467
    %v498 = vpop.xlane.xlu0 %497
    %499 = vadd.xlane.f32.xlu0 %v468
    %v500 = vpop.xlane.xlu0 %499
    %v501 = vmax.f32 %v422, %v470
    %v502 = vmax.f32 %v424, %v472
    %v503 = vmax.f32 %v426, %v474
    %v504 = vmax.f32 %v428, %v476
    %v505 = vmax.f32 %v430, %v478
    %v506 = vmax.f32 %v432, %v480
    %v507 = vmax.f32 %v434, %v482
    %v508 = vmax.f32 %v436, %v484
    %v509 = vmax.f32 %v438, %v486
    %v510 = vmax.f32 %v440, %v488
    %v511 = vmax.f32 %v442, %v490
    %v512 = vmax.f32 %v444, %v492
    %v513 = vmax.f32 %v446, %v494
    %v514 = vmax.f32 %v448, %v496
    %v515 = vmax.f32 %v450, %v498
    %v516 = vmax.f32 %v452, %v500
    %v517 = vsub.f32 %v422, %v501
    %v518 = vsub.f32 %v424, %v502
    %v519 = vsub.f32 %v426, %v503
    %v520 = vsub.f32 %v428, %v504
    %v521 = vsub.f32 %v430, %v505
    %v522 = vsub.f32 %v432, %v506
    %v523 = vsub.f32 %v434, %v507
    %v524 = vsub.f32 %v436, %v508
    %v525 = vsub.f32 %v438, %v509
    %v526 = vsub.f32 %v440, %v510
    %v527 = vsub.f32 %v442, %v511
    %v528 = vsub.f32 %v444, %v512
    %v529 = vsub.f32 %v446, %v513
    %v530 = vsub.f32 %v448, %v514
    %v531 = vsub.f32 %v450, %v515
    %v532 = vsub.f32 %v452, %v516
    %v533 = vmul.f32 %v517, 1.442695
    %v534 = vpow.pop %v533
    %v535 = vmul.f32 %v518, 1.442695
    %v536 = vpow.pop %v535
    %v537 = vmul.f32 %v519, 1.442695
    %v538 = vpow.pop %v537
    %v539 = vmul.f32 %v520, 1.442695
    %v540 = vpow.pop %v539
    %v541 = vmul.f32 %v521, 1.442695
    %v542 = vpow.pop %v541
    %v543 = vmul.f32 %v522, 1.442695
    %v544 = vpow.pop %v543
    %v545 = vmul.f32 %v523, 1.442695
    %v546 = vpow.pop %v545
    %v547 = vmul.f32 %v524, 1.442695
    %v548 = vpow.pop %v547
    %v549 = vmul.f32 %v525, 1.442695
    %v550 = vpow.pop %v549
    %v551 = vmul.f32 %v526, 1.442695
    %v552 = vpow.pop %v551
    %v553 = vmul.f32 %v527, 1.442695
    %v554 = vpow.pop %v553
    %v555 = vmul.f32 %v528, 1.442695
    %v556 = vpow.pop %v555
    %v557 = vmul.f32 %v529, 1.442695
    %v558 = vpow.pop %v557
    %v559 = vmul.f32 %v530, 1.442695
    %v560 = vpow.pop %v559
    %v561 = vmul.f32 %v531, 1.442695
    %v562 = vpow.pop %v561
    %v563 = vmul.f32 %v532, 1.442695
    %v564 = vpow.pop %v563
    %v565 = vsub.f32 %v470, %v501
    %v566 = vsub.f32 %v472, %v502
    %v567 = vsub.f32 %v474, %v503
    %v568 = vsub.f32 %v476, %v504
    %v569 = vsub.f32 %v478, %v505
    %v570 = vsub.f32 %v480, %v506
    %v571 = vsub.f32 %v482, %v507
    %v572 = vsub.f32 %v484, %v508
    %v573 = vsub.f32 %v486, %v509
    %v574 = vsub.f32 %v488, %v510
    %v575 = vsub.f32 %v490, %v511
    %v576 = vsub.f32 %v492, %v512
    %v577 = vsub.f32 %v494, %v513
    %v578 = vsub.f32 %v496, %v514
    %v579 = vsub.f32 %v498, %v515
    %v580 = vsub.f32 %v500, %v516
    %v581 = vmul.f32 %v565, 1.442695
    %v582 = vpow.pop %v581
    %v583 = vmul.f32 %v566, 1.442695
    %v584 = vpow.pop %v583
    %v585 = vmul.f32 %v567, 1.442695
    %v586 = vpow.pop %v585
    %v587 = vmul.f32 %v568, 1.442695
    %v588 = vpow.pop %v587
    %v589 = vmul.f32 %v569, 1.442695
    %v590 = vpow.pop %v589
    %v591 = vmul.f32 %v570, 1.442695
    %v592 = vpow.pop %v591
    %v593 = vmul.f32 %v571, 1.442695
    %v594 = vpow.pop %v593
    %v595 = vmul.f32 %v572, 1.442695
    %v596 = vpow.pop %v595
    %v597 = vmul.f32 %v573, 1.442695
    %v598 = vpow.pop %v597
    %v599 = vmul.f32 %v574, 1.442695
    %v600 = vpow.pop %v599
    %v601 = vmul.f32 %v575, 1.442695
    %v602 = vpow.pop %v601
    %v603 = vmul.f32 %v576, 1.442695
    %v604 = vpow.pop %v603
    %v605 = vmul.f32 %v577, 1.442695
    %v606 = vpow.pop %v605
    %v607 = vmul.f32 %v578, 1.442695
    %v608 = vpow.pop %v607
    %v609 = vmul.f32 %v579, 1.442695
    %v610 = vpow.pop %v609
    %v611 = vmul.f32 %v580, 1.442695
    %v612 = vpow.pop %v611
    %v613 = vadd.f32 %v534, %v582
    %v614 = vadd.f32 %v536, %v584
    %v615 = vadd.f32 %v538, %v586
    %v616 = vadd.f32 %v540, %v588
    %v617 = vadd.f32 %v542, %v590
    %v618 = vadd.f32 %v544, %v592
    %v619 = vadd.f32 %v546, %v594
    %v620 = vadd.f32 %v548, %v596
    %v621 = vadd.f32 %v550, %v598
    %v622 = vadd.f32 %v552, %v600
    %v623 = vadd.f32 %v554, %v602
    %v624 = vadd.f32 %v556, %v604
    %v625 = vadd.f32 %v558, %v606
    %v626 = vadd.f32 %v560, %v608
    %v627 = vadd.f32 %v562, %v610
    %v628 = vadd.f32 %v564, %v612
    %v629 = vrcp.pop %v613
    %v630 = vmul.f32 %v534, %v629
    %v631 = vrcp.pop %v614
    %v632 = vmul.f32 %v536, %v631
    %v633 = vrcp.pop %v615
    %v634 = vmul.f32 %v538, %v633
    %v635 = vrcp.pop %v616
    %v636 = vmul.f32 %v540, %v635
    %v637 = vrcp.pop %v617
    %v638 = vmul.f32 %v542, %v637
    %v639 = vrcp.pop %v618
    %v640 = vmul.f32 %v544, %v639
    %v641 = vrcp.pop %v619
    %v642 = vmul.f32 %v546, %v641
    %v643 = vrcp.pop %v620
    %v644 = vmul.f32 %v548, %v643
    %v645 = vrcp.pop %v621
    %v646 = vmul.f32 %v550, %v645
    %v647 = vrcp.pop %v622
    %v648 = vmul.f32 %v552, %v647
    %v649 = vrcp.pop %v623
    %v650 = vmul.f32 %v554, %v649
    %v651 = vrcp.pop %v624
    %v652 = vmul.f32 %v556, %v651
    %v653 = vrcp.pop %v625
    %v654 = vmul.f32 %v558, %v653
    %v655 = vrcp.pop %v626
    %v656 = vmul.f32 %v560, %v655
    %v657 = vrcp.pop %v627
    %v658 = vmul.f32 %v562, %v657
    %v659 = vrcp.pop %v628
    %v660 = vmul.f32 %v564, %v659
    %v661 = vmul.f32 %v582, %v629
    %v662 = vmul.f32 %v584, %v631
    %v663 = vmul.f32 %v586, %v633
    %v664 = vmul.f32 %v588, %v635
    %v665 = vmul.f32 %v590, %v637
    %v666 = vmul.f32 %v592, %v639
    %v667 = vmul.f32 %v594, %v641
    %v668 = vmul.f32 %v596, %v643
    %v669 = vmul.f32 %v598, %v645
    %v670 = vmul.f32 %v600, %v647
    %v671 = vmul.f32 %v602, %v649
    %v672 = vmul.f32 %v604, %v651
    %v673 = vmul.f32 %v606, %v653
    %v674 = vmul.f32 %v608, %v655
    %v675 = vmul.f32 %v610, %v657
    %v676 = vmul.f32 %v612, %v659
    %v677 = vmul.f32 %v630, %v53
    %v678 = vmul.f32 %v632, %v54
    %v679 = vmul.f32 %v634, %v55
    %v680 = vmul.f32 %v636, %v56
    %v681 = vmul.f32 %v638, %v57
    %v682 = vmul.f32 %v640, %v58
    %v683 = vmul.f32 %v642, %v59
    %v684 = vmul.f32 %v644, %v60
    %v685 = vmul.f32 %v646, %v61
    %v686 = vmul.f32 %v648, %v62
    %v687 = vmul.f32 %v650, %v63
    %v688 = vmul.f32 %v652, %v64
    %v689 = vmul.f32 %v654, %v65
    %v690 = vmul.f32 %v656, %v66
    %v691 = vmul.f32 %v658, %v67
    %v692 = vmul.f32 %v660, %v68
    %v693 = vmul.f32 %v661, %v69
    %v694 = vmul.f32 %v662, %v70
    %v695 = vmul.f32 %v663, %v71
    %v696 = vmul.f32 %v664, %v72
    %v697 = vmul.f32 %v665, %v73
    %v698 = vmul.f32 %v666, %v74
    %v699 = vmul.f32 %v667, %v75
    %v700 = vmul.f32 %v668, %v76
    %v701 = vmul.f32 %v669, %v77
    %v702 = vmul.f32 %v670, %v78
    %v703 = vmul.f32 %v671, %v79
    %v704 = vmul.f32 %v672, %v80
    %v705 = vmul.f32 %v673, %v81
    %v706 = vmul.f32 %v674, %v82
    %v707 = vmul.f32 %v675, %v83
    %v708 = vmul.f32 %v676, %v84
    %v709 = vadd.f32 %v677, %v693
    %v710 = vadd.f32 %v678, %v694
    %v711 = vadd.f32 %v679, %v695
    %v712 = vadd.f32 %v680, %v696
    %v713 = vadd.f32 %v681, %v697
    %v714 = vadd.f32 %v682, %v698
    %v715 = vadd.f32 %v683, %v699
    %v716 = vadd.f32 %v684, %v700
    %v717 = vadd.f32 %v685, %v701
    %v718 = vadd.f32 %v686, %v702
    %v719 = vadd.f32 %v687, %v703
    %v720 = vadd.f32 %v688, %v704
    %v721 = vadd.f32 %v689, %v705
    %v722 = vadd.f32 %v690, %v706
    %v723 = vadd.f32 %v691, %v707
    %v724 = vadd.f32 %v692, %v708
    %v725 = vpack.c.bf16 %v38, %v37
    %v726 = vpack.c.bf16 %v40, %v39
    %v727 = vpack.c.bf16 %v42, %v41
    %v728 = vpack.c.bf16 %v44, %v43
    %v729 = vpack.c.bf16 %v46, %v45
    %v730 = vpack.c.bf16 %v48, %v47
    %v731 = vpack.c.bf16 %v50, %v49
    %v732 = vpack.c.bf16 %v52, %v51
    %v733 = vld [vmem:[%s6] sm:$0xf]
    %v734 = vld [vmem:[%s6 + $0x4] sm:$0xf]
    %v735 = vld [vmem:[%s6 + $0x8] sm:$0xf]
    %v736 = vld [vmem:[%s6 + $0xc] sm:$0xf]
    %v737 = vld [vmem:[%s6 + $0x10] sm:$0xf]
    %v738 = vld [vmem:[%s6 + $0x14] sm:$0xf]
    %v739 = vld [vmem:[%s6 + $0x18] sm:$0xf]
    %v740 = vld [vmem:[%s6 + $0x1c] sm:$0xf]
    %v741 = vld [vmem:[%s6 + $0x20] sm:$0xf]
    %v742 = vld [vmem:[%s6 + $0x24] sm:$0xf]
    %v743 = vld [vmem:[%s6 + $0x28] sm:$0xf]
    %v744 = vld [vmem:[%s6 + $0x2c] sm:$0xf]
    %v745 = vld [vmem:[%s6 + $0x30] sm:$0xf]
    %v746 = vld [vmem:[%s6 + $0x34] sm:$0xf]
    %v747 = vld [vmem:[%s6 + $0x38] sm:$0xf]
    %v748 = vld [vmem:[%s6 + $0x3c] sm:$0xf]
    %v749 = vld [vmem:[%s7] sm:$0x1]
    %v751 = vlaneseq
    %v752 = vshrl.u32 %v751, 7
    %v753 = vsub.s32 0, %v752
    %v754 = vrot.slane %v749, %v753
    %v772 = vunpack.c.l.b16 %v733
    %v773 = vunpack.c.l.b16 %v734
    %v774 = vunpack.c.l.b16 %v735
    %v775 = vunpack.c.l.b16 %v736
    %v776 = vunpack.c.l.b16 %v737
    %v777 = vunpack.c.l.b16 %v738
    %v778 = vunpack.c.l.b16 %v739
    %v779 = vunpack.c.l.b16 %v740
    %v780 = vunpack.c.l.b16 %v741
    %v781 = vunpack.c.l.b16 %v742
    %v782 = vunpack.c.l.b16 %v743
    %v783 = vunpack.c.l.b16 %v744
    %v784 = vunpack.c.l.b16 %v745
    %v785 = vunpack.c.l.b16 %v746
    %v786 = vunpack.c.l.b16 %v747
    %v787 = vunpack.c.l.b16 %v748
    %v788 = vpack.c.b16 %v773, %v772
    %v789 = vpack.c.b16 %v775, %v774
    %v790 = vpack.c.b16 %v777, %v776
    %v791 = vpack.c.b16 %v779, %v778
    %v792 = vpack.c.b16 %v781, %v780
    %v793 = vpack.c.b16 %v783, %v782
    %v794 = vpack.c.b16 %v785, %v784
    %v795 = vpack.c.b16 %v787, %v786
    %804 = vmatprep.subr.bf16.mxu0 0
    %805 = vmatpush1.bf16.msra.mxu0 %v788
    %806 = vmatprep.subr.bf16.mxu0 0
    %807 = vmatpush1.bf16.msra.mxu0 %v789
    %808 = vmatprep.subr.bf16.mxu0 0
    %809 = vmatpush1.bf16.msra.mxu0 %v790
    %810 = vmatprep.subr.bf16.mxu0 0
    %811 = vmatpush1.bf16.msra.mxu0 %v791
    %812 = vmatprep.subr.bf16.mxu0 0
    %813 = vmatpush1.bf16.msra.mxu0 %v792
    %814 = vmatprep.subr.bf16.mxu0 0
    %815 = vmatpush1.bf16.msra.mxu0 %v793
    %816 = vmatprep.subr.bf16.mxu0 0
    %817 = vmatpush1.bf16.msra.mxu0 %v794
    %818 = vmatprep.subr.bf16.mxu0 0
    %819 = vmatpush1.bf16.msra.mxu0 %v795
    %820 = vmatprep.subr.bf16.mxu0 0
    %821 = vmatpush1.bf16.msra.mxu0 0
    %822 = vmatprep.subr.bf16.mxu0 0
    %823 = vmatpush1.bf16.msra.mxu0 0
    %824 = vmatprep.subr.bf16.mxu0 0
    %825 = vmatpush1.bf16.msra.mxu0 0
    %826 = vmatprep.subr.bf16.mxu0 0
    %827 = vmatpush1.bf16.msra.mxu0 0
    %828 = vmatprep.subr.bf16.mxu0 0
    %829 = vmatpush1.bf16.msra.mxu0 0
    %830 = vmatprep.subr.bf16.mxu0 0
    %831 = vmatpush1.bf16.msra.mxu0 0
    %832 = vmatprep.subr.bf16.mxu0 0
    %833 = vmatpush1.bf16.msra.mxu0 0
    %834 = vmatprep.subr.bf16.mxu0 0
    %835 = vmatpush1.bf16.msra.mxu0 0
    %836 = vmatprep.mubr.bf16.mxu0 0
    %837 = vmatmul.mubr.bf16.gmra.mrb[0].mxu0 %v725
    %v838 = vpop.f32.mrb[0].mxu0
    %v839 = vadd.f32 %v754, %v838
    %v840 = vpop.f32.mrb[0].mxu0
    %v841 = vpop.f32.mrb[0].mxu0
    %v842 = vadd.f32 %v754, %v841
    %v843 = vpop.f32.mrb[0].mxu0
    %844 = vmatprep.mubr.bf16.mxu0 0
    %845 = vmatmul.mubr.bf16.gmra.mrb[0].mxu0 %v726
    %v846 = vpop.f32.mrb[0].mxu0
    %v847 = vadd.f32 %v754, %v846
    %v848 = vpop.f32.mrb[0].mxu0
    %v849 = vpop.f32.mrb[0].mxu0
    %v850 = vadd.f32 %v754, %v849
    %v851 = vpop.f32.mrb[0].mxu0
    %852 = vmatprep.mubr.bf16.mxu0 0
    %853 = vmatmul.mubr.bf16.gmra.mrb[0].mxu0 %v727
    %v854 = vpop.f32.mrb[0].mxu0
    %v855 = vadd.f32 %v754, %v854
    %v856 = vpop.f32.mrb[0].mxu0
    %v857 = vpop.f32.mrb[0].mxu0
    %v858 = vadd.f32 %v754, %v857
    %v859 = vpop.f32.mrb[0].mxu0
    %860 = vmatprep.mubr.bf16.mxu0 0
    %861 = vmatmul.mubr.bf16.gmra.mrb[0].mxu0 %v728
    %v862 = vpop.f32.mrb[0].mxu0
    %v863 = vadd.f32 %v754, %v862
    %v864 = vpop.f32.mrb[0].mxu0
    %v865 = vpop.f32.mrb[0].mxu0
    %v866 = vadd.f32 %v754, %v865
    %v867 = vpop.f32.mrb[0].mxu0
    %868 = vmatprep.mubr.bf16.mxu0 0
    %869 = vmatmul.mubr.bf16.gmra.mrb[0].mxu0 %v729
    %v870 = vpop.f32.mrb[0].mxu0
    %v871 = vadd.f32 %v754, %v870
    %v872 = vpop.f32.mrb[0].mxu0
    %v873 = vpop.f32.mrb[0].mxu0
    %v874 = vadd.f32 %v754, %v873
    %v875 = vpop.f32.mrb[0].mxu0
    %876 = vmatprep.mubr.bf16.mxu0 0
    %877 = vmatmul.mubr.bf16.gmra.mrb[0].mxu0 %v730
    %v878 = vpop.f32.mrb[0].mxu0
    %v879 = vadd.f32 %v754, %v878
    %v880 = vpop.f32.mrb[0].mxu0
    %v881 = vpop.f32.mrb[0].mxu0
    %v882 = vadd.f32 %v754, %v881
    %v883 = vpop.f32.mrb[0].mxu0
    %884 = vmatprep.mubr.bf16.mxu0 0
    %885 = vmatmul.mubr.bf16.gmra.mrb[0].mxu0 %v731
    %v886 = vpop.f32.mrb[0].mxu0
    %v887 = vadd.f32 %v754, %v886
    %v888 = vpop.f32.mrb[0].mxu0
    %v889 = vpop.f32.mrb[0].mxu0
    %v890 = vadd.f32 %v754, %v889
    %v891 = vpop.f32.mrb[0].mxu0
    %892 = vmatprep.mubr.bf16.mxu0 0
    %893 = vmatmul.mubr.bf16.gmra.mrb[0].mxu0 %v732
    %v894 = vpop.f32.mrb[0].mxu0
    %v895 = vadd.f32 %v754, %v894
    %v896 = vpop.f32.mrb[0].mxu0
    %v897 = vpop.f32.mrb[0].mxu0
    %v898 = vadd.f32 %v754, %v897
    %v899 = vpop.f32.mrb[0].mxu0
    %900 = vdwg.mxu0
    %v901 = vxor.u32 %v839, 2147483648
    %v902 = vxor.u32 %v842, 2147483648
    %v903 = vxor.u32 %v847, 2147483648
    %v904 = vxor.u32 %v850, 2147483648
    %v905 = vxor.u32 %v855, 2147483648
    %v906 = vxor.u32 %v858, 2147483648
    %v907 = vxor.u32 %v863, 2147483648
    %v908 = vxor.u32 %v866, 2147483648
    %v909 = vxor.u32 %v871, 2147483648
    %v910 = vxor.u32 %v874, 2147483648
    %v911 = vxor.u32 %v879, 2147483648
    %v912 = vxor.u32 %v882, 2147483648
    %v913 = vxor.u32 %v887, 2147483648
    %v914 = vxor.u32 %v890, 2147483648
    %v915 = vxor.u32 %v895, 2147483648
    %v916 = vxor.u32 %v898, 2147483648
    %v917 = vmul.f32 %v901, 1.442695
    %v918 = vpow.pop %v917
    %v919 = vmul.f32 %v902, 1.442695
    %v920 = vpow.pop %v919
    %v921 = vmul.f32 %v903, 1.442695
    %v922 = vpow.pop %v921
    %v923 = vmul.f32 %v904, 1.442695
    %v924 = vpow.pop %v923
    %v925 = vmul.f32 %v905, 1.442695
    %v926 = vpow.pop %v925
    %v927 = vmul.f32 %v906, 1.442695
    %v928 = vpow.pop %v927
    %v929 = vmul.f32 %v907, 1.442695
    %v930 = vpow.pop %v929
    %v931 = vmul.f32 %v908, 1.442695
    %v932 = vpow.pop %v931
    %v933 = vmul.f32 %v909, 1.442695
    %v934 = vpow.pop %v933
    %v935 = vmul.f32 %v910, 1.442695
    %v936 = vpow.pop %v935
    %v937 = vmul.f32 %v911, 1.442695
    %v938 = vpow.pop %v937
    %v939 = vmul.f32 %v912, 1.442695
    %v940 = vpow.pop %v939
    %v941 = vmul.f32 %v913, 1.442695
    %v942 = vpow.pop %v941
    %v943 = vmul.f32 %v914, 1.442695
    %v944 = vpow.pop %v943
    %v945 = vmul.f32 %v915, 1.442695
    %v946 = vpow.pop %v945
    %v947 = vmul.f32 %v916, 1.442695
    %v948 = vpow.pop %v947
    %v949 = vadd.f32 %v918, 1.0
    %v950 = vadd.f32 %v920, 1.0
    %v951 = vadd.f32 %v922, 1.0
    %v952 = vadd.f32 %v924, 1.0
    %v953 = vadd.f32 %v926, 1.0
    %v954 = vadd.f32 %v928, 1.0
    %v955 = vadd.f32 %v930, 1.0
    %v956 = vadd.f32 %v932, 1.0
    %v957 = vadd.f32 %v934, 1.0
    %v958 = vadd.f32 %v936, 1.0
    %v959 = vadd.f32 %v938, 1.0
    %v960 = vadd.f32 %v940, 1.0
    %v961 = vadd.f32 %v942, 1.0
    %v962 = vadd.f32 %v944, 1.0
    %v963 = vadd.f32 %v946, 1.0
    %v964 = vadd.f32 %v948, 1.0
    %v965 = vrcp.pop %v949
    %v966 = vmul.f32 1.0, %v965
    %v967 = vrcp.pop %v950
    %v968 = vmul.f32 1.0, %v967
    %v969 = vrcp.pop %v951
    %v970 = vmul.f32 1.0, %v969
    %v971 = vrcp.pop %v952
    %v972 = vmul.f32 1.0, %v971
    %v973 = vrcp.pop %v953
    %v974 = vmul.f32 1.0, %v973
    %v975 = vrcp.pop %v954
    %v976 = vmul.f32 1.0, %v975
    %v977 = vrcp.pop %v955
    %v978 = vmul.f32 1.0, %v977
    %v979 = vrcp.pop %v956
    %v980 = vmul.f32 1.0, %v979
    %v981 = vrcp.pop %v957
    %v982 = vmul.f32 1.0, %v981
    %v983 = vrcp.pop %v958
    %v984 = vmul.f32 1.0, %v983
    %v985 = vrcp.pop %v959
    %v986 = vmul.f32 1.0, %v985
    %v987 = vrcp.pop %v960
    %v988 = vmul.f32 1.0, %v987
    %v989 = vrcp.pop %v961
    %v990 = vmul.f32 1.0, %v989
    %v991 = vrcp.pop %v962
    %v992 = vmul.f32 1.0, %v991
    %v993 = vrcp.pop %v963
    %v994 = vmul.f32 1.0, %v993
    %v995 = vrcp.pop %v964
    %v996 = vmul.f32 1.0, %v995
    %v997 = vld [vmem:[%s8] sm:$0xf]
    %v998 = vld [vmem:[%s8 + $0x4] sm:$0xf]
    %v999 = vld [vmem:[%s8 + $0x8] sm:$0xf]
    %v1000 = vld [vmem:[%s8 + $0xc] sm:$0xf]
    %v1001 = vld [vmem:[%s8 + $0x10] sm:$0xf]
    %v1002 = vld [vmem:[%s8 + $0x14] sm:$0xf]
    %v1003 = vld [vmem:[%s8 + $0x18] sm:$0xf]
    %v1004 = vld [vmem:[%s8 + $0x1c] sm:$0xf]
    %v1005 = vld [vmem:[%s8 + $0x20] sm:$0xf]
    %v1006 = vld [vmem:[%s8 + $0x24] sm:$0xf]
    %v1007 = vld [vmem:[%s8 + $0x28] sm:$0xf]
    %v1008 = vld [vmem:[%s8 + $0x2c] sm:$0xf]
    %v1009 = vld [vmem:[%s8 + $0x30] sm:$0xf]
    %v1010 = vld [vmem:[%s8 + $0x34] sm:$0xf]
    %v1011 = vld [vmem:[%s8 + $0x38] sm:$0xf]
    %v1012 = vld [vmem:[%s8 + $0x3c] sm:$0xf]
    %v1013 = vld [vmem:[%s9] sm:$0x1]
    %v1015 = vlaneseq
    %v1016 = vshrl.u32 %v1015, 7
    %v1017 = vsub.s32 0, %v1016
    %v1018 = vrot.slane %v1013, %v1017
    %v1036 = vunpack.c.l.b16 %v997
    %v1037 = vunpack.c.l.b16 %v998
    %v1038 = vunpack.c.l.b16 %v999
    %v1039 = vunpack.c.l.b16 %v1000
    %v1040 = vunpack.c.l.b16 %v1001
    %v1041 = vunpack.c.l.b16 %v1002
    %v1042 = vunpack.c.l.b16 %v1003
    %v1043 = vunpack.c.l.b16 %v1004
    %v1044 = vunpack.c.l.b16 %v1005
    %v1045 = vunpack.c.l.b16 %v1006
    %v1046 = vunpack.c.l.b16 %v1007
    %v1047 = vunpack.c.l.b16 %v1008
    %v1048 = vunpack.c.l.b16 %v1009
    %v1049 = vunpack.c.l.b16 %v1010
    %v1050 = vunpack.c.l.b16 %v1011
    %v1051 = vunpack.c.l.b16 %v1012
    %v1052 = vpack.c.b16 %v1037, %v1036
    %v1053 = vpack.c.b16 %v1039, %v1038
    %v1054 = vpack.c.b16 %v1041, %v1040
    %v1055 = vpack.c.b16 %v1043, %v1042
    %v1056 = vpack.c.b16 %v1045, %v1044
    %v1057 = vpack.c.b16 %v1047, %v1046
    %v1058 = vpack.c.b16 %v1049, %v1048
    %v1059 = vpack.c.b16 %v1051, %v1050
    %1068 = vmatprep.subr.bf16.mxu0 0
    %1069 = vmatpush1.bf16.msra.mxu0 %v1052
    %1070 = vmatprep.subr.bf16.mxu0 0
    %1071 = vmatpush1.bf16.msra.mxu0 %v1053
    %1072 = vmatprep.subr.bf16.mxu0 0
    %1073 = vmatpush1.bf16.msra.mxu0 %v1054
    %1074 = vmatprep.subr.bf16.mxu0 0
    %1075 = vmatpush1.bf16.msra.mxu0 %v1055
    %1076 = vmatprep.subr.bf16.mxu0 0
    %1077 = vmatpush1.bf16.msra.mxu0 %v1056
    %1078 = vmatprep.subr.bf16.mxu0 0
    %1079 = vmatpush1.bf16.msra.mxu0 %v1057
    %1080 = vmatprep.subr.bf16.mxu0 0
    %1081 = vmatpush1.bf16.msra.mxu0 %v1058
    %1082 = vmatprep.subr.bf16.mxu0 0
    %1083 = vmatpush1.bf16.msra.mxu0 %v1059
    %1084 = vmatprep.subr.bf16.mxu0 0
    %1085 = vmatpush1.bf16.msra.mxu0 0
    %1086 = vmatprep.subr.bf16.mxu0 0
    %1087 = vmatpush1.bf16.msra.mxu0 0
    %1088 = vmatprep.subr.bf16.mxu0 0
    %1089 = vmatpush1.bf16.msra.mxu0 0
    %1090 = vmatprep.subr.bf16.mxu0 0
    %1091 = vmatpush1.bf16.msra.mxu0 0
    %1092 = vmatprep.subr.bf16.mxu0 0
    %1093 = vmatpush1.bf16.msra.mxu0 0
    %1094 = vmatprep.subr.bf16.mxu0 0
    %1095 = vmatpush1.bf16.msra.mxu0 0
    %1096 = vmatprep.subr.bf16.mxu0 0
    %1097 = vmatpush1.bf16.msra.mxu0 0
    %1098 = vmatprep.subr.bf16.mxu0 0
    %1099 = vmatpush1.bf16.msra.mxu0 0
    %1100 = vmatprep.mubr.bf16.mxu0 0
    %1101 = vmatmul.mubr.bf16.gmra.mrb[0].mxu0 %v725
    %v1102 = vpop.f32.mrb[0].mxu0
    %v1103 = vadd.f32 %v1018, %v1102
    %v1104 = vpop.f32.mrb[0].mxu0
    %v1105 = vpop.f32.mrb[0].mxu0
    %v1106 = vadd.f32 %v1018, %v1105
    %v1107 = vpop.f32.mrb[0].mxu0
    %1108 = vmatprep.mubr.bf16.mxu0 0
    %1109 = vmatmul.mubr.bf16.gmra.mrb[0].mxu0 %v726
    %v1110 = vpop.f32.mrb[0].mxu0
    %v1111 = vadd.f32 %v1018, %v1110
    %v1112 = vpop.f32.mrb[0].mxu0
    %v1113 = vpop.f32.mrb[0].mxu0
    %v1114 = vadd.f32 %v1018, %v1113
    %v1115 = vpop.f32.mrb[0].mxu0
    %1116 = vmatprep.mubr.bf16.mxu0 0
    %1117 = vmatmul.mubr.bf16.gmra.mrb[0].mxu0 %v727
    %v1118 = vpop.f32.mrb[0].mxu0
    %v1119 = vadd.f32 %v1018, %v1118
    %v1120 = vpop.f32.mrb[0].mxu0
    %v1121 = vpop.f32.mrb[0].mxu0
    %v1122 = vadd.f32 %v1018, %v1121
    %v1123 = vpop.f32.mrb[0].mxu0
    %1124 = vmatprep.mubr.bf16.mxu0 0
    %1125 = vmatmul.mubr.bf16.gmra.mrb[0].mxu0 %v728
    %v1126 = vpop.f32.mrb[0].mxu0
    %v1127 = vadd.f32 %v1018, %v1126
    %v1128 = vpop.f32.mrb[0].mxu0
    %v1129 = vpop.f32.mrb[0].mxu0
    %v1130 = vadd.f32 %v1018, %v1129
    %v1131 = vpop.f32.mrb[0].mxu0
    %1132 = vmatprep.mubr.bf16.mxu0 0
    %1133 = vmatmul.mubr.bf16.gmra.mrb[0].mxu0 %v729
    %v1134 = vpop.f32.mrb[0].mxu0
    %v1135 = vadd.f32 %v1018, %v1134
    %v1136 = vpop.f32.mrb[0].mxu0
    %v1137 = vpop.f32.mrb[0].mxu0
    %v1138 = vadd.f32 %v1018, %v1137
    %v1139 = vpop.f32.mrb[0].mxu0
    %1140 = vmatprep.mubr.bf16.mxu0 0
    %1141 = vmatmul.mubr.bf16.gmra.mrb[0].mxu0 %v730
    %v1142 = vpop.f32.mrb[0].mxu0
    %v1143 = vadd.f32 %v1018, %v1142
    %v1144 = vpop.f32.mrb[0].mxu0
    %v1145 = vpop.f32.mrb[0].mxu0
    %v1146 = vadd.f32 %v1018, %v1145
    %v1147 = vpop.f32.mrb[0].mxu0
    %1148 = vmatprep.mubr.bf16.mxu0 0
    %1149 = vmatmul.mubr.bf16.gmra.mrb[0].mxu0 %v731
    %v1150 = vpop.f32.mrb[0].mxu0
    %v1151 = vadd.f32 %v1018, %v1150
    %v1152 = vpop.f32.mrb[0].mxu0
    %v1153 = vpop.f32.mrb[0].mxu0
    %v1154 = vadd.f32 %v1018, %v1153
    %v1155 = vpop.f32.mrb[0].mxu0
    %1156 = vmatprep.mubr.bf16.mxu0 0
    %1157 = vmatmul.mubr.bf16.gmra.mrb[0].mxu0 %v732
    %v1158 = vpop.f32.mrb[0].mxu0
    %v1159 = vadd.f32 %v1018, %v1158
    %v1160 = vpop.f32.mrb[0].mxu0
    %v1161 = vpop.f32.mrb[0].mxu0
    %v1162 = vadd.f32 %v1018, %v1161
    %v1163 = vpop.f32.mrb[0].mxu0
    %1164 = vdwg.mxu0
    %v1165 = vxor.u32 %v1103, 2147483648
    %v1166 = vxor.u32 %v1106, 2147483648
    %v1167 = vxor.u32 %v1111, 2147483648
    %v1168 = vxor.u32 %v1114, 2147483648
    %v1169 = vxor.u32 %v1119, 2147483648
    %v1170 = vxor.u32 %v1122, 2147483648
    %v1171 = vxor.u32 %v1127, 2147483648
    %v1172 = vxor.u32 %v1130, 2147483648
    %v1173 = vxor.u32 %v1135, 2147483648
    %v1174 = vxor.u32 %v1138, 2147483648
    %v1175 = vxor.u32 %v1143, 2147483648
    %v1176 = vxor.u32 %v1146, 2147483648
    %v1177 = vxor.u32 %v1151, 2147483648
    %v1178 = vxor.u32 %v1154, 2147483648
    %v1179 = vxor.u32 %v1159, 2147483648
    %v1180 = vxor.u32 %v1162, 2147483648
    %v1181 = vmul.f32 %v1165, 1.442695
    %v1182 = vpow.pop %v1181
    %v1183 = vmul.f32 %v1166, 1.442695
    %v1184 = vpow.pop %v1183
    %v1185 = vmul.f32 %v1167, 1.442695
    %v1186 = vpow.pop %v1185
    %v1187 = vmul.f32 %v1168, 1.442695
    %v1188 = vpow.pop %v1187
    %v1189 = vmul.f32 %v1169, 1.442695
    %v1190 = vpow.pop %v1189
    %v1191 = vmul.f32 %v1170, 1.442695
    %v1192 = vpow.pop %v1191
    %v1193 = vmul.f32 %v1171, 1.442695
    %v1194 = vpow.pop %v1193
    %v1195 = vmul.f32 %v1172, 1.442695
    %v1196 = vpow.pop %v1195
    %v1197 = vmul.f32 %v1173, 1.442695
    %v1198 = vpow.pop %v1197
    %v1199 = vmul.f32 %v1174, 1.442695
    %v1200 = vpow.pop %v1199
    %v1201 = vmul.f32 %v1175, 1.442695
    %v1202 = vpow.pop %v1201
    %v1203 = vmul.f32 %v1176, 1.442695
    %v1204 = vpow.pop %v1203
    %v1205 = vmul.f32 %v1177, 1.442695
    %v1206 = vpow.pop %v1205
    %v1207 = vmul.f32 %v1178, 1.442695
    %v1208 = vpow.pop %v1207
    %v1209 = vmul.f32 %v1179, 1.442695
    %v1210 = vpow.pop %v1209
    %v1211 = vmul.f32 %v1180, 1.442695
    %v1212 = vpow.pop %v1211
    %v1213 = vadd.f32 %v1182, 1.0
    %v1214 = vadd.f32 %v1184, 1.0
    %v1215 = vadd.f32 %v1186, 1.0
    %v1216 = vadd.f32 %v1188, 1.0
    %v1217 = vadd.f32 %v1190, 1.0
    %v1218 = vadd.f32 %v1192, 1.0
    %v1219 = vadd.f32 %v1194, 1.0
    %v1220 = vadd.f32 %v1196, 1.0
    %v1221 = vadd.f32 %v1198, 1.0
    %v1222 = vadd.f32 %v1200, 1.0
    %v1223 = vadd.f32 %v1202, 1.0
    %v1224 = vadd.f32 %v1204, 1.0
    %v1225 = vadd.f32 %v1206, 1.0
    %v1226 = vadd.f32 %v1208, 1.0
    %v1227 = vadd.f32 %v1210, 1.0
    %v1228 = vadd.f32 %v1212, 1.0
    %v1229 = vrcp.pop %v1213
    %v1230 = vmul.f32 1.0, %v1229
    %v1231 = vrcp.pop %v1214
    %v1232 = vmul.f32 1.0, %v1231
    %v1233 = vrcp.pop %v1215
    %v1234 = vmul.f32 1.0, %v1233
    %v1235 = vrcp.pop %v1216
    %v1236 = vmul.f32 1.0, %v1235
    %v1237 = vrcp.pop %v1217
    %v1238 = vmul.f32 1.0, %v1237
    %v1239 = vrcp.pop %v1218
    %v1240 = vmul.f32 1.0, %v1239
    %v1241 = vrcp.pop %v1219
    %v1242 = vmul.f32 1.0, %v1241
    %v1243 = vrcp.pop %v1220
    %v1244 = vmul.f32 1.0, %v1243
    %v1245 = vrcp.pop %v1221
    %v1246 = vmul.f32 1.0, %v1245
    %v1247 = vrcp.pop %v1222
    %v1248 = vmul.f32 1.0, %v1247
    %v1249 = vrcp.pop %v1223
    %v1250 = vmul.f32 1.0, %v1249
    %v1251 = vrcp.pop %v1224
    %v1252 = vmul.f32 1.0, %v1251
    %v1253 = vrcp.pop %v1225
    %v1254 = vmul.f32 1.0, %v1253
    %v1255 = vrcp.pop %v1226
    %v1256 = vmul.f32 1.0, %v1255
    %v1257 = vrcp.pop %v1227
    %v1258 = vmul.f32 1.0, %v1257
    %v1259 = vrcp.pop %v1228
    %v1260 = vmul.f32 1.0, %v1259
    %v1261 = vsub.f32 %v53, %v709
    %v1262 = vsub.f32 %v54, %v710
    %v1263 = vsub.f32 %v55, %v711
    %v1264 = vsub.f32 %v56, %v712
    %v1265 = vsub.f32 %v57, %v713
    %v1266 = vsub.f32 %v58, %v714
    %v1267 = vsub.f32 %v59, %v715
    %v1268 = vsub.f32 %v60, %v716
    %v1269 = vsub.f32 %v61, %v717
    %v1270 = vsub.f32 %v62, %v718
    %v1271 = vsub.f32 %v63, %v719
    %v1272 = vsub.f32 %v64, %v720
    %v1273 = vsub.f32 %v65, %v721
    %v1274 = vsub.f32 %v66, %v722
    %v1275 = vsub.f32 %v67, %v723
    %v1276 = vsub.f32 %v68, %v724
    %v1277 = vmul.f32 %v966, %v1261
    %v1278 = vmul.f32 %v968, %v1262
    %v1279 = vmul.f32 %v970, %v1263
    %v1280 = vmul.f32 %v972, %v1264
    %v1281 = vmul.f32 %v974, %v1265
    %v1282 = vmul.f32 %v976, %v1266
    %v1283 = vmul.f32 %v978, %v1267
    %v1284 = vmul.f32 %v980, %v1268
    %v1285 = vmul.f32 %v982, %v1269
    %v1286 = vmul.f32 %v984, %v1270
    %v1287 = vmul.f32 %v986, %v1271
    %v1288 = vmul.f32 %v988, %v1272
    %v1289 = vmul.f32 %v990, %v1273
    %v1290 = vmul.f32 %v992, %v1274
    %v1291 = vmul.f32 %v994, %v1275
    %v1292 = vmul.f32 %v996, %v1276
    %v1293 = vsub.f32 %v69, %v709
    %v1294 = vsub.f32 %v70, %v710
    %v1295 = vsub.f32 %v71, %v711
    %v1296 = vsub.f32 %v72, %v712
    %v1297 = vsub.f32 %v73, %v713
    %v1298 = vsub.f32 %v74, %v714
    %v1299 = vsub.f32 %v75, %v715
    %v1300 = vsub.f32 %v76, %v716
    %v1301 = vsub.f32 %v77, %v717
    %v1302 = vsub.f32 %v78, %v718
    %v1303 = vsub.f32 %v79, %v719
    %v1304 = vsub.f32 %v80, %v720
    %v1305 = vsub.f32 %v81, %v721
    %v1306 = vsub.f32 %v82, %v722
    %v1307 = vsub.f32 %v83, %v723
    %v1308 = vsub.f32 %v84, %v724
    %v1309 = vmul.f32 %v1230, %v1293
    %v1310 = vmul.f32 %v1232, %v1294
    %v1311 = vmul.f32 %v1234, %v1295
    %v1312 = vmul.f32 %v1236, %v1296
    %v1313 = vmul.f32 %v1238, %v1297
    %v1314 = vmul.f32 %v1240, %v1298
    %v1315 = vmul.f32 %v1242, %v1299
    %v1316 = vmul.f32 %v1244, %v1300
    %v1317 = vmul.f32 %v1246, %v1301
    %v1318 = vmul.f32 %v1248, %v1302
    %v1319 = vmul.f32 %v1250, %v1303
    %v1320 = vmul.f32 %v1252, %v1304
    %v1321 = vmul.f32 %v1254, %v1305
    %v1322 = vmul.f32 %v1256, %v1306
    %v1323 = vmul.f32 %v1258, %v1307
    %v1324 = vmul.f32 %v1260, %v1308
    %v1325 = vadd.f32 %v1277, %v1309
    %v1326 = vadd.f32 %v1278, %v1310
    %v1327 = vadd.f32 %v1279, %v1311
    %v1328 = vadd.f32 %v1280, %v1312
    %v1329 = vadd.f32 %v1281, %v1313
    %v1330 = vadd.f32 %v1282, %v1314
    %v1331 = vadd.f32 %v1283, %v1315
    %v1332 = vadd.f32 %v1284, %v1316
    %v1333 = vadd.f32 %v1285, %v1317
    %v1334 = vadd.f32 %v1286, %v1318
    %v1335 = vadd.f32 %v1287, %v1319
    %v1336 = vadd.f32 %v1288, %v1320
    %v1337 = vadd.f32 %v1289, %v1321
    %v1338 = vadd.f32 %v1290, %v1322
    %v1339 = vadd.f32 %v1291, %v1323
    %v1340 = vadd.f32 %v1292, %v1324
    %v1341 = vadd.f32 %v1325, %v709
    %v1342 = vadd.f32 %v1326, %v710
    %v1343 = vadd.f32 %v1327, %v711
    %v1344 = vadd.f32 %v1328, %v712
    %v1345 = vadd.f32 %v1329, %v713
    %v1346 = vadd.f32 %v1330, %v714
    %v1347 = vadd.f32 %v1331, %v715
    %v1348 = vadd.f32 %v1332, %v716
    %v1349 = vadd.f32 %v1333, %v717
    %v1350 = vadd.f32 %v1334, %v718
    %v1351 = vadd.f32 %v1335, %v719
    %v1352 = vadd.f32 %v1336, %v720
    %v1353 = vadd.f32 %v1337, %v721
    %v1354 = vadd.f32 %v1338, %v722
    %v1355 = vadd.f32 %v1339, %v723
    %v1356 = vadd.f32 %v1340, %v724
    %v1357 = vmul.f32 %v1341, 0.33333334
    %v1358 = vmul.f32 %v1342, 0.33333334
    %v1359 = vmul.f32 %v1343, 0.33333334
    %v1360 = vmul.f32 %v1344, 0.33333334
    %v1361 = vmul.f32 %v1345, 0.33333334
    %v1362 = vmul.f32 %v1346, 0.33333334
    %v1363 = vmul.f32 %v1347, 0.33333334
    %v1364 = vmul.f32 %v1348, 0.33333334
    %v1365 = vmul.f32 %v1349, 0.33333334
    %v1366 = vmul.f32 %v1350, 0.33333334
    %v1367 = vmul.f32 %v1351, 0.33333334
    %v1368 = vmul.f32 %v1352, 0.33333334
    %v1369 = vmul.f32 %v1353, 0.33333334
    %v1370 = vmul.f32 %v1354, 0.33333334
    %v1371 = vmul.f32 %v1355, 0.33333334
    %v1372 = vmul.f32 %v1356, 0.33333334
    %v1373 = vadd.f32 %v37, %v1357
    %v1374 = vadd.f32 %v38, %v1358
    %v1375 = vadd.f32 %v39, %v1359
    %v1376 = vadd.f32 %v40, %v1360
    %v1377 = vadd.f32 %v41, %v1361
    %v1378 = vadd.f32 %v42, %v1362
    %v1379 = vadd.f32 %v43, %v1363
    %v1380 = vadd.f32 %v44, %v1364
    %v1381 = vadd.f32 %v45, %v1365
    %v1382 = vadd.f32 %v46, %v1366
    %v1383 = vadd.f32 %v47, %v1367
    %v1384 = vadd.f32 %v48, %v1368
    %v1385 = vadd.f32 %v49, %v1369
    %v1386 = vadd.f32 %v50, %v1370
    %v1387 = vadd.f32 %v51, %v1371
    %v1388 = vadd.f32 %v52, %v1372
    %1389 = vst [vmem:[#allocation2] sm:$0xff] %v1373
    %1390 = vst [vmem:[#allocation2 + $0x8] sm:$0xff] %v1374
    %1391 = vst [vmem:[#allocation2 + $0x10] sm:$0xff] %v1375
    %1392 = vst [vmem:[#allocation2 + $0x18] sm:$0xff] %v1376
    %1393 = vst [vmem:[#allocation2 + $0x20] sm:$0xff] %v1377
    %1394 = vst [vmem:[#allocation2 + $0x28] sm:$0xff] %v1378
    %1395 = vst [vmem:[#allocation2 + $0x30] sm:$0xff] %v1379
    %1396 = vst [vmem:[#allocation2 + $0x38] sm:$0xff] %v1380
    %1397 = vst [vmem:[#allocation2 + $0x40] sm:$0xff] %v1381
    %1398 = vst [vmem:[#allocation2 + $0x48] sm:$0xff] %v1382
    %1399 = vst [vmem:[#allocation2 + $0x50] sm:$0xff] %v1383
    %1400 = vst [vmem:[#allocation2 + $0x58] sm:$0xff] %v1384
    %1401 = vst [vmem:[#allocation2 + $0x60] sm:$0xff] %v1385
    %1402 = vst [vmem:[#allocation2 + $0x68] sm:$0xff] %v1386
    %1403 = vst [vmem:[#allocation2 + $0x70] sm:$0xff] %v1387
    %1404 = vst [vmem:[#allocation2 + $0x78] sm:$0xff] %v1388
    // Predicated region
    $region42: #{gume_forward.10} parent=1 // pred_check
      _
    $region43: #{gume_forward.10} parent=1 // pred_check_branch
      %1406 = sbr.rel (0) target = $region45
    $region44: #{gume_forward.10} parent=1 // pred_region
      %s1408 = ssub.s32 2048, 2048
      %1409 = vsyncadd [#allocation3], %s1408
      %s1410 = sshll.u32 [#allocation2], 4
      %s1411 = int_to_ptr.vmem [resolvable:$true] %s1410
      %1416 = dma.vmem_to_hbm [thread:$0]  %s1411, 2048, %s10, [#allocation3], 128, 128, 8
    $region45: #{gume_forward.10} parent=1 // pred_fallthru
      _
    // Predicated region
    $region46: #{gume_forward.10} parent=1 // pred_check
      _
    $region47: #{gume_forward.10} parent=1 // pred_check_branch
      %1418 = sbr.rel (0) target = $region49
    $region48: #{gume_forward.10} parent=1 // pred_region
      %1419 = dma.done [#allocation3], 2048
    $region49: #{gume_forward.10} parent=1 // pred_fallthru
      _
    %1420 = vsyncpa [#allocation3], 1

</llo_original>
